<compile_context>
chip_gen: v7x
topology: tpu7x:2x2x1
jax: 0.10.0
libtpu: 0.0.40
codegen_flags: <defaults>
</compile_context>

<pallas_src>
import functools
import math

import jax
import jax.numpy as jnp
from jax import lax
from jax.experimental import pallas as pl
from jax.experimental.pallas import tpu as pltpu

EPS = 1e-5                      # matches the custom LayerNorm in the reference
NEG_INF = -1e30                 # finite mask value (avoid exp(-inf+inf) NaNs)
VMEM_LIMIT_BYTES = 48 * 1024 * 1024   # > 16/32 MiB scoped defaults, < 64 MiB v7x


# ----------------------------- in-kernel helpers -----------------------------

def _layernorm(x, scale, shift):
    # mean/var over last dim, biased variance (unbiased=False), f32 math.
    mean = jnp.mean(x, axis=-1, keepdims=True)
    var = jnp.mean((x - mean) ** 2, axis=-1, keepdims=True)
    return (x - mean) / jnp.sqrt(var + EPS) * scale + shift


def _gelu_tanh(x):
    # tanh-approximation GELU used by the reference GELU module (f32 math).
    c = math.sqrt(2.0 / math.pi)
    return 0.5 * x * (1.0 + jnp.tanh(c * (x + 0.044715 * x * x * x)))


# ----------------------------- Pallas kernels --------------------------------

def gpt_blocks_kernel(n_layers, n_heads,
                      x_ref,
                      ln1_s_ref, ln1_t_ref,
                      wqkv_ref, wo_ref, bo_ref,
                      ln2_s_ref, ln2_t_ref,
                      w1_ref, b1_ref, w2_ref, b2_ref,
                      fln_s_ref, fln_t_ref,
                      out_ref,
                      act_ref):
    """All transformer blocks (+ fused final LayerNorm) for one batch block.

    grid = (batch_blocks, layer). The running activation lives in `act_ref`
    (VMEM scratch, f32) across the layer axis; each layer's weights arrive via
    BlockSpec-pipelined DMA while the previous layer computes.
    """
    l = pl.program_id(1)
    Bb, S, E = act_ref.shape
    M = Bb * S
    Dh = E // n_heads
    inv_sqrt_dh = 1.0 / math.sqrt(Dh)

    @pl.when(l == 0)
    def _():
        act_ref[...] = x_ref[...]

    x = act_ref[...].reshape(M, E)                          # (M, E) f32

    # ---- attention sub-block (shortcut -> LN1 -> causal MHA -> + shortcut) ----
    xn = _layernorm(x, ln1_s_ref[0], ln1_t_ref[0]).astype(jnp.bfloat16)
    # fused QKV projection: one (M,E)@(E,3E) matmul, M = Bb*S rows on the MXU
    qkv = jnp.dot(xn, wqkv_ref[0], preferred_element_type=jnp.float32)
    qkv = qkv.reshape(Bb, S, 3 * E)
    # fold 1/sqrt(Dh) into q once (O(S*E)) instead of scaling the (S,S) scores
    q = (qkv[:, :, 0 * E:1 * E] * inv_sqrt_dh).astype(jnp.bfloat16)
    k = qkv[:, :, 1 * E:2 * E].astype(jnp.bfloat16)
    v = qkv[:, :, 2 * E:3 * E].astype(jnp.bfloat16)

    row = lax.broadcasted_iota(jnp.int32, (S, S), 0)
    col = lax.broadcasted_iota(jnp.int32, (S, S), 1)
    causal = (row >= col)[None, :, :]                       # shared across batch

    # TODO(synk): for long S, flash-tile the KV axis (online-softmax m/l/acc)
    # so no (S,S) score tensor is materialized; for many heads, replace the
    # static head loop with a single (Bb,S,H,Dh)->(Bb*H,S,Dh) relayout.
    ctx_heads = []
    for h in range(n_heads):
        qh = q[:, :, h * Dh:(h + 1) * Dh]                   # lane slices, no stack
        kh = k[:, :, h * Dh:(h + 1) * Dh]
        vh = v[:, :, h * Dh:(h + 1) * Dh]
        s = jnp.einsum('bqd,bkd->bqk', qh, kh,
                       preferred_element_type=jnp.float32)  # (Bb,S,S) f32
        s = jnp.where(causal, s, NEG_INF)
        m = jnp.max(s, axis=-1, keepdims=True)
        p = jnp.exp(s - m)
        p = p * pl.reciprocal(jnp.sum(p, axis=-1, keepdims=True), approx=True)
        ctx_heads.append(
            jnp.einsum('bqk,bkd->bqd', p.astype(jnp.bfloat16), vh,
                       preferred_element_type=jnp.float32))
    ctx = jnp.concatenate(ctx_heads, axis=-1).reshape(M, E)
    attn_out = jnp.dot(ctx.astype(jnp.bfloat16), wo_ref[0],
                       preferred_element_type=jnp.float32) + bo_ref[0]
    x = x + attn_out                                        # residual (f32)

    # ---- feed-forward sub-block (shortcut -> LN2 -> FF(GELU) -> + shortcut) ----
    # TODO(synk): for E >= ~1280 on v7x (64 MiB VMEM), tile the 4E hidden dim
    # (inner pipeline over w1/w2 blocks) instead of keeping them whole in VMEM.
    xn2 = _layernorm(x, ln2_s_ref[0], ln2_t_ref[0]).astype(jnp.bfloat16)
    h1 = jnp.dot(xn2, w1_ref[0], preferred_element_type=jnp.float32) + b1_ref[0]
    h1 = _gelu_tanh(h1)
    h2 = jnp.dot(h1.astype(jnp.bfloat16), w2_ref[0],
                 preferred_element_type=jnp.float32) + b2_ref[0]
    x = x + h2                                              # residual (f32)

    act_ref[...] = x.reshape(Bb, S, E)

    @pl.when(l == n_layers - 1)
    def _():
        # final LayerNorm fused here: computed once per batch block instead of
        # once per vocab tile; bf16 output halves the inter-kernel HBM traffic.
        xn_f = _layernorm(x, fln_s_ref[...], fln_t_ref[...])
        out_ref[...] = xn_f.astype(jnp.bfloat16).reshape(Bb, S, E)


def lm_head_kernel(x_ref, w_ref, out_ref):
    """LM head (Linear, no bias) for one lane-dense vocab tile; x is pre-normed."""
    Bb, S, E = x_ref.shape
    x2 = x_ref[...].reshape(Bb * S, E)                      # bf16
    out_ref[...] = jnp.dot(x2, w_ref[...],
                           preferred_element_type=jnp.float32).reshape(out_ref.shape)


# ----------------------------- wrappers ---------------------------------------

def run_transformer_stack(x, blocks, final_ln_scale, final_ln_shift,
                          n_heads, n_layers, batch_block=None):
    B, S, E = x.shape
    H4 = blocks["w1"].shape[-1]                             # 4*E
    bb = B if batch_block is None else batch_block
    assert B % bb == 0

    def wspec(shape):
        # per-layer weight: blocked over the layer axis, pipelined with the grid
        return pl.BlockSpec((1,) + shape, lambda b, l: (l,) + (0,) * len(shape))

    grid_spec = pltpu.PrefetchScalarGridSpec(
        num_scalar_prefetch=0,
        grid=(B // bb, n_layers),
        in_specs=[
            pl.BlockSpec((bb, S, E), lambda b, l: (b, 0, 0)),   # x (resident)
            wspec((1, E)), wspec((1, E)),                       # LN1 scale/shift
            wspec((E, 3 * E)),                                  # Wqkv (bf16)
            wspec((E, E)), wspec((1, E)),                       # Wo (bf16), bo
            wspec((1, E)), wspec((1, E)),                       # LN2 scale/shift
            wspec((E, H4)), wspec((1, H4)),                     # FF W1 (bf16), b1
            wspec((H4, E)), wspec((1, E)),                      # FF W2 (bf16), b2
            pl.BlockSpec((1, E), lambda b, l: (0, 0)),          # final LN scale
            pl.BlockSpec((1, E), lambda b, l: (0, 0)),          # final LN shift
        ],
        out_specs=pl.BlockSpec((bb, S, E), lambda b, l: (b, 0, 0)),
        scratch_shapes=[pltpu.VMEM((bb, S, E), jnp.float32)],   # activation carry
    )
    return pl.pallas_call(
        functools.partial(gpt_blocks_kernel, n_layers, n_heads),
        out_shape=jax.ShapeDtypeStruct((B, S, E), jnp.bfloat16),
        grid_spec=grid_spec,
        compiler_params=pltpu.CompilerParams(
            dimension_semantics=("parallel", "arbitrary"),
            vmem_limit_bytes=VMEM_LIMIT_BYTES),
    )(x,
      blocks["ln1_s"], blocks["ln1_t"],
      blocks["wqkv"], blocks["wo"], blocks["bo"],
      blocks["ln2_s"], blocks["ln2_t"],
      blocks["w1"], blocks["b1"], blocks["w2"], blocks["b2"],
      final_ln_scale, final_ln_shift)


def run_lm_head(x_norm, w_out):
    B, S, E = x_norm.shape
    V = w_out.shape[1]
    v128 = pl.cdiv(V, 128) * 128
    tile_v = min(512, v128)                                 # wide lane-dense tiles
    v_pad = pl.cdiv(v128, tile_v) * tile_v
    if v_pad != V:
        w_out = jnp.pad(w_out, ((0, 0), (0, v_pad - V)))    # pad vocab, never tile_v=V
    out = pl.pallas_call(
        lm_head_kernel,
        out_shape=jax.ShapeDtypeStruct((B, S, v_pad), jnp.float32),
        grid_spec=pltpu.PrefetchScalarGridSpec(
            num_scalar_prefetch=0,
            grid=(v_pad // tile_v,),
            in_specs=[
                pl.BlockSpec((B, S, E), lambda v: (0, 0, 0)),
                pl.BlockSpec((E, tile_v), lambda v: (0, v)),
            ],
            out_specs=pl.BlockSpec((B, S, tile_v), lambda v: (0, 0, v)),
        ),
        compiler_params=pltpu.CompilerParams(
            dimension_semantics=("parallel",),
            vmem_limit_bytes=VMEM_LIMIT_BYTES),
    )(x_norm, w_out)
    return out[..., :V] if v_pad != V else out


# ----------------------------- parameter init ---------------------------------

def init_params(cfg, key):
    V, C, E = cfg["vocab_size"], cfg["context_length"], cfg["emb_dim"]
    L, H4 = cfg["n_layers"], 4 * cfg["emb_dim"]
    keys = iter(jax.random.split(key, 7))

    def w(shape, dtype=jnp.float32):
        return (0.02 * jax.random.normal(next(keys), shape,
                                         dtype=jnp.float32)).astype(dtype)

    return {
        "tok_emb": w((V, E)),
        "pos_emb": w((C, E)),
        "final_ln_scale": jnp.ones((1, E), jnp.float32),
        "final_ln_shift": jnp.zeros((1, E), jnp.float32),
        # nn.Linear(emb, vocab, bias=False) weight, pre-transposed to (E, V), bf16
        "w_out": w((E, V), jnp.bfloat16),
        # per-layer weights stacked along a leading layer axis; matmul weights bf16
        "blocks": {
            "ln1_s": jnp.ones((L, 1, E), jnp.float32),
            "ln1_t": jnp.zeros((L, 1, E), jnp.float32),
            "wqkv": w((L, E, 3 * E), jnp.bfloat16),         # qkv_bias=False
            "wo": w((L, E, E), jnp.bfloat16),
            "bo": jnp.zeros((L, 1, E), jnp.float32),
            "ln2_s": jnp.ones((L, 1, E), jnp.float32),
            "ln2_t": jnp.zeros((L, 1, E), jnp.float32),
            "w1": w((L, E, H4), jnp.bfloat16),
            "b1": jnp.zeros((L, 1, H4), jnp.float32),
            "w2": w((L, H4, E), jnp.bfloat16),
            "b2": jnp.zeros((L, 1, E), jnp.float32),
        },
    }


# ----------------------------- forward (glue + kernels) -----------------------

def gpt_forward(params, in_idx, cfg):
    S = in_idx.shape[1]
    # embedding gathers + positional add kept in plain JAX glue
    tok = jnp.take(params["tok_emb"], in_idx, axis=0)       # (B, S, E)
    pos = params["pos_emb"][:S]                             # (S, E)
    x = (tok + pos[None, :, :]).astype(jnp.float32)
    # dropout: eval mode / drop_rate = 0.0 -> identity
    x_norm = run_transformer_stack(x, params["blocks"],
                                   params["final_ln_scale"],
                                   params["final_ln_shift"],
                                   cfg["n_heads"], cfg["n_layers"])
    return run_lm_head(x_norm, params["w_out"])


# ----------------------------- pure-JAX reference -----------------------------

def ref_forward(params, in_idx, cfg):
    """f32 reference matching the PyTorch module semantics (for tolerance check)."""
    H, L = cfg["n_heads"], cfg["n_layers"]
    tok = jnp.take(params["tok_emb"], in_idx, axis=0)
    pos = params["pos_emb"][: in_idx.shape[1]]
    x = (tok + pos[None]).astype(jnp.float32)
    B, S, E = x.shape
    Dh = E // H
    blk = params["blocks"]
    causal = jnp.tril(jnp.ones((S, S), bool))
    for l in range(L):
        xn = _layernorm(x, blk["ln1_s"][l], blk["ln1_t"][l])
        qkv = xn @ blk["wqkv"][l].astype(jnp.float32)
        q, k, v = qkv[..., :E], qkv[..., E:2 * E], qkv[..., 2 * E:]
        qh = q.reshape(B, S, H, Dh).transpose(0, 2, 1, 3)
        kh = k.reshape(B, S, H, Dh).transpose(0, 2, 1, 3)
        vh = v.reshape(B, S, H, Dh).transpose(0, 2, 1, 3)
        sc = (qh @ kh.transpose(0, 1, 3, 2)) / math.sqrt(Dh)
        sc = jnp.where(causal, sc, -jnp.inf)
        p = jax.nn.softmax(sc, axis=-1)
        ctx = (p @ vh).transpose(0, 2, 1, 3).reshape(B, S, E)
        x = x + ctx @ blk["wo"][l].astype(jnp.float32) + blk["bo"][l]
        xn2 = _layernorm(x, blk["ln2_s"][l], blk["ln2_t"][l])
        h1 = _gelu_tanh(xn2 @ blk["w1"][l].astype(jnp.float32) + blk["b1"][l])
        x = x + h1 @ blk["w2"][l].astype(jnp.float32) + blk["b2"][l]
    x = _layernorm(x, params["final_ln_scale"], params["final_ln_shift"])
    return x @ params["w_out"].astype(jnp.float32)


# ----------------------------- main --------------------------------------------

if __name__ == "__main__":
    cfg = {
        "vocab_size": 256,      # multiple of 128 -> lane-dense vocab tiles
        "context_length": 16,
        "emb_dim": 128,         # lane-dense embedding dim
        "n_heads": 4,
        "n_layers": 2,
        "drop_rate": 0.0,
        "qkv_bias": False,
    }
    key = jax.random.PRNGKey(0)
    pkey, ikey = jax.random.split(key)
    params = init_params(cfg, pkey)

    B, S = 2, 8
    in_idx = jax.random.randint(ikey, (B, S), 0, cfg["vocab_size"], dtype=jnp.int32)

    logits = jax.block_until_ready(gpt_forward(params, in_idx, cfg))
    assert logits.shape == (B, S, cfg["vocab_size"])
    assert bool(jnp.all(jnp.isfinite(logits)))

    # bf16 MXU operands + approx-reciprocal softmax denominator -> loose tolerance
    ref = ref_forward(params, in_idx, cfg)
    max_err = float(jnp.max(jnp.abs(logits - ref)))
    assert max_err < 0.1, f"max abs error vs f32 reference: {max_err}"

    print("KERNEL_OK")
</pallas_src>

<mosaic_0001>
module attributes {stable_mosaic.version = 11 : i64} {
  func.func @gpt_blocks_kernel(%arg0: i32, %arg1: i32, %arg2: memref<2x8x128xf32, #tpu.memory_space<vmem>>, %arg3: memref<1x1x128xf32, #tpu.memory_space<vmem>>, %arg4: memref<1x1x128xf32, #tpu.memory_space<vmem>>, %arg5: memref<1x128x384xbf16, #tpu.memory_space<vmem>>, %arg6: memref<1x128x128xbf16, #tpu.memory_space<vmem>>, %arg7: memref<1x1x128xf32, #tpu.memory_space<vmem>>, %arg8: memref<1x1x128xf32, #tpu.memory_space<vmem>>, %arg9: memref<1x1x128xf32, #tpu.memory_space<vmem>>, %arg10: memref<1x128x512xbf16, #tpu.memory_space<vmem>>, %arg11: memref<1x1x512xf32, #tpu.memory_space<vmem>>, %arg12: memref<1x512x128xbf16, #tpu.memory_space<vmem>>, %arg13: memref<1x1x128xf32, #tpu.memory_space<vmem>>, %arg14: memref<1x128xf32, #tpu.memory_space<vmem>>, %arg15: memref<1x128xf32, #tpu.memory_space<vmem>>, %arg16: memref<2x8x128xbf16, #tpu.memory_space<vmem>>, %arg17: memref<2x8x128xf32, #tpu.memory_space<vmem>>) attributes {dimension_semantics = [#tpu.dimension_semantics<parallel>, #tpu.dimension_semantics<arbitrary>], iteration_bounds = array<i64: 1, 2>, scalar_prefetch = 0 : i64, scratch_operands = 1 : i64, tpu.core_type = #tpu.core_type<tc>, window_params = [{transform_indices = @transform_0, window_bounds = array<i64: 2, 8, 128>}, {transform_indices = @transform_1, window_bounds = array<i64: 1, 1, 128>}, {transform_indices = @transform_2, window_bounds = array<i64: 1, 1, 128>}, {transform_indices = @transform_3, window_bounds = array<i64: 1, 128, 384>}, {transform_indices = @transform_4, window_bounds = array<i64: 1, 128, 128>}, {transform_indices = @transform_5, window_bounds = array<i64: 1, 1, 128>}, {transform_indices = @transform_6, window_bounds = array<i64: 1, 1, 128>}, {transform_indices = @transform_7, window_bounds = array<i64: 1, 1, 128>}, {transform_indices = @transform_8, window_bounds = array<i64: 1, 128, 512>}, {transform_indices = @transform_9, window_bounds = array<i64: 1, 1, 512>}, {transform_indices = @transform_10, window_bounds = array<i64: 1, 512, 128>}, {transform_indices = @transform_11, window_bounds = array<i64: 1, 1, 128>}, {pipeline_mode = #tpu.pipeline_mode<synchronous>, transform_indices = @transform_12, window_bounds = array<i64: 1, 128>}, {pipeline_mode = #tpu.pipeline_mode<synchronous>, transform_indices = @transform_13, window_bounds = array<i64: 1, 128>}, {transform_indices = @transform_14, window_bounds = array<i64: 2, 8, 128>}]} {
    %c0_i32 = arith.constant 0 : i32
    %0 = arith.cmpi eq, %arg1, %c0_i32 : i32
    %1 = arith.extui %0 : i1 to i32
    %c0_i32_0 = arith.constant 0 : i32
    %2 = arith.cmpi ne, %1, %c0_i32_0 : i32
    scf.if %2 {
      %c0_78 = arith.constant 0 : index
      %c0_79 = arith.constant 0 : index
      %c0_80 = arith.constant 0 : index
      %200 = vector.load %arg2[%c0_78, %c0_79, %c0_80] : memref<2x8x128xf32, #tpu.memory_space<vmem>>, vector<2x8x128xf32>
      %c0_81 = arith.constant 0 : index
      %c0_82 = arith.constant 0 : index
      %c0_83 = arith.constant 0 : index
      %201 = vector.load %arg17[%c0_81, %c0_82, %c0_83] : memref<2x8x128xf32, #tpu.memory_space<vmem>>, vector<2x8x128xf32>
      tpu.vector_store %arg17[%c0_81, %c0_82, %c0_83], %200 {strides = array<i32>} : memref<2x8x128xf32, #tpu.memory_space<vmem>>, vector<2x8x128xf32>,
    } else {
    }
    %c0 = arith.constant 0 : index
    %c0_1 = arith.constant 0 : index
    %c0_2 = arith.constant 0 : index
    %3 = vector.load %arg17[%c0, %c0_1, %c0_2] : memref<2x8x128xf32, #tpu.memory_space<vmem>>, vector<2x8x128xf32>
    %4 = vector.shape_cast %3 : vector<2x8x128xf32> to vector<16x128xf32>
    %c0_3 = arith.constant 0 : index
    %c0_4 = arith.constant 0 : index
    %c0_5 = arith.constant 0 : index
    %5 = vector.load %arg3[%c0_3, %c0_4, %c0_5] : memref<1x1x128xf32, #tpu.memory_space<vmem>>, vector<1x1x128xf32>
    %6 = vector.shape_cast %5 : vector<1x1x128xf32> to vector<1x128xf32>
    %c0_6 = arith.constant 0 : index
    %c0_7 = arith.constant 0 : index
    %c0_8 = arith.constant 0 : index
    %7 = vector.load %arg4[%c0_6, %c0_7, %c0_8] : memref<1x1x128xf32, #tpu.memory_space<vmem>>, vector<1x1x128xf32>
    %8 = vector.shape_cast %7 : vector<1x1x128xf32> to vector<1x128xf32>
    %cst = arith.constant dense<0.000000e+00> : vector<16xf32>
    %9 = vector.multi_reduction <add>, %4, %cst [1] : vector<16x128xf32> to vector<16xf32>
    %10 = vector.shape_cast %9 : vector<16xf32> to vector<16x1xf32>
    %cst_9 = arith.constant 1.280000e+02 : f32
    %11 = vector.broadcast %cst_9 : f32 to vector<16x1xf32>
    %12 = arith.divf %10, %11 : vector<16x1xf32>
    %13 = vector.broadcast %12 : vector<16x1xf32> to vector<16x128xf32>
    %14 = arith.subf %4, %13 : vector<16x128xf32>
    %15 = arith.mulf %14, %14 : vector<16x128xf32>
    %cst_10 = arith.constant dense<0.000000e+00> : vector<16xf32>
    %16 = vector.multi_reduction <add>, %15, %cst_10 [1] : vector<16x128xf32> to vector<16xf32>
    %17 = vector.shape_cast %16 : vector<16xf32> to vector<16x1xf32>
    %cst_11 = arith.constant 1.280000e+02 : f32
    %18 = vector.broadcast %cst_11 : f32 to vector<16x1xf32>
    %19 = arith.divf %17, %18 : vector<16x1xf32>
    %20 = vector.broadcast %12 : vector<16x1xf32> to vector<16x128xf32>
    %21 = arith.subf %4, %20 : vector<16x128xf32>
    %cst_12 = arith.constant 9.99999974E-6 : f32
    %22 = vector.broadcast %cst_12 : f32 to vector<16x1xf32>
    %23 = arith.addf %19, %22 : vector<16x1xf32>
    %24 = math.sqrt %23 : vector<16x1xf32>
    %25 = vector.broadcast %24 : vector<16x1xf32> to vector<16x128xf32>
    %26 = arith.divf %21, %25 : vector<16x128xf32>
    %27 = vector.broadcast %6 : vector<1x128xf32> to vector<16x128xf32>
    %28 = arith.mulf %26, %27 : vector<16x128xf32>
    %29 = vector.broadcast %8 : vector<1x128xf32> to vector<16x128xf32>
    %30 = arith.addf %28, %29 : vector<16x128xf32>
    %31 = arith.truncf %30 : vector<16x128xf32> to vector<16x128xbf16>
    %c0_13 = arith.constant 0 : index
    %c0_14 = arith.constant 0 : index
    %c0_15 = arith.constant 0 : index
    %32 = vector.load %arg5[%c0_13, %c0_14, %c0_15] : memref<1x128x384xbf16, #tpu.memory_space<vmem>>, vector<1x128x384xbf16>
    %33 = vector.shape_cast %32 : vector<1x128x384xbf16> to vector<128x384xbf16>
    %cst_16 = arith.constant dense<0.000000e+00> : vector<16x384xf32>
    %34 = tpu.matmul %31, %33, %cst_16 {dimension_numbers = #tpu.dot_dimension_numbers<[1], [0], [0], [1], [0, 0, 1, 1], [], []>} : vector<16x128xbf16>, vector<128x384xbf16>, vector<16x384xf32> -> vector<16x384xf32>
    %35 = vector.shape_cast %34 : vector<16x384xf32> to vector<2x8x384xf32>
    %36 = vector.extract_strided_slice %35 {offsets = [0, 0, 0], sizes = [2, 8, 128], strides = [1, 1, 1]} : vector<2x8x384xf32> to vector<2x8x128xf32>
    %cst_17 = arith.constant 0.176776692 : f32
    %37 = vector.broadcast %cst_17 : f32 to vector<2x8x128xf32>
    %38 = arith.mulf %36, %37 : vector<2x8x128xf32>
    %39 = arith.truncf %38 : vector<2x8x128xf32> to vector<2x8x128xbf16>
    %40 = vector.extract_strided_slice %35 {offsets = [0, 0, 128], sizes = [2, 8, 128], strides = [1, 1, 1]} : vector<2x8x384xf32> to vector<2x8x128xf32>
    %41 = arith.truncf %40 : vector<2x8x128xf32> to vector<2x8x128xbf16>
    %42 = vector.extract_strided_slice %35 {offsets = [0, 0, 256], sizes = [2, 8, 128], strides = [1, 1, 1]} : vector<2x8x384xf32> to vector<2x8x128xf32>
    %43 = arith.truncf %42 : vector<2x8x128xf32> to vector<2x8x128xbf16>
    %44 = tpu.iota {dimensions = array<i32: 0>} : vector<8x8xi32>
    %45 = tpu.iota {dimensions = array<i32: 1>} : vector<8x8xi32>
    %46 = arith.cmpi sge, %44, %45 : vector<8x8xi32>
    %47 = vector.shape_cast %46 : vector<8x8xi1> to vector<1x8x8xi1>
    %48 = vector.extract_strided_slice %39 {offsets = [0, 0, 0], sizes = [2, 8, 32], strides = [1, 1, 1]} : vector<2x8x128xbf16> to vector<2x8x32xbf16>
    %49 = vector.extract_strided_slice %41 {offsets = [0, 0, 0], sizes = [2, 8, 32], strides = [1, 1, 1]} : vector<2x8x128xbf16> to vector<2x8x32xbf16>
    %50 = vector.extract_strided_slice %43 {offsets = [0, 0, 0], sizes = [2, 8, 32], strides = [1, 1, 1]} : vector<2x8x128xbf16> to vector<2x8x32xbf16>
    "tpu.trace_start"() <{level = 10 : i32, message = "bqd,bkd->bqk"}> : () -> ()
    %cst_18 = arith.constant dense<0.000000e+00> : vector<2x8x8xf32>
    %51 = tpu.matmul %48, %49, %cst_18 {dimension_numbers = #tpu.dot_dimension_numbers<[2], [2], [1], [1], [0, 0, 0, 1, 1, 1], [0], [0]>} : vector<2x8x32xbf16>, vector<2x8x32xbf16>, vector<2x8x8xf32> -> vector<2x8x8xf32>
    %cst_19 = arith.constant -1.000000e+30 : f32
    "tpu.trace_stop"() : () -> ()
    %52 = vector.shape_cast %47 : vector<1x8x8xi1> to vector<1x8x8xi1>
    %53 = vector.broadcast %52 : vector<1x8x8xi1> to vector<2x8x8xi1>
    %54 = vector.broadcast %cst_19 : f32 to vector<2x8x8xf32>
    %55 = arith.select %53, %51, %54 : vector<2x8x8xi1>, vector<2x8x8xf32>
    %cst_20 = arith.constant dense<0xFF800000> : vector<2x8xf32>
    %56 = vector.multi_reduction <maximumf>, %55, %cst_20 [2] : vector<2x8x8xf32> to vector<2x8xf32>
    %57 = vector.shape_cast %56 : vector<2x8xf32> to vector<2x8x1xf32>
    %58 = vector.broadcast %57 : vector<2x8x1xf32> to vector<2x8x8xf32>
    %59 = arith.subf %55, %58 : vector<2x8x8xf32>
    %60 = math.exp %59 : vector<2x8x8xf32>
    %cst_21 = arith.constant dense<0.000000e+00> : vector<2x8xf32>
    %61 = vector.multi_reduction <add>, %60, %cst_21 [2] : vector<2x8x8xf32> to vector<2x8xf32>
    %62 = vector.shape_cast %61 : vector<2x8xf32> to vector<2x8x1xf32>
    %63 = tpu.reciprocal %62 {approx = true} : vector<2x8x1xf32> -> vector<2x8x1xf32>
    %64 = vector.broadcast %63 : vector<2x8x1xf32> to vector<2x8x8xf32>
    %65 = arith.mulf %60, %64 : vector<2x8x8xf32>
    %66 = arith.truncf %65 : vector<2x8x8xf32> to vector<2x8x8xbf16>
    "tpu.trace_start"() <{level = 10 : i32, message = "bqk,bkd->bqd"}> : () -> ()
    %cst_22 = arith.constant dense<0.000000e+00> : vector<2x8x32xf32>
    %67 = tpu.matmul %66, %50, %cst_22 {dimension_numbers = #tpu.dot_dimension_numbers<[2], [1], [1], [2], [0, 0, 0, 1, 1, 2], [0], [0]>} : vector<2x8x8xbf16>, vector<2x8x32xbf16>, vector<2x8x32xf32> -> vector<2x8x32xf32>
    "tpu.trace_stop"() : () -> ()
    %68 = vector.extract_strided_slice %39 {offsets = [0, 0, 32], sizes = [2, 8, 32], strides = [1, 1, 1]} : vector<2x8x128xbf16> to vector<2x8x32xbf16>
    %69 = vector.extract_strided_slice %41 {offsets = [0, 0, 32], sizes = [2, 8, 32], strides = [1, 1, 1]} : vector<2x8x128xbf16> to vector<2x8x32xbf16>
    %70 = vector.extract_strided_slice %43 {offsets = [0, 0, 32], sizes = [2, 8, 32], strides = [1, 1, 1]} : vector<2x8x128xbf16> to vector<2x8x32xbf16>
    "tpu.trace_start"() <{level = 10 : i32, message = "bqd,bkd->bqk"}> : () -> ()
    %cst_23 = arith.constant dense<0.000000e+00> : vector<2x8x8xf32>
    %71 = tpu.matmul %68, %69, %cst_23 {dimension_numbers = #tpu.dot_dimension_numbers<[2], [2], [1], [1], [0, 0, 0, 1, 1, 1], [0], [0]>} : vector<2x8x32xbf16>, vector<2x8x32xbf16>, vector<2x8x8xf32> -> vector<2x8x8xf32>
    %cst_24 = arith.constant -1.000000e+30 : f32
    "tpu.trace_stop"() : () -> ()
    %72 = vector.shape_cast %47 : vector<1x8x8xi1> to vector<1x8x8xi1>
    %73 = vector.broadcast %72 : vector<1x8x8xi1> to vector<2x8x8xi1>
    %74 = vector.broadcast %cst_24 : f32 to vector<2x8x8xf32>
    %75 = arith.select %73, %71, %74 : vector<2x8x8xi1>, vector<2x8x8xf32>
    %cst_25 = arith.constant dense<0xFF800000> : vector<2x8xf32>
    %76 = vector.multi_reduction <maximumf>, %75, %cst_25 [2] : vector<2x8x8xf32> to vector<2x8xf32>
    %77 = vector.shape_cast %76 : vector<2x8xf32> to vector<2x8x1xf32>
    %78 = vector.broadcast %77 : vector<2x8x1xf32> to vector<2x8x8xf32>
    %79 = arith.subf %75, %78 : vector<2x8x8xf32>
    %80 = math.exp %79 : vector<2x8x8xf32>
    %cst_26 = arith.constant dense<0.000000e+00> : vector<2x8xf32>
    %81 = vector.multi_reduction <add>, %80, %cst_26 [2] : vector<2x8x8xf32> to vector<2x8xf32>
    %82 = vector.shape_cast %81 : vector<2x8xf32> to vector<2x8x1xf32>
    %83 = tpu.reciprocal %82 {approx = true} : vector<2x8x1xf32> -> vector<2x8x1xf32>
    %84 = vector.broadcast %83 : vector<2x8x1xf32> to vector<2x8x8xf32>
    %85 = arith.mulf %80, %84 : vector<2x8x8xf32>
    %86 = arith.truncf %85 : vector<2x8x8xf32> to vector<2x8x8xbf16>
    "tpu.trace_start"() <{level = 10 : i32, message = "bqk,bkd->bqd"}> : () -> ()
    %cst_27 = arith.constant dense<0.000000e+00> : vector<2x8x32xf32>
    %87 = tpu.matmul %86, %70, %cst_27 {dimension_numbers = #tpu.dot_dimension_numbers<[2], [1], [1], [2], [0, 0, 0, 1, 1, 2], [0], [0]>} : vector<2x8x8xbf16>, vector<2x8x32xbf16>, vector<2x8x32xf32> -> vector<2x8x32xf32>
    "tpu.trace_stop"() : () -> ()
    %88 = vector.extract_strided_slice %39 {offsets = [0, 0, 64], sizes = [2, 8, 32], strides = [1, 1, 1]} : vector<2x8x128xbf16> to vector<2x8x32xbf16>
    %89 = vector.extract_strided_slice %41 {offsets = [0, 0, 64], sizes = [2, 8, 32], strides = [1, 1, 1]} : vector<2x8x128xbf16> to vector<2x8x32xbf16>
    %90 = vector.extract_strided_slice %43 {offsets = [0, 0, 64], sizes = [2, 8, 32], strides = [1, 1, 1]} : vector<2x8x128xbf16> to vector<2x8x32xbf16>
    "tpu.trace_start"() <{level = 10 : i32, message = "bqd,bkd->bqk"}> : () -> ()
    %cst_28 = arith.constant dense<0.000000e+00> : vector<2x8x8xf32>
    %91 = tpu.matmul %88, %89, %cst_28 {dimension_numbers = #tpu.dot_dimension_numbers<[2], [2], [1], [1], [0, 0, 0, 1, 1, 1], [0], [0]>} : vector<2x8x32xbf16>, vector<2x8x32xbf16>, vector<2x8x8xf32> -> vector<2x8x8xf32>
    %cst_29 = arith.constant -1.000000e+30 : f32
    "tpu.trace_stop"() : () -> ()
    %92 = vector.shape_cast %47 : vector<1x8x8xi1> to vector<1x8x8xi1>
    %93 = vector.broadcast %92 : vector<1x8x8xi1> to vector<2x8x8xi1>
    %94 = vector.broadcast %cst_29 : f32 to vector<2x8x8xf32>
    %95 = arith.select %93, %91, %94 : vector<2x8x8xi1>, vector<2x8x8xf32>
    %cst_30 = arith.constant dense<0xFF800000> : vector<2x8xf32>
    %96 = vector.multi_reduction <maximumf>, %95, %cst_30 [2] : vector<2x8x8xf32> to vector<2x8xf32>
    %97 = vector.shape_cast %96 : vector<2x8xf32> to vector<2x8x1xf32>
    %98 = vector.broadcast %97 : vector<2x8x1xf32> to vector<2x8x8xf32>
    %99 = arith.subf %95, %98 : vector<2x8x8xf32>
    %100 = math.exp %99 : vector<2x8x8xf32>
    %cst_31 = arith.constant dense<0.000000e+00> : vector<2x8xf32>
    %101 = vector.multi_reduction <add>, %100, %cst_31 [2] : vector<2x8x8xf32> to vector<2x8xf32>
    %102 = vector.shape_cast %101 : vector<2x8xf32> to vector<2x8x1xf32>
    %103 = tpu.reciprocal %102 {approx = true} : vector<2x8x1xf32> -> vector<2x8x1xf32>
    %104 = vector.broadcast %103 : vector<2x8x1xf32> to vector<2x8x8xf32>
    %105 = arith.mulf %100, %104 : vector<2x8x8xf32>
    %106 = arith.truncf %105 : vector<2x8x8xf32> to vector<2x8x8xbf16>
    "tpu.trace_start"() <{level = 10 : i32, message = "bqk,bkd->bqd"}> : () -> ()
    %cst_32 = arith.constant dense<0.000000e+00> : vector<2x8x32xf32>
    %107 = tpu.matmul %106, %90, %cst_32 {dimension_numbers = #tpu.dot_dimension_numbers<[2], [1], [1], [2], [0, 0, 0, 1, 1, 2], [0], [0]>} : vector<2x8x8xbf16>, vector<2x8x32xbf16>, vector<2x8x32xf32> -> vector<2x8x32xf32>
    "tpu.trace_stop"() : () -> ()
    %108 = vector.extract_strided_slice %39 {offsets = [0, 0, 96], sizes = [2, 8, 32], strides = [1, 1, 1]} : vector<2x8x128xbf16> to vector<2x8x32xbf16>
    %109 = vector.extract_strided_slice %41 {offsets = [0, 0, 96], sizes = [2, 8, 32], strides = [1, 1, 1]} : vector<2x8x128xbf16> to vector<2x8x32xbf16>
    %110 = vector.extract_strided_slice %43 {offsets = [0, 0, 96], sizes = [2, 8, 32], strides = [1, 1, 1]} : vector<2x8x128xbf16> to vector<2x8x32xbf16>
    "tpu.trace_start"() <{level = 10 : i32, message = "bqd,bkd->bqk"}> : () -> ()
    %cst_33 = arith.constant dense<0.000000e+00> : vector<2x8x8xf32>
    %111 = tpu.matmul %108, %109, %cst_33 {dimension_numbers = #tpu.dot_dimension_numbers<[2], [2], [1], [1], [0, 0, 0, 1, 1, 1], [0], [0]>} : vector<2x8x32xbf16>, vector<2x8x32xbf16>, vector<2x8x8xf32> -> vector<2x8x8xf32>
    %cst_34 = arith.constant -1.000000e+30 : f32
    "tpu.trace_stop"() : () -> ()
    %112 = vector.shape_cast %47 : vector<1x8x8xi1> to vector<1x8x8xi1>
    %113 = vector.broadcast %112 : vector<1x8x8xi1> to vector<2x8x8xi1>
    %114 = vector.broadcast %cst_34 : f32 to vector<2x8x8xf32>
    %115 = arith.select %113, %111, %114 : vector<2x8x8xi1>, vector<2x8x8xf32>
    %cst_35 = arith.constant dense<0xFF800000> : vector<2x8xf32>
    %116 = vector.multi_reduction <maximumf>, %115, %cst_35 [2] : vector<2x8x8xf32> to vector<2x8xf32>
    %117 = vector.shape_cast %116 : vector<2x8xf32> to vector<2x8x1xf32>
    %118 = vector.broadcast %117 : vector<2x8x1xf32> to vector<2x8x8xf32>
    %119 = arith.subf %115, %118 : vector<2x8x8xf32>
    %120 = math.exp %119 : vector<2x8x8xf32>
    %cst_36 = arith.constant dense<0.000000e+00> : vector<2x8xf32>
    %121 = vector.multi_reduction <add>, %120, %cst_36 [2] : vector<2x8x8xf32> to vector<2x8xf32>
    %122 = vector.shape_cast %121 : vector<2x8xf32> to vector<2x8x1xf32>
    %123 = tpu.reciprocal %122 {approx = true} : vector<2x8x1xf32> -> vector<2x8x1xf32>
    %124 = vector.broadcast %123 : vector<2x8x1xf32> to vector<2x8x8xf32>
    %125 = arith.mulf %120, %124 : vector<2x8x8xf32>
    %126 = arith.truncf %125 : vector<2x8x8xf32> to vector<2x8x8xbf16>
    "tpu.trace_start"() <{level = 10 : i32, message = "bqk,bkd->bqd"}> : () -> ()
    %cst_37 = arith.constant dense<0.000000e+00> : vector<2x8x32xf32>
    %127 = tpu.matmul %126, %110, %cst_37 {dimension_numbers = #tpu.dot_dimension_numbers<[2], [1], [1], [2], [0, 0, 0, 1, 1, 2], [0], [0]>} : vector<2x8x8xbf16>, vector<2x8x32xbf16>, vector<2x8x32xf32> -> vector<2x8x32xf32>
    "tpu.trace_stop"() : () -> ()
    %128 = tpu.concatenate %67, %87, %107, %127 in 2 : vector<2x8x32xf32>, vector<2x8x32xf32>, vector<2x8x32xf32>, vector<2x8x32xf32> -> vector<2x8x128xf32>
    %129 = vector.shape_cast %128 : vector<2x8x128xf32> to vector<16x128xf32>
    %130 = arith.truncf %129 : vector<16x128xf32> to vector<16x128xbf16>
    %c0_38 = arith.constant 0 : index
    %c0_39 = arith.constant 0 : index
    %c0_40 = arith.constant 0 : index
    %131 = vector.load %arg6[%c0_38, %c0_39, %c0_40] : memref<1x128x128xbf16, #tpu.memory_space<vmem>>, vector<1x128x128xbf16>
    %132 = vector.shape_cast %131 : vector<1x128x128xbf16> to vector<128x128xbf16>
    %cst_41 = arith.constant dense<0.000000e+00> : vector<16x128xf32>
    %133 = tpu.matmul %130, %132, %cst_41 {dimension_numbers = #tpu.dot_dimension_numbers<[1], [0], [0], [1], [0, 0, 1, 1], [], []>} : vector<16x128xbf16>, vector<128x128xbf16>, vector<16x128xf32> -> vector<16x128xf32>
    %c0_42 = arith.constant 0 : index
    %c0_43 = arith.constant 0 : index
    %c0_44 = arith.constant 0 : index
    %134 = vector.load %arg7[%c0_42, %c0_43, %c0_44] : memref<1x1x128xf32, #tpu.memory_space<vmem>>, vector<1x1x128xf32>
    %135 = vector.shape_cast %134 : vector<1x1x128xf32> to vector<1x128xf32>
    %136 = vector.broadcast %135 : vector<1x128xf32> to vector<16x128xf32>
    %137 = arith.addf %133, %136 : vector<16x128xf32>
    %138 = arith.addf %4, %137 : vector<16x128xf32>
    %c0_45 = arith.constant 0 : index
    %c0_46 = arith.constant 0 : index
    %c0_47 = arith.constant 0 : index
    %139 = vector.load %arg8[%c0_45, %c0_46, %c0_47] : memref<1x1x128xf32, #tpu.memory_space<vmem>>, vector<1x1x128xf32>
    %140 = vector.shape_cast %139 : vector<1x1x128xf32> to vector<1x128xf32>
    %c0_48 = arith.constant 0 : index
    %c0_49 = arith.constant 0 : index
    %c0_50 = arith.constant 0 : index
    %141 = vector.load %arg9[%c0_48, %c0_49, %c0_50] : memref<1x1x128xf32, #tpu.memory_space<vmem>>, vector<1x1x128xf32>
    %142 = vector.shape_cast %141 : vector<1x1x128xf32> to vector<1x128xf32>
    %cst_51 = arith.constant dense<0.000000e+00> : vector<16xf32>
    %143 = vector.multi_reduction <add>, %138, %cst_51 [1] : vector<16x128xf32> to vector<16xf32>
    %144 = vector.shape_cast %143 : vector<16xf32> to vector<16x1xf32>
    %cst_52 = arith.constant 1.280000e+02 : f32
    %145 = vector.broadcast %cst_52 : f32 to vector<16x1xf32>
    %146 = arith.divf %144, %145 : vector<16x1xf32>
    %147 = vector.broadcast %146 : vector<16x1xf32> to vector<16x128xf32>
    %148 = arith.subf %138, %147 : vector<16x128xf32>
    %149 = arith.mulf %148, %148 : vector<16x128xf32>
    %cst_53 = arith.constant dense<0.000000e+00> : vector<16xf32>
    %150 = vector.multi_reduction <add>, %149, %cst_53 [1] : vector<16x128xf32> to vector<16xf32>
    %151 = vector.shape_cast %150 : vector<16xf32> to vector<16x1xf32>
    %cst_54 = arith.constant 1.280000e+02 : f32
    %152 = vector.broadcast %cst_54 : f32 to vector<16x1xf32>
    %153 = arith.divf %151, %152 : vector<16x1xf32>
    %154 = vector.broadcast %146 : vector<16x1xf32> to vector<16x128xf32>
    %155 = arith.subf %138, %154 : vector<16x128xf32>
    %cst_55 = arith.constant 9.99999974E-6 : f32
    %156 = vector.broadcast %cst_55 : f32 to vector<16x1xf32>
    %157 = arith.addf %153, %156 : vector<16x1xf32>
    %158 = math.sqrt %157 : vector<16x1xf32>
    %159 = vector.broadcast %158 : vector<16x1xf32> to vector<16x128xf32>
    %160 = arith.divf %155, %159 : vector<16x128xf32>
    %161 = vector.broadcast %140 : vector<1x128xf32> to vector<16x128xf32>
    %162 = arith.mulf %160, %161 : vector<16x128xf32>
    %163 = vector.broadcast %142 : vector<1x128xf32> to vector<16x128xf32>
    %164 = arith.addf %162, %163 : vector<16x128xf32>
    %165 = arith.truncf %164 : vector<16x128xf32> to vector<16x128xbf16>
    %c0_56 = arith.constant 0 : index
    %c0_57 = arith.constant 0 : index
    %c0_58 = arith.constant 0 : index
    %166 = vector.load %arg10[%c0_56, %c0_57, %c0_58] : memref<1x128x512xbf16, #tpu.memory_space<vmem>>, vector<1x128x512xbf16>
    %167 = vector.shape_cast %166 : vector<1x128x512xbf16> to vector<128x512xbf16>
    %cst_59 = arith.constant dense<0.000000e+00> : vector<16x512xf32>
    %168 = tpu.matmul %165, %167, %cst_59 {dimension_numbers = #tpu.dot_dimension_numbers<[1], [0], [0], [1], [0, 0, 1, 1], [], []>} : vector<16x128xbf16>, vector<128x512xbf16>, vector<16x512xf32> -> vector<16x512xf32>
    %c0_60 = arith.constant 0 : index
    %c0_61 = arith.constant 0 : index
    %c0_62 = arith.constant 0 : index
    %169 = vector.load %arg11[%c0_60, %c0_61, %c0_62] : memref<1x1x512xf32, #tpu.memory_space<vmem>>, vector<1x1x512xf32>
    %170 = vector.shape_cast %169 : vector<1x1x512xf32> to vector<1x512xf32>
    %171 = vector.broadcast %170 : vector<1x512xf32> to vector<16x512xf32>
    %172 = arith.addf %168, %171 : vector<16x512xf32>
    %cst_63 = arith.constant 5.000000e-01 : f32
    %173 = vector.broadcast %cst_63 : f32 to vector<16x512xf32>
    %174 = arith.mulf %173, %172 : vector<16x512xf32>
    %cst_64 = arith.constant 4.471500e-02 : f32
    %175 = vector.broadcast %cst_64 : f32 to vector<16x512xf32>
    %176 = arith.mulf %175, %172 : vector<16x512xf32>
    %177 = arith.mulf %176, %172 : vector<16x512xf32>
    %178 = arith.mulf %177, %172 : vector<16x512xf32>
    %179 = arith.addf %172, %178 : vector<16x512xf32>
    %cst_65 = arith.constant 0.797884583 : f32
    %180 = vector.broadcast %cst_65 : f32 to vector<16x512xf32>
    %181 = arith.mulf %180, %179 : vector<16x512xf32>
    %182 = math.tanh %181 : vector<16x512xf32>
    %cst_66 = arith.constant 1.000000e+00 : f32
    %183 = vector.broadcast %cst_66 : f32 to vector<16x512xf32>
    %184 = arith.addf %183, %182 : vector<16x512xf32>
    %185 = arith.mulf %174, %184 : vector<16x512xf32>
    %186 = arith.truncf %185 : vector<16x512xf32> to vector<16x512xbf16>
    %c0_67 = arith.constant 0 : index
    %c0_68 = arith.constant 0 : index
    %c0_69 = arith.constant 0 : index
    %187 = vector.load %arg12[%c0_67, %c0_68, %c0_69] : memref<1x512x128xbf16, #tpu.memory_space<vmem>>, vector<1x512x128xbf16>
    %188 = vector.shape_cast %187 : vector<1x512x128xbf16> to vector<512x128xbf16>
    %cst_70 = arith.constant dense<0.000000e+00> : vector<16x128xf32>
    %189 = tpu.matmul %186, %188, %cst_70 {dimension_numbers = #tpu.dot_dimension_numbers<[1], [0], [0], [1], [0, 0, 1, 1], [], []>} : vector<16x512xbf16>, vector<512x128xbf16>, vector<16x128xf32> -> vector<16x128xf32>
    %c0_71 = arith.constant 0 : index
    %c0_72 = arith.constant 0 : index
    %c0_73 = arith.constant 0 : index
    %190 = vector.load %arg13[%c0_71, %c0_72, %c0_73] : memref<1x1x128xf32, #tpu.memory_space<vmem>>, vector<1x1x128xf32>
    %191 = vector.shape_cast %190 : vector<1x1x128xf32> to vector<1x128xf32>
    %192 = vector.broadcast %191 : vector<1x128xf32> to vector<16x128xf32>
    %193 = arith.addf %189, %192 : vector<16x128xf32>
    %194 = arith.addf %138, %193 : vector<16x128xf32>
    %195 = vector.shape_cast %194 : vector<16x128xf32> to vector<2x8x128xf32>
    %c0_74 = arith.constant 0 : index
    %c0_75 = arith.constant 0 : index
    %c0_76 = arith.constant 0 : index
    %196 = vector.load %arg17[%c0_74, %c0_75, %c0_76] : memref<2x8x128xf32, #tpu.memory_space<vmem>>, vector<2x8x128xf32>
    tpu.vector_store %arg17[%c0_74, %c0_75, %c0_76], %195 {strides = array<i32>} : memref<2x8x128xf32, #tpu.memory_space<vmem>>, vector<2x8x128xf32>,
    %c1_i32 = arith.constant 1 : i32
    %197 = arith.cmpi eq, %arg1, %c1_i32 : i32
    %198 = arith.extui %197 : i1 to i32
    %c0_i32_77 = arith.constant 0 : i32
    %199 = arith.cmpi ne, %198, %c0_i32_77 : i32
    scf.if %199 {
      %c0_78 = arith.constant 0 : index
      %c0_79 = arith.constant 0 : index
      %200 = vector.load %arg14[%c0_78, %c0_79] : memref<1x128xf32, #tpu.memory_space<vmem>>, vector<1x128xf32>
      %c0_80 = arith.constant 0 : index
      %c0_81 = arith.constant 0 : index
      %201 = vector.load %arg15[%c0_80, %c0_81] : memref<1x128xf32, #tpu.memory_space<vmem>>, vector<1x128xf32>
      %cst_82 = arith.constant dense<0.000000e+00> : vector<16xf32>
      %202 = vector.multi_reduction <add>, %194, %cst_82 [1] : vector<16x128xf32> to vector<16xf32>
      %203 = vector.shape_cast %202 : vector<16xf32> to vector<16x1xf32>
      %cst_83 = arith.constant 1.280000e+02 : f32
      %204 = vector.broadcast %cst_83 : f32 to vector<16x1xf32>
      %205 = arith.divf %203, %204 : vector<16x1xf32>
      %206 = vector.broadcast %205 : vector<16x1xf32> to vector<16x128xf32>
      %207 = arith.subf %194, %206 : vector<16x128xf32>
      %208 = arith.mulf %207, %207 : vector<16x128xf32>
      %cst_84 = arith.constant dense<0.000000e+00> : vector<16xf32>
      %209 = vector.multi_reduction <add>, %208, %cst_84 [1] : vector<16x128xf32> to vector<16xf32>
      %210 = vector.shape_cast %209 : vector<16xf32> to vector<16x1xf32>
      %cst_85 = arith.constant 1.280000e+02 : f32
      %211 = vector.broadcast %cst_85 : f32 to vector<16x1xf32>
      %212 = arith.divf %210, %211 : vector<16x1xf32>
      %213 = vector.broadcast %205 : vector<16x1xf32> to vector<16x128xf32>
      %214 = arith.subf %194, %213 : vector<16x128xf32>
      %cst_86 = arith.constant 9.99999974E-6 : f32
      %215 = vector.broadcast %cst_86 : f32 to vector<16x1xf32>
      %216 = arith.addf %212, %215 : vector<16x1xf32>
      %217 = math.sqrt %216 : vector<16x1xf32>
      %218 = vector.broadcast %217 : vector<16x1xf32> to vector<16x128xf32>
      %219 = arith.divf %214, %218 : vector<16x128xf32>
      %220 = vector.broadcast %200 : vector<1x128xf32> to vector<16x128xf32>
      %221 = arith.mulf %219, %220 : vector<16x128xf32>
      %222 = vector.broadcast %201 : vector<1x128xf32> to vector<16x128xf32>
      %223 = arith.addf %221, %222 : vector<16x128xf32>
      %224 = arith.truncf %223 : vector<16x128xf32> to vector<16x128xbf16>
      %225 = vector.shape_cast %224 : vector<16x128xbf16> to vector<2x8x128xbf16>
      %c0_87 = arith.constant 0 : index
      %c0_88 = arith.constant 0 : index
      %c0_89 = arith.constant 0 : index
      %226 = vector.load %arg16[%c0_87, %c0_88, %c0_89] : memref<2x8x128xbf16, #tpu.memory_space<vmem>>, vector<2x8x128xbf16>
      tpu.vector_store %arg16[%c0_87, %c0_88, %c0_89], %225 {strides = array<i32>} : memref<2x8x128xbf16, #tpu.memory_space<vmem>>, vector<2x8x128xbf16>,
    } else {
    }
    return
  }
  func.func @transform_0(%arg0: i32, %arg1: i32) -> (i32, i32, i32) {
    %c0_i32 = arith.constant 0 : i32
    %c0_i32_0 = arith.constant 0 : i32
    %c0_i32_1 = arith.constant 0 : i32
    return %arg0, %c0_i32, %c0_i32_0 : i32, i32, i32
  }
  func.func @transform_1(%arg0: i32, %arg1: i32) -> (i32, i32, i32) {
    %c0_i32 = arith.constant 0 : i32
    %c0_i32_0 = arith.constant 0 : i32
    %c0_i32_1 = arith.constant 0 : i32
    return %arg1, %c0_i32, %c0_i32_0 : i32, i32, i32
  }
  func.func @transform_2(%arg0: i32, %arg1: i32) -> (i32, i32, i32) {
    %c0_i32 = arith.constant 0 : i32
    %c0_i32_0 = arith.constant 0 : i32
    %c0_i32_1 = arith.constant 0 : i32
    return %arg1, %c0_i32, %c0_i32_0 : i32, i32, i32
  }
  func.func @transform_3(%arg0: i32, %arg1: i32) -> (i32, i32, i32) {
    %c0_i32 = arith.constant 0 : i32
    %c0_i32_0 = arith.constant 0 : i32
    %c0_i32_1 = arith.constant 0 : i32
    return %arg1, %c0_i32, %c0_i32_0 : i32, i32, i32
  }
  func.func @transform_4(%arg0: i32, %arg1: i32) -> (i32, i32, i32) {
    %c0_i32 = arith.constant 0 : i32
    %c0_i32_0 = arith.constant 0 : i32
    %c0_i32_1 = arith.constant 0 : i32
    return %arg1, %c0_i32, %c0_i32_0 : i32, i32, i32
  }
  func.func @transform_5(%arg0: i32, %arg1: i32) -> (i32, i32, i32) {
    %c0_i32 = arith.constant 0 : i32
    %c0_i32_0 = arith.constant 0 : i32
    %c0_i32_1 = arith.constant 0 : i32
    return %arg1, %c0_i32, %c0_i32_0 : i32, i32, i32
  }
  func.func @transform_6(%arg0: i32, %arg1: i32) -> (i32, i32, i32) {
    %c0_i32 = arith.constant 0 : i32
    %c0_i32_0 = arith.constant 0 : i32
    %c0_i32_1 = arith.constant 0 : i32
    return %arg1, %c0_i32, %c0_i32_0 : i32, i32, i32
  }
  func.func @transform_7(%arg0: i32, %arg1: i32) -> (i32, i32, i32) {
    %c0_i32 = arith.constant 0 : i32
    %c0_i32_0 = arith.constant 0 : i32
    %c0_i32_1 = arith.constant 0 : i32
    return %arg1, %c0_i32, %c0_i32_0 : i32, i32, i32
  }
  func.func @transform_8(%arg0: i32, %arg1: i32) -> (i32, i32, i32) {
    %c0_i32 = arith.constant 0 : i32
    %c0_i32_0 = arith.constant 0 : i32
    %c0_i32_1 = arith.constant 0 : i32
    return %arg1, %c0_i32, %c0_i32_0 : i32, i32, i32
  }
  func.func @transform_9(%arg0: i32, %arg1: i32) -> (i32, i32, i32) {
    %c0_i32 = arith.constant 0 : i32
    %c0_i32_0 = arith.constant 0 : i32
    %c0_i32_1 = arith.constant 0 : i32
    return %arg1, %c0_i32, %c0_i32_0 : i32, i32, i32
  }
  func.func @transform_10(%arg0: i32, %arg1: i32) -> (i32, i32, i32) {
    %c0_i32 = arith.constant 0 : i32
    %c0_i32_0 = arith.constant 0 : i32
    %c0_i32_1 = arith.constant 0 : i32
    return %arg1, %c0_i32, %c0_i32_0 : i32, i32, i32
  }
  func.func @transform_11(%arg0: i32, %arg1: i32) -> (i32, i32, i32) {
    %c0_i32 = arith.constant 0 : i32
    %c0_i32_0 = arith.constant 0 : i32
    %c0_i32_1 = arith.constant 0 : i32
    return %arg1, %c0_i32, %c0_i32_0 : i32, i32, i32
  }
  func.func @transform_12(%arg0: i32, %arg1: i32) -> (i32, i32) {
    %c0_i32 = arith.constant 0 : i32
    %c0_i32_0 = arith.constant 0 : i32
    %c0_i32_1 = arith.constant 0 : i32
    return %c0_i32, %c0_i32_0 : i32, i32
  }
  func.func @transform_13(%arg0: i32, %arg1: i32) -> (i32, i32) {
    %c0_i32 = arith.constant 0 : i32
    %c0_i32_0 = arith.constant 0 : i32
    %c0_i32_1 = arith.constant 0 : i32
    return %c0_i32, %c0_i32_0 : i32, i32
  }
  func.func @transform_14(%arg0: i32, %arg1: i32) -> (i32, i32, i32) {
    %c0_i32 = arith.constant 0 : i32
    %c0_i32_0 = arith.constant 0 : i32
    %c0_i32_1 = arith.constant 0 : i32
    return %arg0, %c0_i32, %c0_i32_0 : i32, i32, i32
  }
}

</mosaic_0001>

<llo_original>
// kernel: tpu_custom_call.1
$region0: #{tpu_custom_call.1}
  #allocation0 [shape = 'u32[]', space=smem, size = 0x4, offset = 0x4, fixed_abs, tag = 'smem constant byte address 0x4 - core index']
  #allocation1 [shape = 'u32[144,128]{1,0:T(1,128)}', space=vmem, size = 0x12000, scoped, tag = 'internal scratch']
  #allocation2 [shape = 'f32[2,8,128]{2,1,0:T(8,128)}', space=vmem, size = 0x2000, scoped, tag = 'scratch operand']
  %s0 = inlined_call_operand.hbm [shape: f32[2,8,128], index: 0, kind: input, shape index: {}]
  %s1 = inlined_call_operand.vmem [shape: f32[2,1,128], index: 1, kind: input, shape index: {}]
  %s2 = inlined_call_operand.vmem [shape: f32[2,1,128], index: 2, kind: input, shape index: {}]
  %s3 = inlined_call_operand.hbm [shape: bf16[2,128,384], index: 3, kind: input, shape index: {}]
  %s4 = inlined_call_operand.hbm [shape: bf16[2,128,128], index: 4, kind: input, shape index: {}]
  %s5 = inlined_call_operand.vmem [shape: f32[2,1,128], index: 5, kind: input, shape index: {}]
  %s6 = inlined_call_operand.vmem [shape: f32[2,1,128], index: 6, kind: input, shape index: {}]
  %s7 = inlined_call_operand.vmem [shape: f32[2,1,128], index: 7, kind: input, shape index: {}]
  %s8 = inlined_call_operand.hbm [shape: bf16[2,128,512], index: 8, kind: input, shape index: {}]
  %s9 = inlined_call_operand.vmem [shape: f32[2,1,512], index: 9, kind: input, shape index: {}]
  %s10 = inlined_call_operand.hbm [shape: bf16[2,512,128], index: 10, kind: input, shape index: {}]
  %s11 = inlined_call_operand.vmem [shape: f32[2,1,128], index: 11, kind: input, shape index: {}]
  %s12 = inlined_call_operand.vmem [shape: f32[1,128], index: 12, kind: input, shape index: {}]
  %s13 = inlined_call_operand.vmem [shape: f32[1,128], index: 13, kind: input, shape index: {}]
  %s14 = inlined_call_operand.hbm [shape: bf16[2,8,128], index: 14, kind: output, shape index: {}]
  %s15 = sld [smem:[#allocation0]]
  $region117: #{tpu_custom_call.1} parent=0
    _
  %s17 = ssub.s32 1, %s15
  %s18 = scalar_select 0, %s17, %s15
  $region1: #{tpu_custom_call.1} parent=0
    #allocation3 [shape = 'u8[8192]{0}', space=vmem, size = 0x2000, scoped, tag = 'input window, operand 0, single buffered']
    #allocation4 [shape = 's32[2]{0}', space=sflag, size = 0x8, scoped, tag = 'scoped memory for tpu_custom_call.1']
    #allocation5 [shape = 's32[2]{0}', space=sflag, size = 0x8, scoped, tag = 'scoped memory for tpu_custom_call.1']
    #allocation6 [shape = 'u8[196608]{0}', space=vmem, size = 0x30000, scoped, tag = 'input window, operand 3']
    #allocation7 [shape = 's32[2]{0}', space=sflag, size = 0x8, scoped, tag = 'scoped memory for tpu_custom_call.1']
    #allocation8 [shape = 'u8[65536]{0}', space=vmem, size = 0x10000, scoped, tag = 'input window, operand 4']
    #allocation9 [shape = 'u8[262144]{0}', space=vmem, size = 0x40000, scoped, tag = 'input window, operand 8']
    #allocation10 [shape = 's32[2]{0}', space=sflag, size = 0x8, scoped, tag = 'scoped memory for tpu_custom_call.1']
    #allocation11 [shape = 'u8[262144]{0}', space=vmem, size = 0x40000, scoped, tag = 'input window, operand 10']
    #allocation12 [shape = 'u8[4096]{0}', space=vmem, size = 0x1000, scoped, tag = 'output window, operand 0, single buffered']
    %19 = vsyncpa [#allocation4], 0
    %20 = vsyncpa [#allocation7], 0
    %s21 = scalar_lea.sflag [#allocation7], 1
    %22 = vsyncpa %s21, 0
    %23 = vsyncpa [#allocation10], 0
    %s24 = scalar_lea.sflag [#allocation10], 1
    %25 = vsyncpa %s24, 0
    %26 = vsyncpa [#allocation5], 0
    loop: start=0, step=1, limit=4
    $region2: #{tpu_custom_call.1} parent=1 // loop_pre_header
      _
    $region3: #{tpu_custom_call.1} parent=1 // loop_header
      %s28 = sphi 0, %s32
      %p29 = scmp.ge.s32.totalorder %s28, 4
      %s35 = sphi 0, %s47
      %s36 = sphi 0, %s43
      %s37 = sphi 0, %s35
      %s38 = sphi 0, %s36
      %s39 = sphi 0, %s37
      %s40 = sphi 0, %s38
      %s50 = sphi 0, %s52
      %s53 = sphi 0, %s50
      %s54 = sphi 0, %s53
      %s70 = sphi 0, %s54
      %s76 = sphi 0, %s78
      %s79 = sphi 0, %s76
      %s80 = sphi 0, %s79
      %s96 = sphi 0, %s80
      %s102 = sphi 0, %s104
      %s105 = sphi 0, %s102
      %s106 = sphi 0, %s105
      %s122 = sphi 0, %s106
      %s128 = sphi 0, %s130
      %s131 = sphi 0, %s128
      %s132 = sphi 0, %s131
      %s148 = sphi 0, %s132
      %s154 = sphi 0, %s156
      %s157 = sphi 0, %s154
      %s158 = sphi 0, %s157
      %s174 = sphi 0, %s158
      %s180 = sphi 0, %s182
      %s183 = sphi 0, %s180
      %s184 = sphi 0, %s183
      %s200 = sphi 0, %s184
      %s206 = sphi 0, %s208
      %s209 = sphi 0, %s206
      %s210 = sphi 0, %s209
      %s226 = sphi 0, %s210
      %s232 = sphi 0, %s234
      %s235 = sphi 0, %s232
      %s236 = sphi 0, %s235
      %s252 = sphi 0, %s236
      %s258 = sphi 0, %s260
      %s261 = sphi 0, %s258
      %s262 = sphi 0, %s261
      %s278 = sphi 0, %s262
      %s284 = sphi 0, %s286
      %s287 = sphi 0, %s284
      %s288 = sphi 0, %s287
      %s304 = sphi 0, %s288
      %s310 = sphi 0, %s312
      %s313 = sphi 0, %s310
      %s314 = sphi 0, %s313
      %s330 = sphi 0, %s314
      %s336 = sphi 0, %s338
      %s339 = sphi 0, %s336
      %s340 = sphi 0, %s339
      %s356 = sphi 0, %s340
      %s360 = sphi 0, %s360
      %s362 = sphi 0, %s360
      %s363 = sphi 0, %s362
      %s377 = sphi 0, %s363
      %s381 = sphi 0, %s381
      %s383 = sphi 0, %s381
      %s384 = sphi 0, %s383
      %s398 = sphi 0, %s384
      %s404 = sphi 0, %s406
      %s407 = sphi 0, %s404
      %s408 = sphi 0, %s407
      %s424 = sphi 0, %s408
    $region4: #{tpu_custom_call.1} parent=1 // loop_header_branch
      %31 = sbr.rel (%p29) target = $region8
    $region5: #{tpu_custom_call.1} parent=1 // loop_body
      %s33 = ssub.s32 %s28, 1
      %s34 = ssub.s32 %s28, 2
      %s41 = sadd.s32 1, %s36
      %p42 = scmp.ge.s32.totalorder %s41, 2
      %s43 = scalar_select %p42, 0, %s41
      %s44 = sadd.s32 1, %s35
      %s45 = scalar_select %p42, %s44, %s35
      %p46 = scmp.ge.s32.totalorder %s45, 1
      %s47 = scalar_select %p46, 0, %s45
      %s48 = ssub.s32 %s35, %s47
      %p49 = scmp.eq.s32.totalorder %s48, 0
      %s51 = sadd.s32 %s50, 1
      %s52 = scalar_select %p49, %s50, %s51
      %p55 = pneg %p49
      %p56 = scmp.eq.s32.totalorder %s28, 1
      %p57 = por %p55, %p56
      %p58 = scmp.ne.s32.totalorder %s50, %s53
      %p59 = scmp.eq.s32.totalorder %s28, 0
      %p60 = por %p58, %p59
      %p61 = scmp.ne.s32.totalorder %s50, %s53
      %p62 = scmp.eq.s32.totalorder %s33, 1
      %p63 = por %p61, %p62
      %p64 = scmp.ne.s32.totalorder %s53, %s54
      %p65 = scmp.eq.s32.totalorder %s33, 0
      %p66 = por %p64, %p65
      %p67 = scmp.ne.s32.totalorder %s53, %s54
      %p68 = scmp.eq.s32.totalorder %s34, 1
      %p69 = por %p67, %p68
      %p71 = scmp.ne.s32.totalorder %s54, %s70
      %p72 = scmp.eq.s32.totalorder %s34, 0
      %p73 = por %p71, %p72
      %s74 = ssub.s32 %s36, %s43
      %p75 = scmp.eq.s32.totalorder %s74, 0
      %s77 = sadd.s32 %s76, 1
      %s78 = scalar_select %p75, %s76, %s77
      %p81 = pneg %p75
      %p82 = scmp.eq.s32.totalorder %s28, 1
      %p83 = por %p81, %p82
      %p84 = scmp.ne.s32.totalorder %s76, %s79
      %p85 = scmp.eq.s32.totalorder %s28, 0
      %p86 = por %p84, %p85
      %p87 = scmp.ne.s32.totalorder %s76, %s79
      %p88 = scmp.eq.s32.totalorder %s33, 1
      %p89 = por %p87, %p88
      %p90 = scmp.ne.s32.totalorder %s79, %s80
      %p91 = scmp.eq.s32.totalorder %s33, 0
      %p92 = por %p90, %p91
      %p93 = scmp.ne.s32.totalorder %s79, %s80
      %p94 = scmp.eq.s32.totalorder %s34, 1
      %p95 = por %p93, %p94
      %p97 = scmp.ne.s32.totalorder %s80, %s96
      %p98 = scmp.eq.s32.totalorder %s34, 0
      %p99 = por %p97, %p98
      %s100 = ssub.s32 %s36, %s43
      %p101 = scmp.eq.s32.totalorder %s100, 0
      %s103 = sadd.s32 %s102, 1
      %s104 = scalar_select %p101, %s102, %s103
      %p107 = pneg %p101
      %p108 = scmp.eq.s32.totalorder %s28, 1
      %p109 = por %p107, %p108
      %p110 = scmp.ne.s32.totalorder %s102, %s105
      %p111 = scmp.eq.s32.totalorder %s28, 0
      %p112 = por %p110, %p111
      %p113 = scmp.ne.s32.totalorder %s102, %s105
      %p114 = scmp.eq.s32.totalorder %s33, 1
      %p115 = por %p113, %p114
      %p116 = scmp.ne.s32.totalorder %s105, %s106
      %p117 = scmp.eq.s32.totalorder %s33, 0
      %p118 = por %p116, %p117
      %p119 = scmp.ne.s32.totalorder %s105, %s106
      %p120 = scmp.eq.s32.totalorder %s34, 1
      %p121 = por %p119, %p120
      %p123 = scmp.ne.s32.totalorder %s106, %s122
      %p124 = scmp.eq.s32.totalorder %s34, 0
      %p125 = por %p123, %p124
      %s126 = ssub.s32 %s36, %s43
      %p127 = scmp.eq.s32.totalorder %s126, 0
      %s129 = sadd.s32 %s128, 1
      %s130 = scalar_select %p127, %s128, %s129
      %p133 = pneg %p127
      %p134 = scmp.eq.s32.totalorder %s28, 1
      %p135 = por %p133, %p134
      %p136 = scmp.ne.s32.totalorder %s128, %s131
      %p137 = scmp.eq.s32.totalorder %s28, 0
      %p138 = por %p136, %p137
      %p139 = scmp.ne.s32.totalorder %s128, %s131
      %p140 = scmp.eq.s32.totalorder %s33, 1
      %p141 = por %p139, %p140
      %p142 = scmp.ne.s32.totalorder %s131, %s132
      %p143 = scmp.eq.s32.totalorder %s33, 0
      %p144 = por %p142, %p143
      %p145 = scmp.ne.s32.totalorder %s131, %s132
      %p146 = scmp.eq.s32.totalorder %s34, 1
      %p147 = por %p145, %p146
      %p149 = scmp.ne.s32.totalorder %s132, %s148
      %p150 = scmp.eq.s32.totalorder %s34, 0
      %p151 = por %p149, %p150
      %s152 = ssub.s32 %s36, %s43
      %p153 = scmp.eq.s32.totalorder %s152, 0
      %s155 = sadd.s32 %s154, 1
      %s156 = scalar_select %p153, %s154, %s155
      %p159 = pneg %p153
      %p160 = scmp.eq.s32.totalorder %s28, 1
      %p161 = por %p159, %p160
      %p162 = scmp.ne.s32.totalorder %s154, %s157
      %p163 = scmp.eq.s32.totalorder %s28, 0
      %p164 = por %p162, %p163
      %p165 = scmp.ne.s32.totalorder %s154, %s157
      %p166 = scmp.eq.s32.totalorder %s33, 1
      %p167 = por %p165, %p166
      %p168 = scmp.ne.s32.totalorder %s157, %s158
      %p169 = scmp.eq.s32.totalorder %s33, 0
      %p170 = por %p168, %p169
      %p171 = scmp.ne.s32.totalorder %s157, %s158
      %p172 = scmp.eq.s32.totalorder %s34, 1
      %p173 = por %p171, %p172
      %p175 = scmp.ne.s32.totalorder %s158, %s174
      %p176 = scmp.eq.s32.totalorder %s34, 0
      %p177 = por %p175, %p176
      %s178 = ssub.s32 %s36, %s43
      %p179 = scmp.eq.s32.totalorder %s178, 0
      %s181 = sadd.s32 %s180, 1
      %s182 = scalar_select %p179, %s180, %s181
      %p185 = pneg %p179
      %p186 = scmp.eq.s32.totalorder %s28, 1
      %p187 = por %p185, %p186
      %p188 = scmp.ne.s32.totalorder %s180, %s183
      %p189 = scmp.eq.s32.totalorder %s28, 0
      %p190 = por %p188, %p189
      %p191 = scmp.ne.s32.totalorder %s180, %s183
      %p192 = scmp.eq.s32.totalorder %s33, 1
      %p193 = por %p191, %p192
      %p194 = scmp.ne.s32.totalorder %s183, %s184
      %p195 = scmp.eq.s32.totalorder %s33, 0
      %p196 = por %p194, %p195
      %p197 = scmp.ne.s32.totalorder %s183, %s184
      %p198 = scmp.eq.s32.totalorder %s34, 1
      %p199 = por %p197, %p198
      %p201 = scmp.ne.s32.totalorder %s184, %s200
      %p202 = scmp.eq.s32.totalorder %s34, 0
      %p203 = por %p201, %p202
      %s204 = ssub.s32 %s36, %s43
      %p205 = scmp.eq.s32.totalorder %s204, 0
      %s207 = sadd.s32 %s206, 1
      %s208 = scalar_select %p205, %s206, %s207
      %p211 = pneg %p205
      %p212 = scmp.eq.s32.totalorder %s28, 1
      %p213 = por %p211, %p212
      %p214 = scmp.ne.s32.totalorder %s206, %s209
      %p215 = scmp.eq.s32.totalorder %s28, 0
      %p216 = por %p214, %p215
      %p217 = scmp.ne.s32.totalorder %s206, %s209
      %p218 = scmp.eq.s32.totalorder %s33, 1
      %p219 = por %p217, %p218
      %p220 = scmp.ne.s32.totalorder %s209, %s210
      %p221 = scmp.eq.s32.totalorder %s33, 0
      %p222 = por %p220, %p221
      %p223 = scmp.ne.s32.totalorder %s209, %s210
      %p224 = scmp.eq.s32.totalorder %s34, 1
      %p225 = por %p223, %p224
      %p227 = scmp.ne.s32.totalorder %s210, %s226
      %p228 = scmp.eq.s32.totalorder %s34, 0
      %p229 = por %p227, %p228
      %s230 = ssub.s32 %s36, %s43
      %p231 = scmp.eq.s32.totalorder %s230, 0
      %s233 = sadd.s32 %s232, 1
      %s234 = scalar_select %p231, %s232, %s233
      %p237 = pneg %p231
      %p238 = scmp.eq.s32.totalorder %s28, 1
      %p239 = por %p237, %p238
      %p240 = scmp.ne.s32.totalorder %s232, %s235
      %p241 = scmp.eq.s32.totalorder %s28, 0
      %p242 = por %p240, %p241
      %p243 = scmp.ne.s32.totalorder %s232, %s235
      %p244 = scmp.eq.s32.totalorder %s33, 1
      %p245 = por %p243, %p244
      %p246 = scmp.ne.s32.totalorder %s235, %s236
      %p247 = scmp.eq.s32.totalorder %s33, 0
      %p248 = por %p246, %p247
      %p249 = scmp.ne.s32.totalorder %s235, %s236
      %p250 = scmp.eq.s32.totalorder %s34, 1
      %p251 = por %p249, %p250
      %p253 = scmp.ne.s32.totalorder %s236, %s252
      %p254 = scmp.eq.s32.totalorder %s34, 0
      %p255 = por %p253, %p254
      %s256 = ssub.s32 %s36, %s43
      %p257 = scmp.eq.s32.totalorder %s256, 0
      %s259 = sadd.s32 %s258, 1
      %s260 = scalar_select %p257, %s258, %s259
      %p263 = pneg %p257
      %p264 = scmp.eq.s32.totalorder %s28, 1
      %p265 = por %p263, %p264
      %p266 = scmp.ne.s32.totalorder %s258, %s261
      %p267 = scmp.eq.s32.totalorder %s28, 0
      %p268 = por %p266, %p267
      %p269 = scmp.ne.s32.totalorder %s258, %s261
      %p270 = scmp.eq.s32.totalorder %s33, 1
      %p271 = por %p269, %p270
      %p272 = scmp.ne.s32.totalorder %s261, %s262
      %p273 = scmp.eq.s32.totalorder %s33, 0
      %p274 = por %p272, %p273
      %p275 = scmp.ne.s32.totalorder %s261, %s262
      %p276 = scmp.eq.s32.totalorder %s34, 1
      %p277 = por %p275, %p276
      %p279 = scmp.ne.s32.totalorder %s262, %s278
      %p280 = scmp.eq.s32.totalorder %s34, 0
      %p281 = por %p279, %p280
      %s282 = ssub.s32 %s36, %s43
      %p283 = scmp.eq.s32.totalorder %s282, 0
      %s285 = sadd.s32 %s284, 1
      %s286 = scalar_select %p283, %s284, %s285
      %p289 = pneg %p283
      %p290 = scmp.eq.s32.totalorder %s28, 1
      %p291 = por %p289, %p290
      %p292 = scmp.ne.s32.totalorder %s284, %s287
      %p293 = scmp.eq.s32.totalorder %s28, 0
      %p294 = por %p292, %p293
      %p295 = scmp.ne.s32.totalorder %s284, %s287
      %p296 = scmp.eq.s32.totalorder %s33, 1
      %p297 = por %p295, %p296
      %p298 = scmp.ne.s32.totalorder %s287, %s288
      %p299 = scmp.eq.s32.totalorder %s33, 0
      %p300 = por %p298, %p299
      %p301 = scmp.ne.s32.totalorder %s287, %s288
      %p302 = scmp.eq.s32.totalorder %s34, 1
      %p303 = por %p301, %p302
      %p305 = scmp.ne.s32.totalorder %s288, %s304
      %p306 = scmp.eq.s32.totalorder %s34, 0
      %p307 = por %p305, %p306
      %s308 = ssub.s32 %s36, %s43
      %p309 = scmp.eq.s32.totalorder %s308, 0
      %s311 = sadd.s32 %s310, 1
      %s312 = scalar_select %p309, %s310, %s311
      %p315 = pneg %p309
      %p316 = scmp.eq.s32.totalorder %s28, 1
      %p317 = por %p315, %p316
      %p318 = scmp.ne.s32.totalorder %s310, %s313
      %p319 = scmp.eq.s32.totalorder %s28, 0
      %p320 = por %p318, %p319
      %p321 = scmp.ne.s32.totalorder %s310, %s313
      %p322 = scmp.eq.s32.totalorder %s33, 1
      %p323 = por %p321, %p322
      %p324 = scmp.ne.s32.totalorder %s313, %s314
      %p325 = scmp.eq.s32.totalorder %s33, 0
      %p326 = por %p324, %p325
      %p327 = scmp.ne.s32.totalorder %s313, %s314
      %p328 = scmp.eq.s32.totalorder %s34, 1
      %p329 = por %p327, %p328
      %p331 = scmp.ne.s32.totalorder %s314, %s330
      %p332 = scmp.eq.s32.totalorder %s34, 0
      %p333 = por %p331, %p332
      %s334 = ssub.s32 %s36, %s43
      %p335 = scmp.eq.s32.totalorder %s334, 0
      %s337 = sadd.s32 %s336, 1
      %s338 = scalar_select %p335, %s336, %s337
      %p341 = pneg %p335
      %p342 = scmp.eq.s32.totalorder %s28, 1
      %p343 = por %p341, %p342
      %p344 = scmp.ne.s32.totalorder %s336, %s339
      %p345 = scmp.eq.s32.totalorder %s28, 0
      %p346 = por %p344, %p345
      %p347 = scmp.ne.s32.totalorder %s336, %s339
      %p348 = scmp.eq.s32.totalorder %s33, 1
      %p349 = por %p347, %p348
      %p350 = scmp.ne.s32.totalorder %s339, %s340
      %p351 = scmp.eq.s32.totalorder %s33, 0
      %p352 = por %p350, %p351
      %p353 = scmp.ne.s32.totalorder %s339, %s340
      %p354 = scmp.eq.s32.totalorder %s34, 1
      %p355 = por %p353, %p354
      %p357 = scmp.ne.s32.totalorder %s340, %s356
      %p358 = scmp.eq.s32.totalorder %s34, 0
      %p359 = por %p357, %p358
      %s361 = sadd.s32 %s360, 1
      %p364 = scmp.eq.s32.totalorder %s28, 1
      %p365 = scmp.ne.s32.totalorder %s360, %s362
      %p366 = scmp.eq.s32.totalorder %s28, 0
      %p367 = por %p365, %p366
      %p368 = scmp.ne.s32.totalorder %s360, %s362
      %p369 = scmp.eq.s32.totalorder %s33, 1
      %p370 = por %p368, %p369
      %p371 = scmp.ne.s32.totalorder %s362, %s363
      %p372 = scmp.eq.s32.totalorder %s33, 0
      %p373 = por %p371, %p372
      %p374 = scmp.ne.s32.totalorder %s362, %s363
      %p375 = scmp.eq.s32.totalorder %s34, 1
      %p376 = por %p374, %p375
      %p378 = scmp.ne.s32.totalorder %s363, %s377
      %p379 = scmp.eq.s32.totalorder %s34, 0
      %p380 = por %p378, %p379
      %s382 = sadd.s32 %s381, 1
      %p385 = scmp.eq.s32.totalorder %s28, 1
      %p386 = scmp.ne.s32.totalorder %s381, %s383
      %p387 = scmp.eq.s32.totalorder %s28, 0
      %p388 = por %p386, %p387
      %p389 = scmp.ne.s32.totalorder %s381, %s383
      %p390 = scmp.eq.s32.totalorder %s33, 1
      %p391 = por %p389, %p390
      %p392 = scmp.ne.s32.totalorder %s383, %s384
      %p393 = scmp.eq.s32.totalorder %s33, 0
      %p394 = por %p392, %p393
      %p395 = scmp.ne.s32.totalorder %s383, %s384
      %p396 = scmp.eq.s32.totalorder %s34, 1
      %p397 = por %p395, %p396
      %p399 = scmp.ne.s32.totalorder %s384, %s398
      %p400 = scmp.eq.s32.totalorder %s34, 0
      %p401 = por %p399, %p400
      %s402 = ssub.s32 %s35, %s47
      %p403 = scmp.eq.s32.totalorder %s402, 0
      %s405 = sadd.s32 %s404, 1
      %s406 = scalar_select %p403, %s404, %s405
      %p409 = pneg %p403
      %p410 = scmp.eq.s32.totalorder %s28, 1
      %p411 = por %p409, %p410
      %p412 = scmp.ne.s32.totalorder %s404, %s407
      %p413 = scmp.eq.s32.totalorder %s28, 0
      %p414 = por %p412, %p413
      %p415 = scmp.ne.s32.totalorder %s404, %s407
      %p416 = scmp.eq.s32.totalorder %s33, 1
      %p417 = por %p415, %p416
      %p418 = scmp.ne.s32.totalorder %s407, %s408
      %p419 = scmp.eq.s32.totalorder %s33, 0
      %p420 = por %p418, %p419
      %p421 = scmp.ne.s32.totalorder %s407, %s408
      %p422 = scmp.eq.s32.totalorder %s34, 1
      %p423 = por %p421, %p422
      %p425 = scmp.ne.s32.totalorder %s408, %s424
      %p426 = scmp.eq.s32.totalorder %s34, 0
      %p427 = por %p425, %p426
      %p428 = scmp.le.s32.totalorder 1, %s28
      %p429 = scmp.lt.s32.totalorder %s28, 3
      %p430 = pnand %p428, %p429
      %p431 = pneg %p430
      // Predicated region
      $region9: #{tpu_custom_call.1} parent=5 // pred_check
        _
      $region10: #{tpu_custom_call.1} parent=5 // pred_check_branch
        %433 = sbr.rel (%p430) target = $region12
      $region11: #{tpu_custom_call.1} parent=5 // pred_region
        %s434 = ssub.s32 %s28, 1
        // Predicated region
        $region13: #{tpu_custom_call.1} parent=11 // pred_check
          %p435 = pneg %p66
        $region14: #{tpu_custom_call.1} parent=11 // pred_check_branch
          %437 = sbr.rel (%p435) target = $region16
        $region15: #{tpu_custom_call.1} parent=11 // pred_region
          %s438 = smul.u32 2, %s37
          %s440 = ssub.s32 256, 256
          %441 = vsyncadd [#allocation4], %s440
          %s442 = smul.addr %s438, 128
          %s443 = scalar_lea.hbm %s0, %s442
          %s444 = sshll.u32 [#allocation3], 4
          %s445 = int_to_ptr.vmem [resolvable:$true] %s444
          %450 = dma.hbm_to_vmem [thread:$0]  %s443, 256, %s445, [#allocation4], 128, 128, 8
        $region16: #{tpu_custom_call.1} parent=11 // pred_fallthru
          _
        // Predicated region
        $region17: #{tpu_custom_call.1} parent=11 // pred_check
          %p451 = pneg %p373
        $region18: #{tpu_custom_call.1} parent=11 // pred_check_branch
          %453 = sbr.rel (%p451) target = $region20
        $region19: #{tpu_custom_call.1} parent=11 // pred_region
          _
        $region20: #{tpu_custom_call.1} parent=11 // pred_fallthru
          _
        // Predicated region
        $region21: #{tpu_custom_call.1} parent=11 // pred_check
          %p454 = pneg %p394
        $region22: #{tpu_custom_call.1} parent=11 // pred_check_branch
          %456 = sbr.rel (%p454) target = $region24
        $region23: #{tpu_custom_call.1} parent=11 // pred_region
          _
        $region24: #{tpu_custom_call.1} parent=11 // pred_fallthru
          _
      $region12: #{tpu_custom_call.1} parent=5 // pred_fallthru
        _
      %p457 = scmp.lt.s32.totalorder %s28, 2
      // Predicated region
      $region25: #{tpu_custom_call.1} parent=5 // pred_check
        %p458 = pneg %p457
      $region26: #{tpu_custom_call.1} parent=5 // pred_check_branch
        %460 = sbr.rel (%p458) target = $region28
      $region27: #{tpu_custom_call.1} parent=5 // pred_region
        // Predicated region
        $region29: #{tpu_custom_call.1} parent=27 // pred_check
          %p461 = pneg %p86
        $region30: #{tpu_custom_call.1} parent=27 // pred_check_branch
          %463 = sbr.rel (%p461) target = $region32
        $region31: #{tpu_custom_call.1} parent=27 // pred_region
          %p464 = scmp.lt.s32.totalorder %s36, 1
          %s465 = scalar_select %p464, %s36, 1
          %s466 = scalar_lea.vmem %s1, %s465
        $region32: #{tpu_custom_call.1} parent=27 // pred_fallthru
          _
        // Predicated region
        $region33: #{tpu_custom_call.1} parent=27 // pred_check
          %p467 = pneg %p112
        $region34: #{tpu_custom_call.1} parent=27 // pred_check_branch
          %469 = sbr.rel (%p467) target = $region36
        $region35: #{tpu_custom_call.1} parent=27 // pred_region
          %p470 = scmp.lt.s32.totalorder %s36, 1
          %s471 = scalar_select %p470, %s36, 1
          %s472 = scalar_lea.vmem %s2, %s471
        $region36: #{tpu_custom_call.1} parent=27 // pred_fallthru
          _
        // Predicated region
        $region37: #{tpu_custom_call.1} parent=27 // pred_check
          %p473 = pneg %p138
        $region38: #{tpu_custom_call.1} parent=27 // pred_check_branch
          %475 = sbr.rel (%p473) target = $region40
        $region39: #{tpu_custom_call.1} parent=27 // pred_region
          %s476 = sand.u32 %s28, 1
          %s477 = scalar_lea.sflag [#allocation7], %s476
          %s478 = sand.u32 %s128, 1
          %s479 = smul.addr %s478, 192
          %s480 = scalar_lea.vmem [#allocation6], %s479
          %s482 = ssub.s32 3072, 3072
          %483 = vsyncadd %s477, %s482
          %s484 = smul.addr %s36, 48
          %s485 = smul.addr %s484, 64
          %s486 = scalar_lea.hbm %s3, %s485
          %s487 = sshll.u32 %s480, 4
          %s488 = int_to_ptr.vmem [resolvable:$true] %s487
          %493 = dma.hbm_to_vmem [thread:$0]  %s486, 3072, %s488, %s477, 192, 192, 12
        $region40: #{tpu_custom_call.1} parent=27 // pred_fallthru
          _
        // Predicated region
        $region41: #{tpu_custom_call.1} parent=27 // pred_check
          %p494 = pneg %p164
        $region42: #{tpu_custom_call.1} parent=27 // pred_check_branch
          %496 = sbr.rel (%p494) target = $region44
        $region43: #{tpu_custom_call.1} parent=27 // pred_region
          %s497 = sand.u32 %s28, 1
          %s498 = scalar_lea.sflag [#allocation7], %s497
          %s499 = sand.u32 %s154, 1
          %s500 = smul.addr %s499, 64
          %s501 = scalar_lea.vmem [#allocation8], %s500
          %s503 = ssub.s32 1024, 1024
          %504 = vsyncadd %s498, %s503
          %s505 = smul.addr %s36, 16
          %s506 = smul.addr %s505, 64
          %s507 = scalar_lea.hbm %s4, %s506
          %s508 = sshll.u32 %s501, 4
          %s509 = int_to_ptr.vmem [resolvable:$true] %s508
          %514 = dma.hbm_to_vmem [thread:$0]  %s507, 1024, %s509, %s498, 64, 64, 4
        $region44: #{tpu_custom_call.1} parent=27 // pred_fallthru
          _
        // Predicated region
        $region45: #{tpu_custom_call.1} parent=27 // pred_check
          %p515 = pneg %p190
        $region46: #{tpu_custom_call.1} parent=27 // pred_check_branch
          %517 = sbr.rel (%p515) target = $region48
        $region47: #{tpu_custom_call.1} parent=27 // pred_region
          %p518 = scmp.lt.s32.totalorder %s36, 1
          %s519 = scalar_select %p518, %s36, 1
          %s520 = scalar_lea.vmem %s5, %s519
        $region48: #{tpu_custom_call.1} parent=27 // pred_fallthru
          _
        // Predicated region
        $region49: #{tpu_custom_call.1} parent=27 // pred_check
          %p521 = pneg %p216
        $region50: #{tpu_custom_call.1} parent=27 // pred_check_branch
          %523 = sbr.rel (%p521) target = $region52
        $region51: #{tpu_custom_call.1} parent=27 // pred_region
          %p524 = scmp.lt.s32.totalorder %s36, 1
          %s525 = scalar_select %p524, %s36, 1
          %s526 = scalar_lea.vmem %s6, %s525
        $region52: #{tpu_custom_call.1} parent=27 // pred_fallthru
          _
        // Predicated region
        $region53: #{tpu_custom_call.1} parent=27 // pred_check
          %p527 = pneg %p242
        $region54: #{tpu_custom_call.1} parent=27 // pred_check_branch
          %529 = sbr.rel (%p527) target = $region56
        $region55: #{tpu_custom_call.1} parent=27 // pred_region
          %p530 = scmp.lt.s32.totalorder %s36, 1
          %s531 = scalar_select %p530, %s36, 1
          %s532 = scalar_lea.vmem %s7, %s531
        $region56: #{tpu_custom_call.1} parent=27 // pred_fallthru
          _
        // Predicated region
        $region57: #{tpu_custom_call.1} parent=27 // pred_check
          %p533 = pneg %p268
        $region58: #{tpu_custom_call.1} parent=27 // pred_check_branch
          %535 = sbr.rel (%p533) target = $region60
        $region59: #{tpu_custom_call.1} parent=27 // pred_region
          %s536 = sand.u32 %s28, 1
          %s537 = scalar_lea.sflag [#allocation10], %s536
          %s538 = sand.u32 %s258, 1
          %s539 = smul.addr %s538, 256
          %s540 = scalar_lea.vmem [#allocation9], %s539
          %s542 = ssub.s32 4096, 4096
          %543 = vsyncadd %s537, %s542
          %s544 = smul.addr %s36, 64
          %s545 = smul.addr %s544, 64
          %s546 = scalar_lea.hbm %s8, %s545
          %s547 = sshll.u32 %s540, 4
          %s548 = int_to_ptr.vmem [resolvable:$true] %s547
          %553 = dma.hbm_to_vmem [thread:$0]  %s546, 4096, %s548, %s537, 256, 256, 16
        $region60: #{tpu_custom_call.1} parent=27 // pred_fallthru
          _
        // Predicated region
        $region61: #{tpu_custom_call.1} parent=27 // pred_check
          %p554 = pneg %p294
        $region62: #{tpu_custom_call.1} parent=27 // pred_check_branch
          %556 = sbr.rel (%p554) target = $region64
        $region63: #{tpu_custom_call.1} parent=27 // pred_region
          %p557 = scmp.lt.s32.totalorder %s36, 1
          %s558 = scalar_select %p557, %s36, 1
          %s559 = smul.addr %s558, 4
          %s560 = scalar_lea.vmem %s9, %s559
        $region64: #{tpu_custom_call.1} parent=27 // pred_fallthru
          _
        // Predicated region
        $region65: #{tpu_custom_call.1} parent=27 // pred_check
          %p561 = pneg %p320
        $region66: #{tpu_custom_call.1} parent=27 // pred_check_branch
          %563 = sbr.rel (%p561) target = $region68
        $region67: #{tpu_custom_call.1} parent=27 // pred_region
          %s564 = sand.u32 %s28, 1
          %s565 = scalar_lea.sflag [#allocation10], %s564
          %s566 = sand.u32 %s310, 1
          %s567 = smul.addr %s566, 256
          %s568 = scalar_lea.vmem [#allocation11], %s567
          %s570 = ssub.s32 4096, 4096
          %571 = vsyncadd %s565, %s570
          %s572 = smul.addr %s36, 64
          %s573 = smul.addr %s572, 64
          %s574 = scalar_lea.hbm %s10, %s573
          %s575 = sshll.u32 %s568, 4
          %s576 = int_to_ptr.vmem [resolvable:$true] %s575
          %581 = dma.hbm_to_vmem [thread:$0]  %s574, 4096, %s576, %s565, 64, 64, 4
        $region68: #{tpu_custom_call.1} parent=27 // pred_fallthru
          _
        // Predicated region
        $region69: #{tpu_custom_call.1} parent=27 // pred_check
          %p582 = pneg %p346
        $region70: #{tpu_custom_call.1} parent=27 // pred_check_branch
          %584 = sbr.rel (%p582) target = $region72
        $region71: #{tpu_custom_call.1} parent=27 // pred_region
          %p585 = scmp.lt.s32.totalorder %s36, 1
          %s586 = scalar_select %p585, %s36, 1
          %s587 = scalar_lea.vmem %s11, %s586
        $region72: #{tpu_custom_call.1} parent=27 // pred_fallthru
          _
      $region28: #{tpu_custom_call.1} parent=5 // pred_fallthru
        _
      %p588 = scmp.le.s32.totalorder 1, %s28
      %p589 = scmp.lt.s32.totalorder %s28, 3
      %p590 = pnand %p588, %p589
      %p591 = pneg %p590
      // Predicated region
      $region73: #{tpu_custom_call.1} parent=5 // pred_check
        _
      $region74: #{tpu_custom_call.1} parent=5 // pred_check_branch
        %593 = sbr.rel (%p590) target = $region76
      $region75: #{tpu_custom_call.1} parent=5 // pred_region
        %s594 = ssub.s32 %s28, 1
        // Predicated region
        $region77: #{tpu_custom_call.1} parent=75 // pred_check
          %p595 = pneg %p66
        $region78: #{tpu_custom_call.1} parent=75 // pred_check_branch
          %597 = sbr.rel (%p595) target = $region80
        $region79: #{tpu_custom_call.1} parent=75 // pred_region
          %598 = dma.done [#allocation4], 256
        $region80: #{tpu_custom_call.1} parent=75 // pred_fallthru
          _
        %s599 = sand.u32 %s33, 1
        %s600 = scalar_lea.sflag [#allocation7], %s599
        %s601 = sand.u32 %s131, 1
        %s602 = smul.addr %s601, 192
        %s603 = scalar_lea.vmem [#allocation6], %s602
        // Predicated region
        $region81: #{tpu_custom_call.1} parent=75 // pred_check
          %p604 = pneg %p144
        $region82: #{tpu_custom_call.1} parent=75 // pred_check_branch
          %606 = sbr.rel (%p604) target = $region84
        $region83: #{tpu_custom_call.1} parent=75 // pred_region
          %607 = dma.done %s600, 3072
        $region84: #{tpu_custom_call.1} parent=75 // pred_fallthru
          _
        %s608 = sand.u32 %s33, 1
        %s609 = scalar_lea.sflag [#allocation7], %s608
        %s610 = sand.u32 %s157, 1
        %s611 = smul.addr %s610, 64
        %s612 = scalar_lea.vmem [#allocation8], %s611
        // Predicated region
        $region85: #{tpu_custom_call.1} parent=75 // pred_check
          %p613 = pneg %p170
        $region86: #{tpu_custom_call.1} parent=75 // pred_check_branch
          %615 = sbr.rel (%p613) target = $region88
        $region87: #{tpu_custom_call.1} parent=75 // pred_region
          %616 = dma.done %s609, 1024
        $region88: #{tpu_custom_call.1} parent=75 // pred_fallthru
          _
        %s617 = sand.u32 %s33, 1
        %s618 = scalar_lea.sflag [#allocation10], %s617
        %s619 = sand.u32 %s261, 1
        %s620 = smul.addr %s619, 256
        %s621 = scalar_lea.vmem [#allocation9], %s620
        // Predicated region
        $region89: #{tpu_custom_call.1} parent=75 // pred_check
          %p622 = pneg %p274
        $region90: #{tpu_custom_call.1} parent=75 // pred_check_branch
          %624 = sbr.rel (%p622) target = $region92
        $region91: #{tpu_custom_call.1} parent=75 // pred_region
          %625 = dma.done %s618, 4096
        $region92: #{tpu_custom_call.1} parent=75 // pred_fallthru
          _
        %s626 = sand.u32 %s33, 1
        %s627 = scalar_lea.sflag [#allocation10], %s626
        %s628 = sand.u32 %s313, 1
        %s629 = smul.addr %s628, 256
        %s630 = scalar_lea.vmem [#allocation11], %s629
        // Predicated region
        $region93: #{tpu_custom_call.1} parent=75 // pred_check
          %p631 = pneg %p326
        $region94: #{tpu_custom_call.1} parent=75 // pred_check_branch
          %633 = sbr.rel (%p631) target = $region96
        $region95: #{tpu_custom_call.1} parent=75 // pred_region
          %634 = dma.done %s627, 4096
        $region96: #{tpu_custom_call.1} parent=75 // pred_fallthru
          _
        %p635 = pneg %p66
        %p636 = pneg %p63
        %p637 = scmp.lt.s32.totalorder %s38, 1
        %s638 = scalar_select %p637, %s38, 1
        %s639 = scalar_lea.vmem %s1, %s638
        %p640 = pneg %p92
        %p641 = pneg %p89
        %p642 = scmp.lt.s32.totalorder %s38, 1
        %s643 = scalar_select %p642, %s38, 1
        %s644 = scalar_lea.vmem %s2, %s643
        %p645 = pneg %p118
        %p646 = pneg %p115
        %s647 = sand.u32 %s33, 1
        %s648 = scalar_lea.sflag [#allocation7], %s647
        %s649 = sand.u32 %s131, 1
        %s650 = smul.addr %s649, 192
        %s651 = scalar_lea.vmem [#allocation6], %s650
        %p652 = pneg %p144
        %p653 = pneg %p141
        %s654 = sand.u32 %s33, 1
        %s655 = scalar_lea.sflag [#allocation7], %s654
        %s656 = sand.u32 %s157, 1
        %s657 = smul.addr %s656, 64
        %s658 = scalar_lea.vmem [#allocation8], %s657
        %p659 = pneg %p170
        %p660 = pneg %p167
        %p661 = scmp.lt.s32.totalorder %s38, 1
        %s662 = scalar_select %p661, %s38, 1
        %s663 = scalar_lea.vmem %s5, %s662
        %p664 = pneg %p196
        %p665 = pneg %p193
        %p666 = scmp.lt.s32.totalorder %s38, 1
        %s667 = scalar_select %p666, %s38, 1
        %s668 = scalar_lea.vmem %s6, %s667
        %p669 = pneg %p222
        %p670 = pneg %p219
        %p671 = scmp.lt.s32.totalorder %s38, 1
        %s672 = scalar_select %p671, %s38, 1
        %s673 = scalar_lea.vmem %s7, %s672
        %p674 = pneg %p248
        %p675 = pneg %p245
        %s676 = sand.u32 %s33, 1
        %s677 = scalar_lea.sflag [#allocation10], %s676
        %s678 = sand.u32 %s261, 1
        %s679 = smul.addr %s678, 256
        %s680 = scalar_lea.vmem [#allocation9], %s679
        %p681 = pneg %p274
        %p682 = pneg %p271
        %p683 = scmp.lt.s32.totalorder %s38, 1
        %s684 = scalar_select %p683, %s38, 1
        %s685 = smul.addr %s684, 4
        %s686 = scalar_lea.vmem %s9, %s685
        %p687 = pneg %p300
        %p688 = pneg %p297
        %s689 = sand.u32 %s33, 1
        %s690 = scalar_lea.sflag [#allocation10], %s689
        %s691 = sand.u32 %s313, 1
        %s692 = smul.addr %s691, 256
        %s693 = scalar_lea.vmem [#allocation11], %s692
        %p694 = pneg %p326
        %p695 = pneg %p323
        %p696 = scmp.lt.s32.totalorder %s38, 1
        %s697 = scalar_select %p696, %s38, 1
        %s698 = scalar_lea.vmem %s11, %s697
        %p699 = pneg %p352
        %p700 = pneg %p349
        %p701 = pneg %p373
        %p702 = pneg %p370
        %p703 = pneg %p394
        %p704 = pneg %p391
        %p705 = pneg %p420
        %p706 = pneg %p417
        %s707 = smul.u32 2, %s37
        %p708 = scmp.lt.s32.totalorder %s38, 1
        %s709 = scalar_select %p708, %s38, 1
        %s710 = scalar_lea.vmem %s1, %s709
        %p711 = scmp.lt.s32.totalorder %s38, 1
        %s712 = scalar_select %p711, %s38, 1
        %s713 = scalar_lea.vmem %s2, %s712
        %p714 = scmp.lt.s32.totalorder %s38, 1
        %s715 = scalar_select %p714, %s38, 1
        %s716 = scalar_lea.vmem %s5, %s715
        %p717 = scmp.lt.s32.totalorder %s38, 1
        %s718 = scalar_select %p717, %s38, 1
        %s719 = scalar_lea.vmem %s6, %s718
        %p720 = scmp.lt.s32.totalorder %s38, 1
        %s721 = scalar_select %p720, %s38, 1
        %s722 = scalar_lea.vmem %s7, %s721
        %p723 = scmp.lt.s32.totalorder %s38, 1
        %s724 = scalar_select %p723, %s38, 1
        %s725 = smul.addr %s724, 4
        %s726 = scalar_lea.vmem %s9, %s725
        %p727 = scmp.lt.s32.totalorder %s38, 1
        %s728 = scalar_select %p727, %s38, 1
        %s729 = scalar_lea.vmem %s11, %s728
        %s730 = smul.u32 2, %s37
        %p732 = scmp.eq.s32.totalorder %s38, 0
        // Predicated region
        $region97: #{tpu_custom_call.1} parent=75 // pred_check
          %p733 = pneg %p732
        $region98: #{tpu_custom_call.1} parent=75 // pred_check_branch
          %735 = sbr.rel (%p733) target = $region100
        $region99: #{tpu_custom_call.1} parent=75 // pred_region
          %v736 = vld [vmem:[#allocation3] sm:$0xff]
          %v737 = vld [vmem:[#allocation3 + $0x8] sm:$0xff]
          %738 = vst [vmem:[#allocation2] sm:$0xff] %v736
          %739 = vst [vmem:[#allocation2 + $0x8] sm:$0xff] %v737
        $region100: #{tpu_custom_call.1} parent=75 // pred_fallthru
          _
        %v740 = vld [vmem:[#allocation2] sm:$0xff]
        %v741 = vld [vmem:[#allocation2 + $0x8] sm:$0xff]
        %v742 = vld [vmem:[%s710] sm:$0x1]
        %v743 = vld [vmem:[%s713] sm:$0x1]
        %744 = vadd.xlane.f32.xlu0 %v740
        %v745 = vpop.xlane.xlu0 %744
        %746 = vadd.xlane.f32.xlu0 %v741
        %v747 = vpop.xlane.xlu0 %746
        %v748 = vrcp.pop 128.0
        %v749 = vmul.f32 %v745, %v748
        %v750 = vmul.f32 %v747, %v748
        %v751 = vsub.f32 %v740, %v749
        %v752 = vsub.f32 %v741, %v750
        %v753 = vmul.f32 %v751, %v751
        %v754 = vmul.f32 %v752, %v752
        %755 = vadd.xlane.f32.xlu0 %v753
        %v756 = vpop.xlane.xlu0 %755
        %757 = vadd.xlane.f32.xlu0 %v754
        %v758 = vpop.xlane.xlu0 %757
        %v759 = vmul.f32 %v756, %v748
        %v760 = vmul.f32 %v758, %v748
        %v761 = vadd.f32 %v759, 1e-05
        %v762 = vadd.f32 %v760, 1e-05
        %v763 = vrsqrt.pop %v761
        %v764 = vmul.f32 %v761, %v763
        %vm765 = vcmp.eq.f32.partialorder %v761, inf
        %v766 = vsel %vm765, %v761, %v764
        %vm767 = vcmp.eq.f32.partialorder %v761, 0.0
        %v768 = vand.u32 %v761, 2147483648
        %v769 = vsel %vm767, %v768, %v766
        %v770 = vrsqrt.pop %v762
        %v771 = vmul.f32 %v762, %v770
        %vm772 = vcmp.eq.f32.partialorder %v762, inf
        %v773 = vsel %vm772, %v762, %v771
        %vm774 = vcmp.eq.f32.partialorder %v762, 0.0
        %v775 = vand.u32 %v762, 2147483648
        %v776 = vsel %vm774, %v775, %v773
        %v777 = vrcp.pop %v769
        %v778 = vmul.f32 %v751, %v777
        %v779 = vrcp.pop %v776
        %v780 = vmul.f32 %v752, %v779
        %v782 = vlaneseq
        %v783 = vshrl.u32 %v782, 7
        %v784 = vsub.s32 0, %v783
        %v785 = vrot.slane %v742, %v784
        %v787 = vmul.f32 %v778, %v785
        %v788 = vmul.f32 %v780, %v785
        %v790 = vlaneseq
        %v791 = vshrl.u32 %v790, 7
        %v792 = vsub.s32 0, %v791
        %v793 = vrot.slane %v743, %v792
        %v795 = vadd.f32 %v787, %v793
        %v796 = vadd.f32 %v788, %v793
        %v797 = vpack.c.bf16 %v796, %v795
        %v798 = vld [vmem:[%s603] sm:$0xff]
        %v799 = vld [vmem:[%s603 + $0x8] sm:$0xf]
        %v800 = vld [vmem:[%s603 + $0xc] sm:$0xff]
        %v801 = vld [vmem:[%s603 + $0x14] sm:$0xf]
        %v802 = vld [vmem:[%s603 + $0x18] sm:$0xff]
        %v803 = vld [vmem:[%s603 + $0x20] sm:$0xf]
        %v804 = vld [vmem:[%s603 + $0x24] sm:$0xff]
        %v805 = vld [vmem:[%s603 + $0x2c] sm:$0xf]
        %v806 = vld [vmem:[%s603 + $0x30] sm:$0xff]
        %v807 = vld [vmem:[%s603 + $0x38] sm:$0xf]
        %v808 = vld [vmem:[%s603 + $0x3c] sm:$0xff]
        %v809 = vld [vmem:[%s603 + $0x44] sm:$0xf]
        %v810 = vld [vmem:[%s603 + $0x48] sm:$0xff]
        %v811 = vld [vmem:[%s603 + $0x50] sm:$0xf]
        %v812 = vld [vmem:[%s603 + $0x54] sm:$0xff]
        %v813 = vld [vmem:[%s603 + $0x5c] sm:$0xf]
        %v814 = vld [vmem:[%s603 + $0x60] sm:$0xff]
        %v815 = vld [vmem:[%s603 + $0x68] sm:$0xf]
        %v816 = vld [vmem:[%s603 + $0x6c] sm:$0xff]
        %v817 = vld [vmem:[%s603 + $0x74] sm:$0xf]
        %v818 = vld [vmem:[%s603 + $0x78] sm:$0xff]
        %v819 = vld [vmem:[%s603 + $0x80] sm:$0xf]
        %v820 = vld [vmem:[%s603 + $0x84] sm:$0xff]
        %v821 = vld [vmem:[%s603 + $0x8c] sm:$0xf]
        %v822 = vld [vmem:[%s603 + $0x90] sm:$0xff]
        %v823 = vld [vmem:[%s603 + $0x98] sm:$0xf]
        %v824 = vld [vmem:[%s603 + $0x9c] sm:$0xff]
        %v825 = vld [vmem:[%s603 + $0xa4] sm:$0xf]
        %v826 = vld [vmem:[%s603 + $0xa8] sm:$0xff]
        %v827 = vld [vmem:[%s603 + $0xb0] sm:$0xf]
        %v828 = vld [vmem:[%s603 + $0xb4] sm:$0xff]
        %v829 = vld [vmem:[%s603 + $0xbc] sm:$0xf]
        %v862 = vunpack.c.l.b16 %v798
        %v863 = vunpack.c.h.b16 %v798
        %v864 = vunpack.c.l.b16 %v799
        %v865 = vunpack.c.l.b16 %v800
        %v866 = vunpack.c.h.b16 %v800
        %v867 = vunpack.c.l.b16 %v801
        %v868 = vunpack.c.l.b16 %v802
        %v869 = vunpack.c.h.b16 %v802
        %v870 = vunpack.c.l.b16 %v803
        %v871 = vunpack.c.l.b16 %v804
        %v872 = vunpack.c.h.b16 %v804
        %v873 = vunpack.c.l.b16 %v805
        %v874 = vunpack.c.l.b16 %v806
        %v875 = vunpack.c.h.b16 %v806
        %v876 = vunpack.c.l.b16 %v807
        %v877 = vunpack.c.l.b16 %v808
        %v878 = vunpack.c.h.b16 %v808
        %v879 = vunpack.c.l.b16 %v809
        %v880 = vunpack.c.l.b16 %v810
        %v881 = vunpack.c.h.b16 %v810
        %v882 = vunpack.c.l.b16 %v811
        %v883 = vunpack.c.l.b16 %v812
        %v884 = vunpack.c.h.b16 %v812
        %v885 = vunpack.c.l.b16 %v813
        %v886 = vunpack.c.l.b16 %v814
        %v887 = vunpack.c.h.b16 %v814
        %v888 = vunpack.c.l.b16 %v815
        %v889 = vunpack.c.l.b16 %v816
        %v890 = vunpack.c.h.b16 %v816
        %v891 = vunpack.c.l.b16 %v817
        %v892 = vunpack.c.l.b16 %v818
        %v893 = vunpack.c.h.b16 %v818
        %v894 = vunpack.c.l.b16 %v819
        %v895 = vunpack.c.l.b16 %v820
        %v896 = vunpack.c.h.b16 %v820
        %v897 = vunpack.c.l.b16 %v821
        %v898 = vunpack.c.l.b16 %v822
        %v899 = vunpack.c.h.b16 %v822
        %v900 = vunpack.c.l.b16 %v823
        %v901 = vunpack.c.l.b16 %v824
        %v902 = vunpack.c.h.b16 %v824
        %v903 = vunpack.c.l.b16 %v825
        %v904 = vunpack.c.l.b16 %v826
        %v905 = vunpack.c.h.b16 %v826
        %v906 = vunpack.c.l.b16 %v827
        %v907 = vunpack.c.l.b16 %v828
        %v908 = vunpack.c.h.b16 %v828
        %v909 = vunpack.c.l.b16 %v829
        %v910 = vpack.c.b16 %v865, %v862
        %v911 = vpack.c.b16 %v866, %v863
        %v912 = vpack.c.b16 %v867, %v864
        %v913 = vpack.c.b16 %v871, %v868
        %v914 = vpack.c.b16 %v872, %v869
        %v915 = vpack.c.b16 %v873, %v870
        %v916 = vpack.c.b16 %v877, %v874
        %v917 = vpack.c.b16 %v878, %v875
        %v918 = vpack.c.b16 %v879, %v876
        %v919 = vpack.c.b16 %v883, %v880
        %v920 = vpack.c.b16 %v884, %v881
        %v921 = vpack.c.b16 %v885, %v882
        %v922 = vpack.c.b16 %v889, %v886
        %v923 = vpack.c.b16 %v890, %v887
        %v924 = vpack.c.b16 %v891, %v888
        %v925 = vpack.c.b16 %v895, %v892
        %v926 = vpack.c.b16 %v896, %v893
        %v927 = vpack.c.b16 %v897, %v894
        %v928 = vpack.c.b16 %v901, %v898
        %v929 = vpack.c.b16 %v902, %v899
        %v930 = vpack.c.b16 %v903, %v900
        %v931 = vpack.c.b16 %v907, %v904
        %v932 = vpack.c.b16 %v908, %v905
        %v933 = vpack.c.b16 %v909, %v906
        %958 = vmatprep.subr.bf16.mxu0 %v911
        %959 = vmatpush1.bf16.msra.mxu0 %v910
        %960 = vmatprep.subr.bf16.mxu0 %v914
        %961 = vmatpush1.bf16.msra.mxu0 %v913
        %962 = vmatprep.subr.bf16.mxu0 %v917
        %963 = vmatpush1.bf16.msra.mxu0 %v916
        %964 = vmatprep.subr.bf16.mxu0 %v920
        %965 = vmatpush1.bf16.msra.mxu0 %v919
        %966 = vmatprep.subr.bf16.mxu0 %v923
        %967 = vmatpush1.bf16.msra.mxu0 %v922
        %968 = vmatprep.subr.bf16.mxu0 %v926
        %969 = vmatpush1.bf16.msra.mxu0 %v925
        %970 = vmatprep.subr.bf16.mxu0 %v929
        %971 = vmatpush1.bf16.msra.mxu0 %v928
        %972 = vmatprep.subr.bf16.mxu0 %v932
        %973 = vmatpush1.bf16.msra.mxu0 %v931
        %974 = vmatprep.subr.bf16.mxu0 0
        %975 = vmatpush1.bf16.msra.mxu0 0
        %976 = vmatprep.subr.bf16.mxu0 0
        %977 = vmatpush1.bf16.msra.mxu0 0
        %978 = vmatprep.subr.bf16.mxu0 0
        %979 = vmatpush1.bf16.msra.mxu0 0
        %980 = vmatprep.subr.bf16.mxu0 0
        %981 = vmatpush1.bf16.msra.mxu0 0
        %982 = vmatprep.subr.bf16.mxu0 0
        %983 = vmatpush1.bf16.msra.mxu0 0
        %984 = vmatprep.subr.bf16.mxu0 0
        %985 = vmatpush1.bf16.msra.mxu0 0
        %986 = vmatprep.subr.bf16.mxu0 0
        %987 = vmatpush1.bf16.msra.mxu0 0
        %988 = vmatprep.subr.bf16.mxu0 0
        %989 = vmatpush1.bf16.msra.mxu0 0
        %990 = vmatprep.mubr.bf16.mxu0 0
        %991 = vmatmul.mubr.bf16.gmra.mrb[0].mxu0 %v797
        %v992 = vpop.f32.mrb[0].mxu0
        %v993 = vadd.f32 0.0, %v992
        %v994 = vpop.f32.mrb[0].mxu0
        %v995 = vadd.f32 0.0, %v994
        %v996 = vpop.f32.mrb[0].mxu0
        %v997 = vadd.f32 0.0, %v996
        %v998 = vpop.f32.mrb[0].mxu0
        %v999 = vadd.f32 0.0, %v998
        %1000 = vdwg.mxu0
        %1001 = vmatprep.subr.bf16.mxu0 0
        %1002 = vmatpush1.bf16.msra.mxu0 %v912
        %1003 = vmatprep.subr.bf16.mxu0 0
        %1004 = vmatpush1.bf16.msra.mxu0 %v915
        %1005 = vmatprep.subr.bf16.mxu0 0
        %1006 = vmatpush1.bf16.msra.mxu0 %v918
        %1007 = vmatprep.subr.bf16.mxu0 0
        %1008 = vmatpush1.bf16.msra.mxu0 %v921
        %1009 = vmatprep.subr.bf16.mxu0 0
        %1010 = vmatpush1.bf16.msra.mxu0 %v924
        %1011 = vmatprep.subr.bf16.mxu0 0
        %1012 = vmatpush1.bf16.msra.mxu0 %v927
        %1013 = vmatprep.subr.bf16.mxu0 0
        %1014 = vmatpush1.bf16.msra.mxu0 %v930
        %1015 = vmatprep.subr.bf16.mxu0 0
        %1016 = vmatpush1.bf16.msra.mxu0 %v933
        %1017 = vmatprep.subr.bf16.mxu0 0
        %1018 = vmatpush1.bf16.msra.mxu0 0
        %1019 = vmatprep.subr.bf16.mxu0 0
        %1020 = vmatpush1.bf16.msra.mxu0 0
        %1021 = vmatprep.subr.bf16.mxu0 0
        %1022 = vmatpush1.bf16.msra.mxu0 0
        %1023 = vmatprep.subr.bf16.mxu0 0
        %1024 = vmatpush1.bf16.msra.mxu0 0
        %1025 = vmatprep.subr.bf16.mxu0 0
        %1026 = vmatpush1.bf16.msra.mxu0 0
        %1027 = vmatprep.subr.bf16.mxu0 0
        %1028 = vmatpush1.bf16.msra.mxu0 0
        %1029 = vmatprep.subr.bf16.mxu0 0
        %1030 = vmatpush1.bf16.msra.mxu0 0
        %1031 = vmatprep.subr.bf16.mxu0 0
        %1032 = vmatpush1.bf16.msra.mxu0 0
        %1033 = vmatprep.mubr.bf16.mxu0 0
        %1034 = vmatmul.mubr.bf16.gmra.mrb[0].mxu0 %v797
        %v1035 = vpop.f32.mrb[0].mxu0
        %v1036 = vadd.f32 0.0, %v1035
        %v1037 = vpop.f32.mrb[0].mxu0
        %v1038 = vpop.f32.mrb[0].mxu0
        %v1039 = vadd.f32 0.0, %v1038
        %v1040 = vpop.f32.mrb[0].mxu0
        %1041 = vdwg.mxu0
        %v1042 = vmul.f32 %v993, 0.17677669
        %v1043 = vmul.f32 %v997, 0.17677669
        %v1044 = vpack.c.bf16 %v1042, %v1042
        %v1045 = vpack.c.bf16 %v1043, %v1043
        %v1046 = vpack.c.bf16 %v995, %v995
        %v1047 = vpack.c.bf16 %v999, %v999
        %v1048 = vpack.c.bf16 %v1036, %v1036
        %v1049 = vpack.c.bf16 %v1039, %v1039
        %v1050 = vlaneseq
        %v1051 = vshrl.u32 %v1050, 7
        %v1052 = vlaneseq
        %v1053 = vand.u32 %v1052, 127
        %vm1054 = vcmp.ge.s32.totalorder %v1051, %v1053
        %vm1055 = vcmask 261120
        %v1057 = vsel %vm1055, %v1044, 0
        %v1060 = vsel %vm1055, %v1046, 0
        %1062 = vmatprep.subr.bf16.mxu0 0
        %1063 = vmatpush1.bf16.xpose.msra.mxu0 %v1060
        %1064 = vmatprep.subr.bf16.mxu0 0
        %1065 = vmatpush1.bf16.xpose.msra.mxu0 0
        %1066 = vmatprep.subr.bf16.mxu0 0
        %1067 = vmatpush1.bf16.xpose.msra.mxu0 0
        %1068 = vmatprep.subr.bf16.mxu0 0
        %1069 = vmatpush1.bf16.xpose.msra.mxu0 0
        %1070 = vmatprep.subr.bf16.mxu0 0
        %1071 = vmatpush1.bf16.xpose.msra.mxu0 0
        %1072 = vmatprep.subr.bf16.mxu0 0
        %1073 = vmatpush1.bf16.xpose.msra.mxu0 0
        %1074 = vmatprep.subr.bf16.mxu0 0
        %1075 = vmatpush1.bf16.xpose.msra.mxu0 0
        %1076 = vmatprep.subr.bf16.mxu0 0
        %1077 = vmatpush1.bf16.xpose.msra.mxu0 0
        %1078 = vmatprep.subr.bf16.mxu0 0
        %1079 = vmatpush1.bf16.xpose.msra.mxu0 0
        %1080 = vmatprep.subr.bf16.mxu0 0
        %1081 = vmatpush1.bf16.xpose.msra.mxu0 0
        %1082 = vmatprep.subr.bf16.mxu0 0
        %1083 = vmatpush1.bf16.xpose.msra.mxu0 0
        %1084 = vmatprep.subr.bf16.mxu0 0
        %1085 = vmatpush1.bf16.xpose.msra.mxu0 0
        %1086 = vmatprep.subr.bf16.mxu0 0
        %1087 = vmatpush1.bf16.xpose.msra.mxu0 0
        %1088 = vmatprep.subr.bf16.mxu0 0
        %1089 = vmatpush1.bf16.xpose.msra.mxu0 0
        %1090 = vmatprep.subr.bf16.mxu0 0
        %1091 = vmatpush1.bf16.xpose.msra.mxu0 0
        %1092 = vmatprep.subr.bf16.mxu0 0
        %1093 = vmatpush1.bf16.xpose.msra.mxu0 0
        %1094 = vmatprep.mubr.bf16.mxu0 0
        %1095 = vmatmul.mubr.bf16.gmra.mrb[0].mxu0 %v1057
        %v1096 = vpop.f32.mrb[0].mxu0
        %v1097 = vadd.f32 0.0, %v1096
        %v1098 = vpop.f32.mrb[0].mxu0
        %v1099 = vpop.f32.mrb[0].mxu0
        %v1100 = vpop.f32.mrb[0].mxu0
        %1101 = vdwg.mxu0
        %v1103 = vsel %vm1055, %v1045, 0
        %v1106 = vsel %vm1055, %v1047, 0
        %1108 = vmatprep.subr.bf16.mxu0 0
        %1109 = vmatpush1.bf16.xpose.msra.mxu0 %v1106
        %1110 = vmatprep.subr.bf16.mxu0 0
        %1111 = vmatpush1.bf16.xpose.msra.mxu0 0
        %1112 = vmatprep.subr.bf16.mxu0 0
        %1113 = vmatpush1.bf16.xpose.msra.mxu0 0
        %1114 = vmatprep.subr.bf16.mxu0 0
        %1115 = vmatpush1.bf16.xpose.msra.mxu0 0
        %1116 = vmatprep.subr.bf16.mxu0 0
        %1117 = vmatpush1.bf16.xpose.msra.mxu0 0
        %1118 = vmatprep.subr.bf16.mxu0 0
        %1119 = vmatpush1.bf16.xpose.msra.mxu0 0
        %1120 = vmatprep.subr.bf16.mxu0 0
        %1121 = vmatpush1.bf16.xpose.msra.mxu0 0
        %1122 = vmatprep.subr.bf16.mxu0 0
        %1123 = vmatpush1.bf16.xpose.msra.mxu0 0
        %1124 = vmatprep.subr.bf16.mxu0 0
        %1125 = vmatpush1.bf16.xpose.msra.mxu0 0
        %1126 = vmatprep.subr.bf16.mxu0 0
        %1127 = vmatpush1.bf16.xpose.msra.mxu0 0
        %1128 = vmatprep.subr.bf16.mxu0 0
        %1129 = vmatpush1.bf16.xpose.msra.mxu0 0
        %1130 = vmatprep.subr.bf16.mxu0 0
        %1131 = vmatpush1.bf16.xpose.msra.mxu0 0
        %1132 = vmatprep.subr.bf16.mxu0 0
        %1133 = vmatpush1.bf16.xpose.msra.mxu0 0
        %1134 = vmatprep.subr.bf16.mxu0 0
        %1135 = vmatpush1.bf16.xpose.msra.mxu0 0
        %1136 = vmatprep.subr.bf16.mxu0 0
        %1137 = vmatpush1.bf16.xpose.msra.mxu0 0
        %1138 = vmatprep.subr.bf16.mxu0 0
        %1139 = vmatpush1.bf16.xpose.msra.mxu0 0
        %1140 = vmatprep.mubr.bf16.mxu0 0
        %1141 = vmatmul.mubr.bf16.gmra.mrb[0].mxu0 %v1103
        %v1142 = vpop.f32.mrb[0].mxu0
        %v1143 = vadd.f32 0.0, %v1142
        %v1144 = vpop.f32.mrb[0].mxu0
        %v1145 = vpop.f32.mrb[0].mxu0
        %v1146 = vpop.f32.mrb[0].mxu0
        %1147 = vdwg.mxu0
        %v1148 = vsel %vm1054, 1, 0
        %vm1149 = vcmp.eq.s32.totalorder %v1148, 1
        %v1150 = vsel %vm1149, %v1097, -1e+30
        %v1151 = vsel %vm1149, %v1143, -1e+30
        %vm1152 = vcmask 64512
        %v1153 = vsel %vm1152, %v1150, -inf
        %1154 = vmax.xlane.f32.xlu0 %v1153
        %v1155 = vpop.xlane.xlu0 %1154
        %v1156 = vsel %vm1152, %v1151, -inf
        %1157 = vmax.xlane.f32.xlu0 %v1156
        %v1158 = vpop.xlane.xlu0 %1157
        %v1159 = vsub.f32 %v1150, %v1155
        %v1160 = vsub.f32 %v1151, %v1158
        %v1161 = vmul.f32 %v1159, 1.442695
        %v1162 = vpow.pop %v1161
        %v1163 = vmul.f32 %v1160, 1.442695
        %v1164 = vpow.pop %v1163
        %v1165 = vsel %vm1152, %v1162, 0.0
        %1166 = vadd.xlane.f32.xlu0 %v1165
        %v1167 = vpop.xlane.xlu0 %1166
        %v1168 = vsel %vm1152, %v1164, 0.0
        %1169 = vadd.xlane.f32.xlu0 %v1168
        %v1170 = vpop.xlane.xlu0 %1169
        %v1171 = vrcp.pop %v1167
        %v1172 = vrcp.pop %v1170
        %v1173 = vmul.f32 %v1162, %v1171
        %v1174 = vmul.f32 %v1164, %v1172
        %v1175 = vpack.c.bf16 %v1173, %v1173
        %v1176 = vpack.c.bf16 %v1174, %v1174
        %v1178 = vsel %vm1152, %v1175, 0
        %vm1180 = vcmask 1043456
        %v1182 = vsel %vm1180, %v1048, 0
        %1184 = vmatprep.subr.bf16.mxu0 0
        %1185 = vmatpush1.bf16.msra.mxu0 %v1182
        %1186 = vmatprep.subr.bf16.mxu0 0
        %1187 = vmatpush1.bf16.msra.mxu0 0
        %1188 = vmatprep.subr.bf16.mxu0 0
        %1189 = vmatpush1.bf16.msra.mxu0 0
        %1190 = vmatprep.subr.bf16.mxu0 0
        %1191 = vmatpush1.bf16.msra.mxu0 0
        %1192 = vmatprep.subr.bf16.mxu0 0
        %1193 = vmatpush1.bf16.msra.mxu0 0
        %1194 = vmatprep.subr.bf16.mxu0 0
        %1195 = vmatpush1.bf16.msra.mxu0 0
        %1196 = vmatprep.subr.bf16.mxu0 0
        %1197 = vmatpush1.bf16.msra.mxu0 0
        %1198 = vmatprep.subr.bf16.mxu0 0
        %1199 = vmatpush1.bf16.msra.mxu0 0
        %1200 = vmatprep.subr.bf16.mxu0 0
        %1201 = vmatpush1.bf16.msra.mxu0 0
        %1202 = vmatprep.subr.bf16.mxu0 0
        %1203 = vmatpush1.bf16.msra.mxu0 0
        %1204 = vmatprep.subr.bf16.mxu0 0
        %1205 = vmatpush1.bf16.msra.mxu0 0
        %1206 = vmatprep.subr.bf16.mxu0 0
        %1207 = vmatpush1.bf16.msra.mxu0 0
        %1208 = vmatprep.subr.bf16.mxu0 0
        %1209 = vmatpush1.bf16.msra.mxu0 0
        %1210 = vmatprep.subr.bf16.mxu0 0
        %1211 = vmatpush1.bf16.msra.mxu0 0
        %1212 = vmatprep.subr.bf16.mxu0 0
        %1213 = vmatpush1.bf16.msra.mxu0 0
        %1214 = vmatprep.subr.bf16.mxu0 0
        %1215 = vmatpush1.bf16.msra.mxu0 0
        %1216 = vmatprep.mubr.bf16.mxu0 0
        %1217 = vmatmul.mubr.bf16.gmra.mrb[0].mxu0 %v1178
        %v1218 = vpop.f32.mrb[0].mxu0
        %v1219 = vadd.f32 0.0, %v1218
        %v1220 = vpop.f32.mrb[0].mxu0
        %v1221 = vpop.f32.mrb[0].mxu0
        %v1222 = vpop.f32.mrb[0].mxu0
        %1223 = vdwg.mxu0
        %v1225 = vsel %vm1152, %v1176, 0
        %v1228 = vsel %vm1180, %v1049, 0
        %1230 = vmatprep.subr.bf16.mxu0 0
        %1231 = vmatpush1.bf16.msra.mxu0 %v1228
        %1232 = vmatprep.subr.bf16.mxu0 0
        %1233 = vmatpush1.bf16.msra.mxu0 0
        %1234 = vmatprep.subr.bf16.mxu0 0
        %1235 = vmatpush1.bf16.msra.mxu0 0
        %1236 = vmatprep.subr.bf16.mxu0 0
        %1237 = vmatpush1.bf16.msra.mxu0 0
        %1238 = vmatprep.subr.bf16.mxu0 0
        %1239 = vmatpush1.bf16.msra.mxu0 0
        %1240 = vmatprep.subr.bf16.mxu0 0
        %1241 = vmatpush1.bf16.msra.mxu0 0
        %1242 = vmatprep.subr.bf16.mxu0 0
        %1243 = vmatpush1.bf16.msra.mxu0 0
        %1244 = vmatprep.subr.bf16.mxu0 0
        %1245 = vmatpush1.bf16.msra.mxu0 0
        %1246 = vmatprep.subr.bf16.mxu0 0
        %1247 = vmatpush1.bf16.msra.mxu0 0
        %1248 = vmatprep.subr.bf16.mxu0 0
        %1249 = vmatpush1.bf16.msra.mxu0 0
        %1250 = vmatprep.subr.bf16.mxu0 0
        %1251 = vmatpush1.bf16.msra.mxu0 0
        %1252 = vmatprep.subr.bf16.mxu0 0
        %1253 = vmatpush1.bf16.msra.mxu0 0
        %1254 = vmatprep.subr.bf16.mxu0 0
        %1255 = vmatpush1.bf16.msra.mxu0 0
        %1256 = vmatprep.subr.bf16.mxu0 0
        %1257 = vmatpush1.bf16.msra.mxu0 0
        %1258 = vmatprep.subr.bf16.mxu0 0
        %1259 = vmatpush1.bf16.msra.mxu0 0
        %1260 = vmatprep.subr.bf16.mxu0 0
        %1261 = vmatpush1.bf16.msra.mxu0 0
        %1262 = vmatprep.mubr.bf16.mxu0 0
        %1263 = vmatmul.mubr.bf16.gmra.mrb[0].mxu0 %v1225
        %v1264 = vpop.f32.mrb[0].mxu0
        %v1265 = vadd.f32 0.0, %v1264
        %v1266 = vpop.f32.mrb[0].mxu0
        %v1267 = vpop.f32.mrb[0].mxu0
        %v1268 = vpop.f32.mrb[0].mxu0
        %1269 = vdwg.mxu0
        %1271 = vrot.lane.b32.xlu0 %v1044, 96
        %v1272 = vpop.permute.xlu0 %1271
        %1274 = vrot.lane.b32.xlu0 %v1046, 96
        %v1275 = vpop.permute.xlu0 %1274
        %v1277 = vsel %vm1055, %v1272, 0
        %v1280 = vsel %vm1055, %v1275, 0
        %1282 = vmatprep.subr.bf16.mxu0 0
        %1283 = vmatpush1.bf16.xpose.msra.mxu0 %v1280
        %1284 = vmatprep.subr.bf16.mxu0 0
        %1285 = vmatpush1.bf16.xpose.msra.mxu0 0
        %1286 = vmatprep.subr.bf16.mxu0 0
        %1287 = vmatpush1.bf16.xpose.msra.mxu0 0
        %1288 = vmatprep.subr.bf16.mxu0 0
        %1289 = vmatpush1.bf16.xpose.msra.mxu0 0
        %1290 = vmatprep.subr.bf16.mxu0 0
        %1291 = vmatpush1.bf16.xpose.msra.mxu0 0
        %1292 = vmatprep.subr.bf16.mxu0 0
        %1293 = vmatpush1.bf16.xpose.msra.mxu0 0
        %1294 = vmatprep.subr.bf16.mxu0 0
        %1295 = vmatpush1.bf16.xpose.msra.mxu0 0
        %1296 = vmatprep.subr.bf16.mxu0 0
        %1297 = vmatpush1.bf16.xpose.msra.mxu0 0
        %1298 = vmatprep.subr.bf16.mxu0 0
        %1299 = vmatpush1.bf16.xpose.msra.mxu0 0
        %1300 = vmatprep.subr.bf16.mxu0 0
        %1301 = vmatpush1.bf16.xpose.msra.mxu0 0
        %1302 = vmatprep.subr.bf16.mxu0 0
        %1303 = vmatpush1.bf16.xpose.msra.mxu0 0
        %1304 = vmatprep.subr.bf16.mxu0 0
        %1305 = vmatpush1.bf16.xpose.msra.mxu0 0
        %1306 = vmatprep.subr.bf16.mxu0 0
        %1307 = vmatpush1.bf16.xpose.msra.mxu0 0
        %1308 = vmatprep.subr.bf16.mxu0 0
        %1309 = vmatpush1.bf16.xpose.msra.mxu0 0
        %1310 = vmatprep.subr.bf16.mxu0 0
        %1311 = vmatpush1.bf16.xpose.msra.mxu0 0
        %1312 = vmatprep.subr.bf16.mxu0 0
        %1313 = vmatpush1.bf16.xpose.msra.mxu0 0
        %1314 = vmatprep.mubr.bf16.mxu0 0
        %1315 = vmatmul.mubr.bf16.gmra.mrb[0].mxu0 %v1277
        %v1316 = vpop.f32.mrb[0].mxu0
        %v1317 = vadd.f32 0.0, %v1316
        %v1318 = vpop.f32.mrb[0].mxu0
        %v1319 = vpop.f32.mrb[0].mxu0
        %v1320 = vpop.f32.mrb[0].mxu0
        %1321 = vdwg.mxu0
        %1323 = vrot.lane.b32.xlu0 %v1045, 96
        %v1324 = vpop.permute.xlu0 %1323
        %1326 = vrot.lane.b32.xlu0 %v1047, 96
        %v1327 = vpop.permute.xlu0 %1326
        %v1329 = vsel %vm1055, %v1324, 0
        %v1332 = vsel %vm1055, %v1327, 0
        %1334 = vmatprep.subr.bf16.mxu0 0
        %1335 = vmatpush1.bf16.xpose.msra.mxu0 %v1332
        %1336 = vmatprep.subr.bf16.mxu0 0
        %1337 = vmatpush1.bf16.xpose.msra.mxu0 0
        %1338 = vmatprep.subr.bf16.mxu0 0
        %1339 = vmatpush1.bf16.xpose.msra.mxu0 0
        %1340 = vmatprep.subr.bf16.mxu0 0
        %1341 = vmatpush1.bf16.xpose.msra.mxu0 0
        %1342 = vmatprep.subr.bf16.mxu0 0
        %1343 = vmatpush1.bf16.xpose.msra.mxu0 0
        %1344 = vmatprep.subr.bf16.mxu0 0
        %1345 = vmatpush1.bf16.xpose.msra.mxu0 0
        %1346 = vmatprep.subr.bf16.mxu0 0
        %1347 = vmatpush1.bf16.xpose.msra.mxu0 0
        %1348 = vmatprep.subr.bf16.mxu0 0
        %1349 = vmatpush1.bf16.xpose.msra.mxu0 0
        %1350 = vmatprep.subr.bf16.mxu0 0
        %1351 = vmatpush1.bf16.xpose.msra.mxu0 0
        %1352 = vmatprep.subr.bf16.mxu0 0
        %1353 = vmatpush1.bf16.xpose.msra.mxu0 0
        %1354 = vmatprep.subr.bf16.mxu0 0
        %1355 = vmatpush1.bf16.xpose.msra.mxu0 0
        %1356 = vmatprep.subr.bf16.mxu0 0
        %1357 = vmatpush1.bf16.xpose.msra.mxu0 0
        %1358 = vmatprep.subr.bf16.mxu0 0
        %1359 = vmatpush1.bf16.xpose.msra.mxu0 0
        %1360 = vmatprep.subr.bf16.mxu0 0
        %1361 = vmatpush1.bf16.xpose.msra.mxu0 0
        %1362 = vmatprep.subr.bf16.mxu0 0
        %1363 = vmatpush1.bf16.xpose.msra.mxu0 0
        %1364 = vmatprep.subr.bf16.mxu0 0
        %1365 = vmatpush1.bf16.xpose.msra.mxu0 0
        %1366 = vmatprep.mubr.bf16.mxu0 0
        %1367 = vmatmul.mubr.bf16.gmra.mrb[0].mxu0 %v1329
        %v1368 = vpop.f32.mrb[0].mxu0
        %v1369 = vadd.f32 0.0, %v1368
        %v1370 = vpop.f32.mrb[0].mxu0
        %v1371 = vpop.f32.mrb[0].mxu0
        %v1372 = vpop.f32.mrb[0].mxu0
        %1373 = vdwg.mxu0
        %v1374 = vsel %vm1149, %v1317, -1e+30
        %v1375 = vsel %vm1149, %v1369, -1e+30
        %v1376 = vsel %vm1152, %v1374, -inf
        %1377 = vmax.xlane.f32.xlu0 %v1376
        %v1378 = vpop.xlane.xlu0 %1377
        %v1379 = vsel %vm1152, %v1375, -inf
        %1380 = vmax.xlane.f32.xlu0 %v1379
        %v1381 = vpop.xlane.xlu0 %1380
        %v1382 = vsub.f32 %v1374, %v1378
        %v1383 = vsub.f32 %v1375, %v1381
        %v1384 = vmul.f32 %v1382, 1.442695
        %v1385 = vpow.pop %v1384
        %v1386 = vmul.f32 %v1383, 1.442695
        %v1387 = vpow.pop %v1386
        %v1388 = vsel %vm1152, %v1385, 0.0
        %1389 = vadd.xlane.f32.xlu0 %v1388
        %v1390 = vpop.xlane.xlu0 %1389
        %v1391 = vsel %vm1152, %v1387, 0.0
        %1392 = vadd.xlane.f32.xlu0 %v1391
        %v1393 = vpop.xlane.xlu0 %1392
        %v1394 = vrcp.pop %v1390
        %v1395 = vrcp.pop %v1393
        %v1396 = vmul.f32 %v1385, %v1394
        %v1397 = vmul.f32 %v1387, %v1395
        %v1398 = vpack.c.bf16 %v1396, %v1396
        %v1399 = vpack.c.bf16 %v1397, %v1397
        %1401 = vrot.lane.b32.xlu0 %v1048, 96
        %v1402 = vpop.permute.xlu0 %1401
        %v1404 = vsel %vm1152, %v1398, 0
        %v1407 = vsel %vm1180, %v1402, 0
        %1409 = vmatprep.subr.bf16.mxu0 0
        %1410 = vmatpush1.bf16.msra.mxu0 %v1407
        %1411 = vmatprep.subr.bf16.mxu0 0
        %1412 = vmatpush1.bf16.msra.mxu0 0
        %1413 = vmatprep.subr.bf16.mxu0 0
        %1414 = vmatpush1.bf16.msra.mxu0 0
        %1415 = vmatprep.subr.bf16.mxu0 0
        %1416 = vmatpush1.bf16.msra.mxu0 0
        %1417 = vmatprep.subr.bf16.mxu0 0
        %1418 = vmatpush1.bf16.msra.mxu0 0
        %1419 = vmatprep.subr.bf16.mxu0 0
        %1420 = vmatpush1.bf16.msra.mxu0 0
        %1421 = vmatprep.subr.bf16.mxu0 0
        %1422 = vmatpush1.bf16.msra.mxu0 0
        %1423 = vmatprep.subr.bf16.mxu0 0
        %1424 = vmatpush1.bf16.msra.mxu0 0
        %1425 = vmatprep.subr.bf16.mxu0 0
        %1426 = vmatpush1.bf16.msra.mxu0 0
        %1427 = vmatprep.subr.bf16.mxu0 0
        %1428 = vmatpush1.bf16.msra.mxu0 0
        %1429 = vmatprep.subr.bf16.mxu0 0
        %1430 = vmatpush1.bf16.msra.mxu0 0
        %1431 = vmatprep.subr.bf16.mxu0 0
        %1432 = vmatpush1.bf16.msra.mxu0 0
        %1433 = vmatprep.subr.bf16.mxu0 0
        %1434 = vmatpush1.bf16.msra.mxu0 0
        %1435 = vmatprep.subr.bf16.mxu0 0
        %1436 = vmatpush1.bf16.msra.mxu0 0
        %1437 = vmatprep.subr.bf16.mxu0 0
        %1438 = vmatpush1.bf16.msra.mxu0 0
        %1439 = vmatprep.subr.bf16.mxu0 0
        %1440 = vmatpush1.bf16.msra.mxu0 0
        %1441 = vmatprep.mubr.bf16.mxu0 0
        %1442 = vmatmul.mubr.bf16.gmra.mrb[0].mxu0 %v1404
        %v1443 = vpop.f32.mrb[0].mxu0
        %v1444 = vadd.f32 0.0, %v1443
        %v1445 = vpop.f32.mrb[0].mxu0
        %v1446 = vpop.f32.mrb[0].mxu0
        %v1447 = vpop.f32.mrb[0].mxu0
        %1448 = vdwg.mxu0
        %1450 = vrot.lane.b32.xlu0 %v1049, 96
        %v1451 = vpop.permute.xlu0 %1450
        %v1453 = vsel %vm1152, %v1399, 0
        %v1456 = vsel %vm1180, %v1451, 0
        %1458 = vmatprep.subr.bf16.mxu0 0
        %1459 = vmatpush1.bf16.msra.mxu0 %v1456
        %1460 = vmatprep.subr.bf16.mxu0 0
        %1461 = vmatpush1.bf16.msra.mxu0 0
        %1462 = vmatprep.subr.bf16.mxu0 0
        %1463 = vmatpush1.bf16.msra.mxu0 0
        %1464 = vmatprep.subr.bf16.mxu0 0
        %1465 = vmatpush1.bf16.msra.mxu0 0
        %1466 = vmatprep.subr.bf16.mxu0 0
        %1467 = vmatpush1.bf16.msra.mxu0 0
        %1468 = vmatprep.subr.bf16.mxu0 0
        %1469 = vmatpush1.bf16.msra.mxu0 0
        %1470 = vmatprep.subr.bf16.mxu0 0
        %1471 = vmatpush1.bf16.msra.mxu0 0
        %1472 = vmatprep.subr.bf16.mxu0 0
        %1473 = vmatpush1.bf16.msra.mxu0 0
        %1474 = vmatprep.subr.bf16.mxu0 0
        %1475 = vmatpush1.bf16.msra.mxu0 0
        %1476 = vmatprep.subr.bf16.mxu0 0
        %1477 = vmatpush1.bf16.msra.mxu0 0
        %1478 = vmatprep.subr.bf16.mxu0 0
        %1479 = vmatpush1.bf16.msra.mxu0 0
        %1480 = vmatprep.subr.bf16.mxu0 0
        %1481 = vmatpush1.bf16.msra.mxu0 0
        %1482 = vmatprep.subr.bf16.mxu0 0
        %1483 = vmatpush1.bf16.msra.mxu0 0
        %1484 = vmatprep.subr.bf16.mxu0 0
        %1485 = vmatpush1.bf16.msra.mxu0 0
        %1486 = vmatprep.subr.bf16.mxu0 0
        %1487 = vmatpush1.bf16.msra.mxu0 0
        %1488 = vmatprep.subr.bf16.mxu0 0
        %1489 = vmatpush1.bf16.msra.mxu0 0
        %1490 = vmatprep.mubr.bf16.mxu0 0
        %1491 = vmatmul.mubr.bf16.gmra.mrb[0].mxu0 %v1453
        %v1492 = vpop.f32.mrb[0].mxu0
        %v1493 = vadd.f32 0.0, %v1492
        %v1494 = vpop.f32.mrb[0].mxu0
        %v1495 = vpop.f32.mrb[0].mxu0
        %v1496 = vpop.f32.mrb[0].mxu0
        %1497 = vdwg.mxu0
        %1498 = vrot.lane.b32.xlu0 %v1044, 64
        %v1499 = vpop.permute.xlu0 %1498
        %1500 = vrot.lane.b32.xlu0 %v1046, 64
        %v1501 = vpop.permute.xlu0 %1500
        %v1503 = vsel %vm1055, %v1499, 0
        %v1506 = vsel %vm1055, %v1501, 0
        %1508 = vmatprep.subr.bf16.mxu0 0
        %1509 = vmatpush1.bf16.xpose.msra.mxu0 %v1506
        %1510 = vmatprep.subr.bf16.mxu0 0
        %1511 = vmatpush1.bf16.xpose.msra.mxu0 0
        %1512 = vmatprep.subr.bf16.mxu0 0
        %1513 = vmatpush1.bf16.xpose.msra.mxu0 0
        %1514 = vmatprep.subr.bf16.mxu0 0
        %1515 = vmatpush1.bf16.xpose.msra.mxu0 0
        %1516 = vmatprep.subr.bf16.mxu0 0
        %1517 = vmatpush1.bf16.xpose.msra.mxu0 0
        %1518 = vmatprep.subr.bf16.mxu0 0
        %1519 = vmatpush1.bf16.xpose.msra.mxu0 0
        %1520 = vmatprep.subr.bf16.mxu0 0
        %1521 = vmatpush1.bf16.xpose.msra.mxu0 0
        %1522 = vmatprep.subr.bf16.mxu0 0
        %1523 = vmatpush1.bf16.xpose.msra.mxu0 0
        %1524 = vmatprep.subr.bf16.mxu0 0
        %1525 = vmatpush1.bf16.xpose.msra.mxu0 0
        %1526 = vmatprep.subr.bf16.mxu0 0
        %1527 = vmatpush1.bf16.xpose.msra.mxu0 0
        %1528 = vmatprep.subr.bf16.mxu0 0
        %1529 = vmatpush1.bf16.xpose.msra.mxu0 0
        %1530 = vmatprep.subr.bf16.mxu0 0
        %1531 = vmatpush1.bf16.xpose.msra.mxu0 0
        %1532 = vmatprep.subr.bf16.mxu0 0
        %1533 = vmatpush1.bf16.xpose.msra.mxu0 0
        %1534 = vmatprep.subr.bf16.mxu0 0
        %1535 = vmatpush1.bf16.xpose.msra.mxu0 0
        %1536 = vmatprep.subr.bf16.mxu0 0
        %1537 = vmatpush1.bf16.xpose.msra.mxu0 0
        %1538 = vmatprep.subr.bf16.mxu0 0
        %1539 = vmatpush1.bf16.xpose.msra.mxu0 0
        %1540 = vmatprep.mubr.bf16.mxu0 0
        %1541 = vmatmul.mubr.bf16.gmra.mrb[0].mxu0 %v1503
        %v1542 = vpop.f32.mrb[0].mxu0
        %v1543 = vadd.f32 0.0, %v1542
        %v1544 = vpop.f32.mrb[0].mxu0
        %v1545 = vpop.f32.mrb[0].mxu0
        %v1546 = vpop.f32.mrb[0].mxu0
        %1547 = vdwg.mxu0
        %1548 = vrot.lane.b32.xlu0 %v1045, 64
        %v1549 = vpop.permute.xlu0 %1548
        %1550 = vrot.lane.b32.xlu0 %v1047, 64
        %v1551 = vpop.permute.xlu0 %1550
        %v1553 = vsel %vm1055, %v1549, 0
        %v1556 = vsel %vm1055, %v1551, 0
        %1558 = vmatprep.subr.bf16.mxu0 0
        %1559 = vmatpush1.bf16.xpose.msra.mxu0 %v1556
        %1560 = vmatprep.subr.bf16.mxu0 0
        %1561 = vmatpush1.bf16.xpose.msra.mxu0 0
        %1562 = vmatprep.subr.bf16.mxu0 0
        %1563 = vmatpush1.bf16.xpose.msra.mxu0 0
        %1564 = vmatprep.subr.bf16.mxu0 0
        %1565 = vmatpush1.bf16.xpose.msra.mxu0 0
        %1566 = vmatprep.subr.bf16.mxu0 0
        %1567 = vmatpush1.bf16.xpose.msra.mxu0 0
        %1568 = vmatprep.subr.bf16.mxu0 0
        %1569 = vmatpush1.bf16.xpose.msra.mxu0 0
        %1570 = vmatprep.subr.bf16.mxu0 0
        %1571 = vmatpush1.bf16.xpose.msra.mxu0 0
        %1572 = vmatprep.subr.bf16.mxu0 0
        %1573 = vmatpush1.bf16.xpose.msra.mxu0 0
        %1574 = vmatprep.subr.bf16.mxu0 0
        %1575 = vmatpush1.bf16.xpose.msra.mxu0 0
        %1576 = vmatprep.subr.bf16.mxu0 0
        %1577 = vmatpush1.bf16.xpose.msra.mxu0 0
        %1578 = vmatprep.subr.bf16.mxu0 0
        %1579 = vmatpush1.bf16.xpose.msra.mxu0 0
        %1580 = vmatprep.subr.bf16.mxu0 0
        %1581 = vmatpush1.bf16.xpose.msra.mxu0 0
        %1582 = vmatprep.subr.bf16.mxu0 0
        %1583 = vmatpush1.bf16.xpose.msra.mxu0 0
        %1584 = vmatprep.subr.bf16.mxu0 0
        %1585 = vmatpush1.bf16.xpose.msra.mxu0 0
        %1586 = vmatprep.subr.bf16.mxu0 0
        %1587 = vmatpush1.bf16.xpose.msra.mxu0 0
        %1588 = vmatprep.subr.bf16.mxu0 0
        %1589 = vmatpush1.bf16.xpose.msra.mxu0 0
        %1590 = vmatprep.mubr.bf16.mxu0 0
        %1591 = vmatmul.mubr.bf16.gmra.mrb[0].mxu0 %v1553
        %v1592 = vpop.f32.mrb[0].mxu0
        %v1593 = vadd.f32 0.0, %v1592
        %v1594 = vpop.f32.mrb[0].mxu0
        %v1595 = vpop.f32.mrb[0].mxu0
        %v1596 = vpop.f32.mrb[0].mxu0
        %1597 = vdwg.mxu0
        %v1598 = vsel %vm1149, %v1543, -1e+30
        %v1599 = vsel %vm1149, %v1593, -1e+30
        %v1600 = vsel %vm1152, %v1598, -inf
        %1601 = vmax.xlane.f32.xlu0 %v1600
        %v1602 = vpop.xlane.xlu0 %1601
        %v1603 = vsel %vm1152, %v1599, -inf
        %1604 = vmax.xlane.f32.xlu0 %v1603
        %v1605 = vpop.xlane.xlu0 %1604
        %v1606 = vsub.f32 %v1598, %v1602
        %v1607 = vsub.f32 %v1599, %v1605
        %v1608 = vmul.f32 %v1606, 1.442695
        %v1609 = vpow.pop %v1608
        %v1610 = vmul.f32 %v1607, 1.442695
        %v1611 = vpow.pop %v1610
        %v1612 = vsel %vm1152, %v1609, 0.0
        %1613 = vadd.xlane.f32.xlu0 %v1612
        %v1614 = vpop.xlane.xlu0 %1613
        %v1615 = vsel %vm1152, %v1611, 0.0
        %1616 = vadd.xlane.f32.xlu0 %v1615
        %v1617 = vpop.xlane.xlu0 %1616
        %v1618 = vrcp.pop %v1614
        %v1619 = vrcp.pop %v1617
        %v1620 = vmul.f32 %v1609, %v1618
        %v1621 = vmul.f32 %v1611, %v1619
        %v1622 = vpack.c.bf16 %v1620, %v1620
        %v1623 = vpack.c.bf16 %v1621, %v1621
        %1624 = vrot.lane.b32.xlu0 %v1048, 64
        %v1625 = vpop.permute.xlu0 %1624
        %v1627 = vsel %vm1152, %v1622, 0
        %v1630 = vsel %vm1180, %v1625, 0
        %1632 = vmatprep.subr.bf16.mxu0 0
        %1633 = vmatpush1.bf16.msra.mxu0 %v1630
        %1634 = vmatprep.subr.bf16.mxu0 0
        %1635 = vmatpush1.bf16.msra.mxu0 0
        %1636 = vmatprep.subr.bf16.mxu0 0
        %1637 = vmatpush1.bf16.msra.mxu0 0
        %1638 = vmatprep.subr.bf16.mxu0 0
        %1639 = vmatpush1.bf16.msra.mxu0 0
        %1640 = vmatprep.subr.bf16.mxu0 0
        %1641 = vmatpush1.bf16.msra.mxu0 0
        %1642 = vmatprep.subr.bf16.mxu0 0
        %1643 = vmatpush1.bf16.msra.mxu0 0
        %1644 = vmatprep.subr.bf16.mxu0 0
        %1645 = vmatpush1.bf16.msra.mxu0 0
        %1646 = vmatprep.subr.bf16.mxu0 0
        %1647 = vmatpush1.bf16.msra.mxu0 0
        %1648 = vmatprep.subr.bf16.mxu0 0
        %1649 = vmatpush1.bf16.msra.mxu0 0
        %1650 = vmatprep.subr.bf16.mxu0 0
        %1651 = vmatpush1.bf16.msra.mxu0 0
        %1652 = vmatprep.subr.bf16.mxu0 0
        %1653 = vmatpush1.bf16.msra.mxu0 0
        %1654 = vmatprep.subr.bf16.mxu0 0
        %1655 = vmatpush1.bf16.msra.mxu0 0
        %1656 = vmatprep.subr.bf16.mxu0 0
        %1657 = vmatpush1.bf16.msra.mxu0 0
        %1658 = vmatprep.subr.bf16.mxu0 0
        %1659 = vmatpush1.bf16.msra.mxu0 0
        %1660 = vmatprep.subr.bf16.mxu0 0
        %1661 = vmatpush1.bf16.msra.mxu0 0
        %1662 = vmatprep.subr.bf16.mxu0 0
        %1663 = vmatpush1.bf16.msra.mxu0 0
        %1664 = vmatprep.mubr.bf16.mxu0 0
        %1665 = vmatmul.mubr.bf16.gmra.mrb[0].mxu0 %v1627
        %v1666 = vpop.f32.mrb[0].mxu0
        %v1667 = vadd.f32 0.0, %v1666
        %v1668 = vpop.f32.mrb[0].mxu0
        %v1669 = vpop.f32.mrb[0].mxu0
        %v1670 = vpop.f32.mrb[0].mxu0
        %1671 = vdwg.mxu0
        %1672 = vrot.lane.b32.xlu0 %v1049, 64
        %v1673 = vpop.permute.xlu0 %1672
        %v1675 = vsel %vm1152, %v1623, 0
        %v1678 = vsel %vm1180, %v1673, 0
        %1680 = vmatprep.subr.bf16.mxu0 0
        %1681 = vmatpush1.bf16.msra.mxu0 %v1678
        %1682 = vmatprep.subr.bf16.mxu0 0
        %1683 = vmatpush1.bf16.msra.mxu0 0
        %1684 = vmatprep.subr.bf16.mxu0 0
        %1685 = vmatpush1.bf16.msra.mxu0 0
        %1686 = vmatprep.subr.bf16.mxu0 0
        %1687 = vmatpush1.bf16.msra.mxu0 0
        %1688 = vmatprep.subr.bf16.mxu0 0
        %1689 = vmatpush1.bf16.msra.mxu0 0
        %1690 = vmatprep.subr.bf16.mxu0 0
        %1691 = vmatpush1.bf16.msra.mxu0 0
        %1692 = vmatprep.subr.bf16.mxu0 0
        %1693 = vmatpush1.bf16.msra.mxu0 0
        %1694 = vmatprep.subr.bf16.mxu0 0
        %1695 = vmatpush1.bf16.msra.mxu0 0
        %1696 = vmatprep.subr.bf16.mxu0 0
        %1697 = vmatpush1.bf16.msra.mxu0 0
        %1698 = vmatprep.subr.bf16.mxu0 0
        %1699 = vmatpush1.bf16.msra.mxu0 0
        %1700 = vmatprep.subr.bf16.mxu0 0
        %1701 = vmatpush1.bf16.msra.mxu0 0
        %1702 = vmatprep.subr.bf16.mxu0 0
        %1703 = vmatpush1.bf16.msra.mxu0 0
        %1704 = vmatprep.subr.bf16.mxu0 0
        %1705 = vmatpush1.bf16.msra.mxu0 0
        %1706 = vmatprep.subr.bf16.mxu0 0
        %1707 = vmatpush1.bf16.msra.mxu0 0
        %1708 = vmatprep.subr.bf16.mxu0 0
        %1709 = vmatpush1.bf16.msra.mxu0 0
        %1710 = vmatprep.subr.bf16.mxu0 0
        %1711 = vmatpush1.bf16.msra.mxu0 0
        %1712 = vmatprep.mubr.bf16.mxu0 0
        %1713 = vmatmul.mubr.bf16.gmra.mrb[0].mxu0 %v1675
        %v1714 = vpop.f32.mrb[0].mxu0
        %v1715 = vadd.f32 0.0, %v1714
        %v1716 = vpop.f32.mrb[0].mxu0
        %v1717 = vpop.f32.mrb[0].mxu0
        %v1718 = vpop.f32.mrb[0].mxu0
        %1719 = vdwg.mxu0
        %1720 = vrot.lane.b32.xlu0 %v1044, 32
        %v1721 = vpop.permute.xlu0 %1720
        %1722 = vrot.lane.b32.xlu0 %v1046, 32
        %v1723 = vpop.permute.xlu0 %1722
        %v1725 = vsel %vm1055, %v1721, 0
        %v1728 = vsel %vm1055, %v1723, 0
        %1730 = vmatprep.subr.bf16.mxu0 0
        %1731 = vmatpush1.bf16.xpose.msra.mxu0 %v1728
        %1732 = vmatprep.subr.bf16.mxu0 0
        %1733 = vmatpush1.bf16.xpose.msra.mxu0 0
        %1734 = vmatprep.subr.bf16.mxu0 0
        %1735 = vmatpush1.bf16.xpose.msra.mxu0 0
        %1736 = vmatprep.subr.bf16.mxu0 0
        %1737 = vmatpush1.bf16.xpose.msra.mxu0 0
        %1738 = vmatprep.subr.bf16.mxu0 0
        %1739 = vmatpush1.bf16.xpose.msra.mxu0 0
        %1740 = vmatprep.subr.bf16.mxu0 0
        %1741 = vmatpush1.bf16.xpose.msra.mxu0 0
        %1742 = vmatprep.subr.bf16.mxu0 0
        %1743 = vmatpush1.bf16.xpose.msra.mxu0 0
        %1744 = vmatprep.subr.bf16.mxu0 0
        %1745 = vmatpush1.bf16.xpose.msra.mxu0 0
        %1746 = vmatprep.subr.bf16.mxu0 0
        %1747 = vmatpush1.bf16.xpose.msra.mxu0 0
        %1748 = vmatprep.subr.bf16.mxu0 0
        %1749 = vmatpush1.bf16.xpose.msra.mxu0 0
        %1750 = vmatprep.subr.bf16.mxu0 0
        %1751 = vmatpush1.bf16.xpose.msra.mxu0 0
        %1752 = vmatprep.subr.bf16.mxu0 0
        %1753 = vmatpush1.bf16.xpose.msra.mxu0 0
        %1754 = vmatprep.subr.bf16.mxu0 0
        %1755 = vmatpush1.bf16.xpose.msra.mxu0 0
        %1756 = vmatprep.subr.bf16.mxu0 0
        %1757 = vmatpush1.bf16.xpose.msra.mxu0 0
        %1758 = vmatprep.subr.bf16.mxu0 0
        %1759 = vmatpush1.bf16.xpose.msra.mxu0 0
        %1760 = vmatprep.subr.bf16.mxu0 0
        %1761 = vmatpush1.bf16.xpose.msra.mxu0 0
        %1762 = vmatprep.mubr.bf16.mxu0 0
        %1763 = vmatmul.mubr.bf16.gmra.mrb[0].mxu0 %v1725
        %v1764 = vpop.f32.mrb[0].mxu0
        %v1765 = vadd.f32 0.0, %v1764
        %v1766 = vpop.f32.mrb[0].mxu0
        %v1767 = vpop.f32.mrb[0].mxu0
        %v1768 = vpop.f32.mrb[0].mxu0
        %1769 = vdwg.mxu0
        %1770 = vrot.lane.b32.xlu0 %v1045, 32
        %v1771 = vpop.permute.xlu0 %1770
        %1772 = vrot.lane.b32.xlu0 %v1047, 32
        %v1773 = vpop.permute.xlu0 %1772
        %v1775 = vsel %vm1055, %v1771, 0
        %v1778 = vsel %vm1055, %v1773, 0
        %1780 = vmatprep.subr.bf16.mxu0 0
        %1781 = vmatpush1.bf16.xpose.msra.mxu0 %v1778
        %1782 = vmatprep.subr.bf16.mxu0 0
        %1783 = vmatpush1.bf16.xpose.msra.mxu0 0
        %1784 = vmatprep.subr.bf16.mxu0 0
        %1785 = vmatpush1.bf16.xpose.msra.mxu0 0
        %1786 = vmatprep.subr.bf16.mxu0 0
        %1787 = vmatpush1.bf16.xpose.msra.mxu0 0
        %1788 = vmatprep.subr.bf16.mxu0 0
        %1789 = vmatpush1.bf16.xpose.msra.mxu0 0
        %1790 = vmatprep.subr.bf16.mxu0 0
        %1791 = vmatpush1.bf16.xpose.msra.mxu0 0
        %1792 = vmatprep.subr.bf16.mxu0 0
        %1793 = vmatpush1.bf16.xpose.msra.mxu0 0
        %1794 = vmatprep.subr.bf16.mxu0 0
        %1795 = vmatpush1.bf16.xpose.msra.mxu0 0
        %1796 = vmatprep.subr.bf16.mxu0 0
        %1797 = vmatpush1.bf16.xpose.msra.mxu0 0
        %1798 = vmatprep.subr.bf16.mxu0 0
        %1799 = vmatpush1.bf16.xpose.msra.mxu0 0
        %1800 = vmatprep.subr.bf16.mxu0 0
        %1801 = vmatpush1.bf16.xpose.msra.mxu0 0
        %1802 = vmatprep.subr.bf16.mxu0 0
        %1803 = vmatpush1.bf16.xpose.msra.mxu0 0
        %1804 = vmatprep.subr.bf16.mxu0 0
        %1805 = vmatpush1.bf16.xpose.msra.mxu0 0
        %1806 = vmatprep.subr.bf16.mxu0 0
        %1807 = vmatpush1.bf16.xpose.msra.mxu0 0
        %1808 = vmatprep.subr.bf16.mxu0 0
        %1809 = vmatpush1.bf16.xpose.msra.mxu0 0
        %1810 = vmatprep.subr.bf16.mxu0 0
        %1811 = vmatpush1.bf16.xpose.msra.mxu0 0
        %1812 = vmatprep.mubr.bf16.mxu0 0
        %1813 = vmatmul.mubr.bf16.gmra.mrb[0].mxu0 %v1775
        %v1814 = vpop.f32.mrb[0].mxu0
        %v1815 = vadd.f32 0.0, %v1814
        %v1816 = vpop.f32.mrb[0].mxu0
        %v1817 = vpop.f32.mrb[0].mxu0
        %v1818 = vpop.f32.mrb[0].mxu0
        %1819 = vdwg.mxu0
        %v1820 = vsel %vm1149, %v1765, -1e+30
        %v1821 = vsel %vm1149, %v1815, -1e+30
        %v1822 = vsel %vm1152, %v1820, -inf
        %1823 = vmax.xlane.f32.xlu0 %v1822
        %v1824 = vpop.xlane.xlu0 %1823
        %v1825 = vsel %vm1152, %v1821, -inf
        %1826 = vmax.xlane.f32.xlu0 %v1825
        %v1827 = vpop.xlane.xlu0 %1826
        %v1828 = vsub.f32 %v1820, %v1824
        %v1829 = vsub.f32 %v1821, %v1827
        %v1830 = vmul.f32 %v1828, 1.442695
        %v1831 = vpow.pop %v1830
        %v1832 = vmul.f32 %v1829, 1.442695
        %v1833 = vpow.pop %v1832
        %v1834 = vsel %vm1152, %v1831, 0.0
        %1835 = vadd.xlane.f32.xlu0 %v1834
        %v1836 = vpop.xlane.xlu0 %1835
        %v1837 = vsel %vm1152, %v1833, 0.0
        %1838 = vadd.xlane.f32.xlu0 %v1837
        %v1839 = vpop.xlane.xlu0 %1838
        %v1840 = vrcp.pop %v1836
        %v1841 = vrcp.pop %v1839
        %v1842 = vmul.f32 %v1831, %v1840
        %v1843 = vmul.f32 %v1833, %v1841
        %v1844 = vpack.c.bf16 %v1842, %v1842
        %v1845 = vpack.c.bf16 %v1843, %v1843
        %1846 = vrot.lane.b32.xlu0 %v1048, 32
        %v1847 = vpop.permute.xlu0 %1846
        %v1849 = vsel %vm1152, %v1844, 0
        %v1852 = vsel %vm1180, %v1847, 0
        %1854 = vmatprep.subr.bf16.mxu0 0
        %1855 = vmatpush1.bf16.msra.mxu0 %v1852
        %1856 = vmatprep.subr.bf16.mxu0 0
        %1857 = vmatpush1.bf16.msra.mxu0 0
        %1858 = vmatprep.subr.bf16.mxu0 0
        %1859 = vmatpush1.bf16.msra.mxu0 0
        %1860 = vmatprep.subr.bf16.mxu0 0
        %1861 = vmatpush1.bf16.msra.mxu0 0
        %1862 = vmatprep.subr.bf16.mxu0 0
        %1863 = vmatpush1.bf16.msra.mxu0 0
        %1864 = vmatprep.subr.bf16.mxu0 0
        %1865 = vmatpush1.bf16.msra.mxu0 0
        %1866 = vmatprep.subr.bf16.mxu0 0
        %1867 = vmatpush1.bf16.msra.mxu0 0
        %1868 = vmatprep.subr.bf16.mxu0 0
        %1869 = vmatpush1.bf16.msra.mxu0 0
        %1870 = vmatprep.subr.bf16.mxu0 0
        %1871 = vmatpush1.bf16.msra.mxu0 0
        %1872 = vmatprep.subr.bf16.mxu0 0
        %1873 = vmatpush1.bf16.msra.mxu0 0
        %1874 = vmatprep.subr.bf16.mxu0 0
        %1875 = vmatpush1.bf16.msra.mxu0 0
        %1876 = vmatprep.subr.bf16.mxu0 0
        %1877 = vmatpush1.bf16.msra.mxu0 0
        %1878 = vmatprep.subr.bf16.mxu0 0
        %1879 = vmatpush1.bf16.msra.mxu0 0
        %1880 = vmatprep.subr.bf16.mxu0 0
        %1881 = vmatpush1.bf16.msra.mxu0 0
        %1882 = vmatprep.subr.bf16.mxu0 0
        %1883 = vmatpush1.bf16.msra.mxu0 0
        %1884 = vmatprep.subr.bf16.mxu0 0
        %1885 = vmatpush1.bf16.msra.mxu0 0
        %1886 = vmatprep.mubr.bf16.mxu0 0
        %1887 = vmatmul.mubr.bf16.gmra.mrb[0].mxu0 %v1849
        %v1888 = vpop.f32.mrb[0].mxu0
        %v1889 = vadd.f32 0.0, %v1888
        %v1890 = vpop.f32.mrb[0].mxu0
        %v1891 = vpop.f32.mrb[0].mxu0
        %v1892 = vpop.f32.mrb[0].mxu0
        %1893 = vdwg.mxu0
        %1894 = vrot.lane.b32.xlu0 %v1049, 32
        %v1895 = vpop.permute.xlu0 %1894
        %v1897 = vsel %vm1152, %v1845, 0
        %v1900 = vsel %vm1180, %v1895, 0
        %1902 = vmatprep.subr.bf16.mxu0 0
        %1903 = vmatpush1.bf16.msra.mxu0 %v1900
        %1904 = vmatprep.subr.bf16.mxu0 0
        %1905 = vmatpush1.bf16.msra.mxu0 0
        %1906 = vmatprep.subr.bf16.mxu0 0
        %1907 = vmatpush1.bf16.msra.mxu0 0
        %1908 = vmatprep.subr.bf16.mxu0 0
        %1909 = vmatpush1.bf16.msra.mxu0 0
        %1910 = vmatprep.subr.bf16.mxu0 0
        %1911 = vmatpush1.bf16.msra.mxu0 0
        %1912 = vmatprep.subr.bf16.mxu0 0
        %1913 = vmatpush1.bf16.msra.mxu0 0
        %1914 = vmatprep.subr.bf16.mxu0 0
        %1915 = vmatpush1.bf16.msra.mxu0 0
        %1916 = vmatprep.subr.bf16.mxu0 0
        %1917 = vmatpush1.bf16.msra.mxu0 0
        %1918 = vmatprep.subr.bf16.mxu0 0
        %1919 = vmatpush1.bf16.msra.mxu0 0
        %1920 = vmatprep.subr.bf16.mxu0 0
        %1921 = vmatpush1.bf16.msra.mxu0 0
        %1922 = vmatprep.subr.bf16.mxu0 0
        %1923 = vmatpush1.bf16.msra.mxu0 0
        %1924 = vmatprep.subr.bf16.mxu0 0
        %1925 = vmatpush1.bf16.msra.mxu0 0
        %1926 = vmatprep.subr.bf16.mxu0 0
        %1927 = vmatpush1.bf16.msra.mxu0 0
        %1928 = vmatprep.subr.bf16.mxu0 0
        %1929 = vmatpush1.bf16.msra.mxu0 0
        %1930 = vmatprep.subr.bf16.mxu0 0
        %1931 = vmatpush1.bf16.msra.mxu0 0
        %1932 = vmatprep.subr.bf16.mxu0 0
        %1933 = vmatpush1.bf16.msra.mxu0 0
        %1934 = vmatprep.mubr.bf16.mxu0 0
        %1935 = vmatmul.mubr.bf16.gmra.mrb[0].mxu0 %v1897
        %v1936 = vpop.f32.mrb[0].mxu0
        %v1937 = vadd.f32 0.0, %v1936
        %v1938 = vpop.f32.mrb[0].mxu0
        %v1939 = vpop.f32.mrb[0].mxu0
        %v1940 = vpop.f32.mrb[0].mxu0
        %1941 = vdwg.mxu0
        %1944 = vrot.lane.b32.xlu0 %v1444, 32
        %v1945 = vpop.permute.xlu0 %1944
        %1946 = vrot.lane.b32.xlu0 %v1493, 32
        %v1947 = vpop.permute.xlu0 %1946
        %1952 = vrot.lane.b32.xlu0 %v1667, 64
        %v1953 = vpop.permute.xlu0 %1952
        %1954 = vrot.lane.b32.xlu0 %v1715, 64
        %v1955 = vpop.permute.xlu0 %1954
        %1960 = vrot.lane.b32.xlu0 %v1889, 96
        %v1961 = vpop.permute.xlu0 %1960
        %1962 = vrot.lane.b32.xlu0 %v1937, 96
        %v1963 = vpop.permute.xlu0 %1962
        %v1966 = vsel %vm1055, %v1219, %v1945
        %v1967 = vsel %vm1055, %v1265, %v1947
        %vm1968 = vcmask 523264
        %v1969 = vsel %vm1968, %v1966, %v1953
        %v1970 = vsel %vm1968, %v1967, %v1955
        %vm1971 = vcmask 785408
        %v1972 = vsel %vm1971, %v1969, %v1961
        %v1973 = vsel %vm1971, %v1970, %v1963
        %v1974 = vpack.c.bf16 %v1973, %v1972
        %v1975 = vld [vmem:[%s612] sm:$0xf]
        %v1976 = vld [vmem:[%s612 + $0x4] sm:$0xf]
        %v1977 = vld [vmem:[%s612 + $0x8] sm:$0xf]
        %v1978 = vld [vmem:[%s612 + $0xc] sm:$0xf]
        %v1979 = vld [vmem:[%s612 + $0x10] sm:$0xf]
        %v1980 = vld [vmem:[%s612 + $0x14] sm:$0xf]
        %v1981 = vld [vmem:[%s612 + $0x18] sm:$0xf]
        %v1982 = vld [vmem:[%s612 + $0x1c] sm:$0xf]
        %v1983 = vld [vmem:[%s612 + $0x20] sm:$0xf]
        %v1984 = vld [vmem:[%s612 + $0x24] sm:$0xf]
        %v1985 = vld [vmem:[%s612 + $0x28] sm:$0xf]
        %v1986 = vld [vmem:[%s612 + $0x2c] sm:$0xf]
        %v1987 = vld [vmem:[%s612 + $0x30] sm:$0xf]
        %v1988 = vld [vmem:[%s612 + $0x34] sm:$0xf]
        %v1989 = vld [vmem:[%s612 + $0x38] sm:$0xf]
        %v1990 = vld [vmem:[%s612 + $0x3c] sm:$0xf]
        %v1991 = vld [vmem:[%s716] sm:$0x1]
        %v1993 = vlaneseq
        %v1994 = vshrl.u32 %v1993, 7
        %v1995 = vsub.s32 0, %v1994
        %v1996 = vrot.slane %v1991, %v1995
        %v2014 = vunpack.c.l.b16 %v1975
        %v2015 = vunpack.c.l.b16 %v1976
        %v2016 = vunpack.c.l.b16 %v1977
        %v2017 = vunpack.c.l.b16 %v1978
        %v2018 = vunpack.c.l.b16 %v1979
        %v2019 = vunpack.c.l.b16 %v1980
        %v2020 = vunpack.c.l.b16 %v1981
        %v2021 = vunpack.c.l.b16 %v1982
        %v2022 = vunpack.c.l.b16 %v1983
        %v2023 = vunpack.c.l.b16 %v1984
        %v2024 = vunpack.c.l.b16 %v1985
        %v2025 = vunpack.c.l.b16 %v1986
        %v2026 = vunpack.c.l.b16 %v1987
        %v2027 = vunpack.c.l.b16 %v1988
        %v2028 = vunpack.c.l.b16 %v1989
        %v2029 = vunpack.c.l.b16 %v1990
        %v2030 = vpack.c.b16 %v2015, %v2014
        %v2031 = vpack.c.b16 %v2017, %v2016
        %v2032 = vpack.c.b16 %v2019, %v2018
        %v2033 = vpack.c.b16 %v2021, %v2020
        %v2034 = vpack.c.b16 %v2023, %v2022
        %v2035 = vpack.c.b16 %v2025, %v2024
        %v2036 = vpack.c.b16 %v2027, %v2026
        %v2037 = vpack.c.b16 %v2029, %v2028
        %2046 = vmatprep.subr.bf16.mxu0 0
        %2047 = vmatpush1.bf16.msra.mxu0 %v2030
        %2048 = vmatprep.subr.bf16.mxu0 0
        %2049 = vmatpush1.bf16.msra.mxu0 %v2031
        %2050 = vmatprep.subr.bf16.mxu0 0
        %2051 = vmatpush1.bf16.msra.mxu0 %v2032
        %2052 = vmatprep.subr.bf16.mxu0 0
        %2053 = vmatpush1.bf16.msra.mxu0 %v2033
        %2054 = vmatprep.subr.bf16.mxu0 0
        %2055 = vmatpush1.bf16.msra.mxu0 %v2034
        %2056 = vmatprep.subr.bf16.mxu0 0
        %2057 = vmatpush1.bf16.msra.mxu0 %v2035
        %2058 = vmatprep.subr.bf16.mxu0 0
        %2059 = vmatpush1.bf16.msra.mxu0 %v2036
        %2060 = vmatprep.subr.bf16.mxu0 0
        %2061 = vmatpush1.bf16.msra.mxu0 %v2037
        %2062 = vmatprep.subr.bf16.mxu0 0
        %2063 = vmatpush1.bf16.msra.mxu0 0
        %2064 = vmatprep.subr.bf16.mxu0 0
        %2065 = vmatpush1.bf16.msra.mxu0 0
        %2066 = vmatprep.subr.bf16.mxu0 0
        %2067 = vmatpush1.bf16.msra.mxu0 0
        %2068 = vmatprep.subr.bf16.mxu0 0
        %2069 = vmatpush1.bf16.msra.mxu0 0
        %2070 = vmatprep.subr.bf16.mxu0 0
        %2071 = vmatpush1.bf16.msra.mxu0 0
        %2072 = vmatprep.subr.bf16.mxu0 0
        %2073 = vmatpush1.bf16.msra.mxu0 0
        %2074 = vmatprep.subr.bf16.mxu0 0
        %2075 = vmatpush1.bf16.msra.mxu0 0
        %2076 = vmatprep.subr.bf16.mxu0 0
        %2077 = vmatpush1.bf16.msra.mxu0 0
        %2078 = vmatprep.mubr.bf16.mxu0 0
        %2079 = vmatmul.mubr.bf16.gmra.mrb[0].mxu0 %v1974
        %v2080 = vpop.f32.mrb[0].mxu0
        %v2081 = vadd.f32 %v1996, %v2080
        %v2082 = vpop.f32.mrb[0].mxu0
        %v2083 = vpop.f32.mrb[0].mxu0
        %v2084 = vadd.f32 %v1996, %v2083
        %v2085 = vpop.f32.mrb[0].mxu0
        %2086 = vdwg.mxu0
        %v2087 = vadd.f32 %v740, %v2081
        %v2088 = vadd.f32 %v741, %v2084
        %v2089 = vld [vmem:[%s719] sm:$0x1]
        %v2090 = vld [vmem:[%s722] sm:$0x1]
        %2091 = vadd.xlane.f32.xlu0 %v2087
        %v2092 = vpop.xlane.xlu0 %2091
        %2093 = vadd.xlane.f32.xlu0 %v2088
        %v2094 = vpop.xlane.xlu0 %2093
        %v2095 = vmul.f32 %v2092, %v748
        %v2096 = vmul.f32 %v2094, %v748
        %v2097 = vsub.f32 %v2087, %v2095
        %v2098 = vsub.f32 %v2088, %v2096
        %v2099 = vmul.f32 %v2097, %v2097
        %v2100 = vmul.f32 %v2098, %v2098
        %2101 = vadd.xlane.f32.xlu0 %v2099
        %v2102 = vpop.xlane.xlu0 %2101
        %2103 = vadd.xlane.f32.xlu0 %v2100
        %v2104 = vpop.xlane.xlu0 %2103
        %v2105 = vmul.f32 %v2102, %v748
        %v2106 = vmul.f32 %v2104, %v748
        %v2107 = vadd.f32 %v2105, 1e-05
        %v2108 = vadd.f32 %v2106, 1e-05
        %v2109 = vrsqrt.pop %v2107
        %v2110 = vmul.f32 %v2107, %v2109
        %vm2111 = vcmp.eq.f32.partialorder %v2107, inf
        %v2112 = vsel %vm2111, %v2107, %v2110
        %vm2113 = vcmp.eq.f32.partialorder %v2107, 0.0
        %v2114 = vand.u32 %v2107, 2147483648
        %v2115 = vsel %vm2113, %v2114, %v2112
        %v2116 = vrsqrt.pop %v2108
        %v2117 = vmul.f32 %v2108, %v2116
        %vm2118 = vcmp.eq.f32.partialorder %v2108, inf
        %v2119 = vsel %vm2118, %v2108, %v2117
        %vm2120 = vcmp.eq.f32.partialorder %v2108, 0.0
        %v2121 = vand.u32 %v2108, 2147483648
        %v2122 = vsel %vm2120, %v2121, %v2119
        %v2123 = vrcp.pop %v2115
        %v2124 = vmul.f32 %v2097, %v2123
        %v2125 = vrcp.pop %v2122
        %v2126 = vmul.f32 %v2098, %v2125
        %v2128 = vlaneseq
        %v2129 = vshrl.u32 %v2128, 7
        %v2130 = vsub.s32 0, %v2129
        %v2131 = vrot.slane %v2089, %v2130
        %v2133 = vmul.f32 %v2124, %v2131
        %v2134 = vmul.f32 %v2126, %v2131
        %v2136 = vlaneseq
        %v2137 = vshrl.u32 %v2136, 7
        %v2138 = vsub.s32 0, %v2137
        %v2139 = vrot.slane %v2090, %v2138
        %v2141 = vadd.f32 %v2133, %v2139
        %v2142 = vadd.f32 %v2134, %v2139
        %v2143 = vpack.c.bf16 %v2142, %v2141
        %v2144 = vld [vmem:[%s621] sm:$0xff]
        %v2145 = vld [vmem:[%s621 + $0x8] sm:$0xff]
        %v2146 = vld [vmem:[%s621 + $0x10] sm:$0xff]
        %v2147 = vld [vmem:[%s621 + $0x18] sm:$0xff]
        %v2148 = vld [vmem:[%s621 + $0x20] sm:$0xff]
        %v2149 = vld [vmem:[%s621 + $0x28] sm:$0xff]
        %v2150 = vld [vmem:[%s621 + $0x30] sm:$0xff]
        %v2151 = vld [vmem:[%s621 + $0x38] sm:$0xff]
        %v2152 = vld [vmem:[%s621 + $0x40] sm:$0xff]
        %v2153 = vld [vmem:[%s621 + $0x48] sm:$0xff]
        %v2154 = vld [vmem:[%s621 + $0x50] sm:$0xff]
        %v2155 = vld [vmem:[%s621 + $0x58] sm:$0xff]
        %v2156 = vld [vmem:[%s621 + $0x60] sm:$0xff]
        %v2157 = vld [vmem:[%s621 + $0x68] sm:$0xff]
        %v2158 = vld [vmem:[%s621 + $0x70] sm:$0xff]
        %v2159 = vld [vmem:[%s621 + $0x78] sm:$0xff]
        %v2160 = vld [vmem:[%s621 + $0x80] sm:$0xff]
        %v2161 = vld [vmem:[%s621 + $0x88] sm:$0xff]
        %v2162 = vld [vmem:[%s621 + $0x90] sm:$0xff]
        %v2163 = vld [vmem:[%s621 + $0x98] sm:$0xff]
        %v2164 = vld [vmem:[%s621 + $0xa0] sm:$0xff]
        %v2165 = vld [vmem:[%s621 + $0xa8] sm:$0xff]
        %v2166 = vld [vmem:[%s621 + $0xb0] sm:$0xff]
        %v2167 = vld [vmem:[%s621 + $0xb8] sm:$0xff]
        %v2168 = vld [vmem:[%s621 + $0xc0] sm:$0xff]
        %v2169 = vld [vmem:[%s621 + $0xc8] sm:$0xff]
        %v2170 = vld [vmem:[%s621 + $0xd0] sm:$0xff]
        %v2171 = vld [vmem:[%s621 + $0xd8] sm:$0xff]
        %v2172 = vld [vmem:[%s621 + $0xe0] sm:$0xff]
        %v2173 = vld [vmem:[%s621 + $0xe8] sm:$0xff]
        %v2174 = vld [vmem:[%s621 + $0xf0] sm:$0xff]
        %v2175 = vld [vmem:[%s621 + $0xf8] sm:$0xff]
        %v2176 = vld [vmem:[%s726] sm:$0xf]
        %v2178 = vlaneseq
        %v2179 = vshrl.u32 %v2178, 7
        %v2180 = vsub.s32 0, %v2179
        %v2181 = vrot.slane %v2176, %v2180
        %v2182 = vlaneseq
        %v2183 = vshrl.u32 %v2182, 7
        %v2184 = vsub.s32 1, %v2183
        %v2185 = vrot.slane %v2176, %v2184
        %v2186 = vlaneseq
        %v2187 = vshrl.u32 %v2186, 7
        %v2188 = vsub.s32 2, %v2187
        %v2189 = vrot.slane %v2176, %v2188
        %v2190 = vlaneseq
        %v2191 = vshrl.u32 %v2190, 7
        %v2192 = vsub.s32 3, %v2191
        %v2193 = vrot.slane %v2176, %v2192
        %v2230 = vunpack.c.l.b16 %v2144
        %v2231 = vunpack.c.h.b16 %v2144
        %v2232 = vunpack.c.l.b16 %v2145
        %v2233 = vunpack.c.h.b16 %v2145
        %v2234 = vunpack.c.l.b16 %v2146
        %v2235 = vunpack.c.h.b16 %v2146
        %v2236 = vunpack.c.l.b16 %v2147
        %v2237 = vunpack.c.h.b16 %v2147
        %v2238 = vunpack.c.l.b16 %v2148
        %v2239 = vunpack.c.h.b16 %v2148
        %v2240 = vunpack.c.l.b16 %v2149
        %v2241 = vunpack.c.h.b16 %v2149
        %v2242 = vunpack.c.l.b16 %v2150
        %v2243 = vunpack.c.h.b16 %v2150
        %v2244 = vunpack.c.l.b16 %v2151
        %v2245 = vunpack.c.h.b16 %v2151
        %v2246 = vunpack.c.l.b16 %v2152
        %v2247 = vunpack.c.h.b16 %v2152
        %v2248 = vunpack.c.l.b16 %v2153
        %v2249 = vunpack.c.h.b16 %v2153
        %v2250 = vunpack.c.l.b16 %v2154
        %v2251 = vunpack.c.h.b16 %v2154
        %v2252 = vunpack.c.l.b16 %v2155
        %v2253 = vunpack.c.h.b16 %v2155
        %v2254 = vunpack.c.l.b16 %v2156
        %v2255 = vunpack.c.h.b16 %v2156
        %v2256 = vunpack.c.l.b16 %v2157
        %v2257 = vunpack.c.h.b16 %v2157
        %v2258 = vunpack.c.l.b16 %v2158
        %v2259 = vunpack.c.h.b16 %v2158
        %v2260 = vunpack.c.l.b16 %v2159
        %v2261 = vunpack.c.h.b16 %v2159
        %v2262 = vunpack.c.l.b16 %v2160
        %v2263 = vunpack.c.h.b16 %v2160
        %v2264 = vunpack.c.l.b16 %v2161
        %v2265 = vunpack.c.h.b16 %v2161
        %v2266 = vunpack.c.l.b16 %v2162
        %v2267 = vunpack.c.h.b16 %v2162
        %v2268 = vunpack.c.l.b16 %v2163
        %v2269 = vunpack.c.h.b16 %v2163
        %v2270 = vunpack.c.l.b16 %v2164
        %v2271 = vunpack.c.h.b16 %v2164
        %v2272 = vunpack.c.l.b16 %v2165
        %v2273 = vunpack.c.h.b16 %v2165
        %v2274 = vunpack.c.l.b16 %v2166
        %v2275 = vunpack.c.h.b16 %v2166
        %v2276 = vunpack.c.l.b16 %v2167
        %v2277 = vunpack.c.h.b16 %v2167
        %v2278 = vunpack.c.l.b16 %v2168
        %v2279 = vunpack.c.h.b16 %v2168
        %v2280 = vunpack.c.l.b16 %v2169
        %v2281 = vunpack.c.h.b16 %v2169
        %v2282 = vunpack.c.l.b16 %v2170
        %v2283 = vunpack.c.h.b16 %v2170
        %v2284 = vunpack.c.l.b16 %v2171
        %v2285 = vunpack.c.h.b16 %v2171
        %v2286 = vunpack.c.l.b16 %v2172
        %v2287 = vunpack.c.h.b16 %v2172
        %v2288 = vunpack.c.l.b16 %v2173
        %v2289 = vunpack.c.h.b16 %v2173
        %v2290 = vunpack.c.l.b16 %v2174
        %v2291 = vunpack.c.h.b16 %v2174
        %v2292 = vunpack.c.l.b16 %v2175
        %v2293 = vunpack.c.h.b16 %v2175
        %v2294 = vpack.c.b16 %v2234, %v2230
        %v2295 = vpack.c.b16 %v2235, %v2231
        %v2296 = vpack.c.b16 %v2236, %v2232
        %v2297 = vpack.c.b16 %v2237, %v2233
        %v2298 = vpack.c.b16 %v2242, %v2238
        %v2299 = vpack.c.b16 %v2243, %v2239
        %v2300 = vpack.c.b16 %v2244, %v2240
        %v2301 = vpack.c.b16 %v2245, %v2241
        %v2302 = vpack.c.b16 %v2250, %v2246
        %v2303 = vpack.c.b16 %v2251, %v2247
        %v2304 = vpack.c.b16 %v2252, %v2248
        %v2305 = vpack.c.b16 %v2253, %v2249
        %v2306 = vpack.c.b16 %v2258, %v2254
        %v2307 = vpack.c.b16 %v2259, %v2255
        %v2308 = vpack.c.b16 %v2260, %v2256
        %v2309 = vpack.c.b16 %v2261, %v2257
        %v2310 = vpack.c.b16 %v2266, %v2262
        %v2311 = vpack.c.b16 %v2267, %v2263
        %v2312 = vpack.c.b16 %v2268, %v2264
        %v2313 = vpack.c.b16 %v2269, %v2265
        %v2314 = vpack.c.b16 %v2274, %v2270
        %v2315 = vpack.c.b16 %v2275, %v2271
        %v2316 = vpack.c.b16 %v2276, %v2272
        %v2317 = vpack.c.b16 %v2277, %v2273
        %v2318 = vpack.c.b16 %v2282, %v2278
        %v2319 = vpack.c.b16 %v2283, %v2279
        %v2320 = vpack.c.b16 %v2284, %v2280
        %v2321 = vpack.c.b16 %v2285, %v2281
        %v2322 = vpack.c.b16 %v2290, %v2286
        %v2323 = vpack.c.b16 %v2291, %v2287
        %v2324 = vpack.c.b16 %v2292, %v2288
        %v2325 = vpack.c.b16 %v2293, %v2289
        %2358 = vmatprep.subr.bf16.mxu0 %v2295
        %2359 = vmatpush1.bf16.msra.mxu0 %v2294
        %2360 = vmatprep.subr.bf16.mxu0 %v2299
        %2361 = vmatpush1.bf16.msra.mxu0 %v2298
        %2362 = vmatprep.subr.bf16.mxu0 %v2303
        %2363 = vmatpush1.bf16.msra.mxu0 %v2302
        %2364 = vmatprep.subr.bf16.mxu0 %v2307
        %2365 = vmatpush1.bf16.msra.mxu0 %v2306
        %2366 = vmatprep.subr.bf16.mxu0 %v2311
        %2367 = vmatpush1.bf16.msra.mxu0 %v2310
        %2368 = vmatprep.subr.bf16.mxu0 %v2315
        %2369 = vmatpush1.bf16.msra.mxu0 %v2314
        %2370 = vmatprep.subr.bf16.mxu0 %v2319
        %2371 = vmatpush1.bf16.msra.mxu0 %v2318
        %2372 = vmatprep.subr.bf16.mxu0 %v2323
        %2373 = vmatpush1.bf16.msra.mxu0 %v2322
        %2374 = vmatprep.subr.bf16.mxu0 0
        %2375 = vmatpush1.bf16.msra.mxu0 0
        %2376 = vmatprep.subr.bf16.mxu0 0
        %2377 = vmatpush1.bf16.msra.mxu0 0
        %2378 = vmatprep.subr.bf16.mxu0 0
        %2379 = vmatpush1.bf16.msra.mxu0 0
        %2380 = vmatprep.subr.bf16.mxu0 0
        %2381 = vmatpush1.bf16.msra.mxu0 0
        %2382 = vmatprep.subr.bf16.mxu0 0
        %2383 = vmatpush1.bf16.msra.mxu0 0
        %2384 = vmatprep.subr.bf16.mxu0 0
        %2385 = vmatpush1.bf16.msra.mxu0 0
        %2386 = vmatprep.subr.bf16.mxu0 0
        %2387 = vmatpush1.bf16.msra.mxu0 0
        %2388 = vmatprep.subr.bf16.mxu0 0
        %2389 = vmatpush1.bf16.msra.mxu0 0
        %2390 = vmatprep.mubr.bf16.mxu0 0
        %2391 = vmatmul.mubr.bf16.gmra.mrb[0].mxu0 %v2143
        %v2392 = vpop.f32.mrb[0].mxu0
        %v2393 = vadd.f32 %v2181, %v2392
        %v2394 = vpop.f32.mrb[0].mxu0
        %v2395 = vadd.f32 %v2185, %v2394
        %v2396 = vpop.f32.mrb[0].mxu0
        %v2397 = vadd.f32 %v2181, %v2396
        %v2398 = vpop.f32.mrb[0].mxu0
        %v2399 = vadd.f32 %v2185, %v2398
        %2400 = vdwg.mxu0
        %2401 = vmatprep.subr.bf16.mxu0 %v2297
        %2402 = vmatpush1.bf16.msra.mxu0 %v2296
        %2403 = vmatprep.subr.bf16.mxu0 %v2301
        %2404 = vmatpush1.bf16.msra.mxu0 %v2300
        %2405 = vmatprep.subr.bf16.mxu0 %v2305
        %2406 = vmatpush1.bf16.msra.mxu0 %v2304
        %2407 = vmatprep.subr.bf16.mxu0 %v2309
        %2408 = vmatpush1.bf16.msra.mxu0 %v2308
        %2409 = vmatprep.subr.bf16.mxu0 %v2313
        %2410 = vmatpush1.bf16.msra.mxu0 %v2312
        %2411 = vmatprep.subr.bf16.mxu0 %v2317
        %2412 = vmatpush1.bf16.msra.mxu0 %v2316
        %2413 = vmatprep.subr.bf16.mxu0 %v2321
        %2414 = vmatpush1.bf16.msra.mxu0 %v2320
        %2415 = vmatprep.subr.bf16.mxu0 %v2325
        %2416 = vmatpush1.bf16.msra.mxu0 %v2324
        %2417 = vmatprep.subr.bf16.mxu0 0
        %2418 = vmatpush1.bf16.msra.mxu0 0
        %2419 = vmatprep.subr.bf16.mxu0 0
        %2420 = vmatpush1.bf16.msra.mxu0 0
        %2421 = vmatprep.subr.bf16.mxu0 0
        %2422 = vmatpush1.bf16.msra.mxu0 0
        %2423 = vmatprep.subr.bf16.mxu0 0
        %2424 = vmatpush1.bf16.msra.mxu0 0
        %2425 = vmatprep.subr.bf16.mxu0 0
        %2426 = vmatpush1.bf16.msra.mxu0 0
        %2427 = vmatprep.subr.bf16.mxu0 0
        %2428 = vmatpush1.bf16.msra.mxu0 0
        %2429 = vmatprep.subr.bf16.mxu0 0
        %2430 = vmatpush1.bf16.msra.mxu0 0
        %2431 = vmatprep.subr.bf16.mxu0 0
        %2432 = vmatpush1.bf16.msra.mxu0 0
        %2433 = vmatprep.mubr.bf16.mxu0 0
        %2434 = vmatmul.mubr.bf16.gmra.mrb[0].mxu0 %v2143
        %v2435 = vpop.f32.mrb[0].mxu0
        %v2436 = vadd.f32 %v2189, %v2435
        %v2437 = vpop.f32.mrb[0].mxu0
        %v2438 = vadd.f32 %v2193, %v2437
        %v2439 = vpop.f32.mrb[0].mxu0
        %v2440 = vadd.f32 %v2189, %v2439
        %v2441 = vpop.f32.mrb[0].mxu0
        %v2442 = vadd.f32 %v2193, %v2441
        %2443 = vdwg.mxu0
        %v2444 = vmul.f32 %v2393, 0.5
        %v2445 = vmul.f32 %v2395, 0.5
        %v2446 = vmul.f32 %v2436, 0.5
        %v2447 = vmul.f32 %v2438, 0.5
        %v2448 = vmul.f32 %v2397, 0.5
        %v2449 = vmul.f32 %v2399, 0.5
        %v2450 = vmul.f32 %v2440, 0.5
        %v2451 = vmul.f32 %v2442, 0.5
        %v2452 = vmul.f32 %v2393, 0.044715
        %v2453 = vmul.f32 %v2395, 0.044715
        %v2454 = vmul.f32 %v2436, 0.044715
        %v2455 = vmul.f32 %v2438, 0.044715
        %v2456 = vmul.f32 %v2397, 0.044715
        %v2457 = vmul.f32 %v2399, 0.044715
        %v2458 = vmul.f32 %v2440, 0.044715
        %v2459 = vmul.f32 %v2442, 0.044715
        %v2460 = vmul.f32 %v2452, %v2393
        %v2461 = vmul.f32 %v2453, %v2395
        %v2462 = vmul.f32 %v2454, %v2436
        %v2463 = vmul.f32 %v2455, %v2438
        %v2464 = vmul.f32 %v2456, %v2397
        %v2465 = vmul.f32 %v2457, %v2399
        %v2466 = vmul.f32 %v2458, %v2440
        %v2467 = vmul.f32 %v2459, %v2442
        %v2468 = vmul.f32 %v2460, %v2393
        %v2469 = vmul.f32 %v2461, %v2395
        %v2470 = vmul.f32 %v2462, %v2436
        %v2471 = vmul.f32 %v2463, %v2438
        %v2472 = vmul.f32 %v2464, %v2397
        %v2473 = vmul.f32 %v2465, %v2399
        %v2474 = vmul.f32 %v2466, %v2440
        %v2475 = vmul.f32 %v2467, %v2442
        %v2476 = vadd.f32 %v2393, %v2468
        %v2477 = vadd.f32 %v2395, %v2469
        %v2478 = vadd.f32 %v2436, %v2470
        %v2479 = vadd.f32 %v2438, %v2471
        %v2480 = vadd.f32 %v2397, %v2472
        %v2481 = vadd.f32 %v2399, %v2473
        %v2482 = vadd.f32 %v2440, %v2474
        %v2483 = vadd.f32 %v2442, %v2475
        %v2484 = vmul.f32 %v2476, 0.7978846
        %v2485 = vmul.f32 %v2477, 0.7978846
        %v2486 = vmul.f32 %v2478, 0.7978846
        %v2487 = vmul.f32 %v2479, 0.7978846
        %v2488 = vmul.f32 %v2480, 0.7978846
        %v2489 = vmul.f32 %v2481, 0.7978846
        %v2490 = vmul.f32 %v2482, 0.7978846
        %v2491 = vmul.f32 %v2483, 0.7978846
        %v2492 = vtanh.pop %v2484
        %v2493 = vtanh.pop %v2485
        %v2494 = vtanh.pop %v2486
        %v2495 = vtanh.pop %v2487
        %v2496 = vtanh.pop %v2488
        %v2497 = vtanh.pop %v2489
        %v2498 = vtanh.pop %v2490
        %v2499 = vtanh.pop %v2491
        %v2500 = vadd.f32 %v2492, 1.0
        %v2501 = vadd.f32 %v2493, 1.0
        %v2502 = vadd.f32 %v2494, 1.0
        %v2503 = vadd.f32 %v2495, 1.0
        %v2504 = vadd.f32 %v2496, 1.0
        %v2505 = vadd.f32 %v2497, 1.0
        %v2506 = vadd.f32 %v2498, 1.0
        %v2507 = vadd.f32 %v2499, 1.0
        %v2508 = vmul.f32 %v2444, %v2500
        %v2509 = vmul.f32 %v2445, %v2501
        %v2510 = vmul.f32 %v2446, %v2502
        %v2511 = vmul.f32 %v2447, %v2503
        %v2512 = vmul.f32 %v2448, %v2504
        %v2513 = vmul.f32 %v2449, %v2505
        %v2514 = vmul.f32 %v2450, %v2506
        %v2515 = vmul.f32 %v2451, %v2507
        %v2516 = vpack.c.bf16 %v2512, %v2508
        %v2517 = vpack.c.bf16 %v2513, %v2509
        %v2518 = vpack.c.bf16 %v2514, %v2510
        %v2519 = vpack.c.bf16 %v2515, %v2511
        %v2520 = vld [vmem:[%s630] sm:$0xf]
        %v2521 = vld [vmem:[%s630 + $0x4] sm:$0xf]
        %v2522 = vld [vmem:[%s630 + $0x8] sm:$0xf]
        %v2523 = vld [vmem:[%s630 + $0xc] sm:$0xf]
        %v2524 = vld [vmem:[%s630 + $0x10] sm:$0xf]
        %v2525 = vld [vmem:[%s630 + $0x14] sm:$0xf]
        %v2526 = vld [vmem:[%s630 + $0x18] sm:$0xf]
        %v2527 = vld [vmem:[%s630 + $0x1c] sm:$0xf]
        %v2528 = vld [vmem:[%s630 + $0x20] sm:$0xf]
        %v2529 = vld [vmem:[%s630 + $0x24] sm:$0xf]
        %v2530 = vld [vmem:[%s630 + $0x28] sm:$0xf]
        %v2531 = vld [vmem:[%s630 + $0x2c] sm:$0xf]
        %v2532 = vld [vmem:[%s630 + $0x30] sm:$0xf]
        %v2533 = vld [vmem:[%s630 + $0x34] sm:$0xf]
        %v2534 = vld [vmem:[%s630 + $0x38] sm:$0xf]
        %v2535 = vld [vmem:[%s630 + $0x3c] sm:$0xf]
        %v2536 = vld [vmem:[%s630 + $0x40] sm:$0xf]
        %v2537 = vld [vmem:[%s630 + $0x44] sm:$0xf]
        %v2538 = vld [vmem:[%s630 + $0x48] sm:$0xf]
        %v2539 = vld [vmem:[%s630 + $0x4c] sm:$0xf]
        %v2540 = vld [vmem:[%s630 + $0x50] sm:$0xf]
        %v2541 = vld [vmem:[%s630 + $0x54] sm:$0xf]
        %v2542 = vld [vmem:[%s630 + $0x58] sm:$0xf]
        %v2543 = vld [vmem:[%s630 + $0x5c] sm:$0xf]
        %v2544 = vld [vmem:[%s630 + $0x60] sm:$0xf]
        %v2545 = vld [vmem:[%s630 + $0x64] sm:$0xf]
        %v2546 = vld [vmem:[%s630 + $0x68] sm:$0xf]
        %v2547 = vld [vmem:[%s630 + $0x6c] sm:$0xf]
        %v2548 = vld [vmem:[%s630 + $0x70] sm:$0xf]
        %v2549 = vld [vmem:[%s630 + $0x74] sm:$0xf]
        %v2550 = vld [vmem:[%s630 + $0x78] sm:$0xf]
        %v2551 = vld [vmem:[%s630 + $0x7c] sm:$0xf]
        %v2552 = vld [vmem:[%s630 + $0x80] sm:$0xf]
        %v2553 = vld [vmem:[%s630 + $0x84] sm:$0xf]
        %v2554 = vld [vmem:[%s630 + $0x88] sm:$0xf]
        %v2555 = vld [vmem:[%s630 + $0x8c] sm:$0xf]
        %v2556 = vld [vmem:[%s630 + $0x90] sm:$0xf]
        %v2557 = vld [vmem:[%s630 + $0x94] sm:$0xf]
        %v2558 = vld [vmem:[%s630 + $0x98] sm:$0xf]
        %v2559 = vld [vmem:[%s630 + $0x9c] sm:$0xf]
        %v2560 = vld [vmem:[%s630 + $0xa0] sm:$0xf]
        %v2561 = vld [vmem:[%s630 + $0xa4] sm:$0xf]
        %v2562 = vld [vmem:[%s630 + $0xa8] sm:$0xf]
        %v2563 = vld [vmem:[%s630 + $0xac] sm:$0xf]
        %v2564 = vld [vmem:[%s630 + $0xb0] sm:$0xf]
        %v2565 = vld [vmem:[%s630 + $0xb4] sm:$0xf]
        %v2566 = vld [vmem:[%s630 + $0xb8] sm:$0xf]
        %v2567 = vld [vmem:[%s630 + $0xbc] sm:$0xf]
        %v2568 = vld [vmem:[%s630 + $0xc0] sm:$0xf]
        %v2569 = vld [vmem:[%s630 + $0xc4] sm:$0xf]
        %v2570 = vld [vmem:[%s630 + $0xc8] sm:$0xf]
        %v2571 = vld [vmem:[%s630 + $0xcc] sm:$0xf]
        %v2572 = vld [vmem:[%s630 + $0xd0] sm:$0xf]
        %v2573 = vld [vmem:[%s630 + $0xd4] sm:$0xf]
        %v2574 = vld [vmem:[%s630 + $0xd8] sm:$0xf]
        %v2575 = vld [vmem:[%s630 + $0xdc] sm:$0xf]
        %v2576 = vld [vmem:[%s630 + $0xe0] sm:$0xf]
        %v2577 = vld [vmem:[%s630 + $0xe4] sm:$0xf]
        %v2578 = vld [vmem:[%s630 + $0xe8] sm:$0xf]
        %v2579 = vld [vmem:[%s630 + $0xec] sm:$0xf]
        %v2580 = vld [vmem:[%s630 + $0xf0] sm:$0xf]
        %v2581 = vld [vmem:[%s630 + $0xf4] sm:$0xf]
        %v2582 = vld [vmem:[%s630 + $0xf8] sm:$0xf]
        %v2583 = vld [vmem:[%s630 + $0xfc] sm:$0xf]
        %v2584 = vld [vmem:[%s729] sm:$0x1]
        %v2586 = vlaneseq
        %v2587 = vshrl.u32 %v2586, 7
        %v2588 = vsub.s32 0, %v2587
        %v2589 = vrot.slane %v2584, %v2588
        %v2655 = vunpack.c.l.b16 %v2520
        %v2656 = vunpack.c.l.b16 %v2521
        %v2657 = vunpack.c.l.b16 %v2522
        %v2658 = vunpack.c.l.b16 %v2523
        %v2659 = vunpack.c.l.b16 %v2524
        %v2660 = vunpack.c.l.b16 %v2525
        %v2661 = vunpack.c.l.b16 %v2526
        %v2662 = vunpack.c.l.b16 %v2527
        %v2663 = vunpack.c.l.b16 %v2528
        %v2664 = vunpack.c.l.b16 %v2529
        %v2665 = vunpack.c.l.b16 %v2530
        %v2666 = vunpack.c.l.b16 %v2531
        %v2667 = vunpack.c.l.b16 %v2532
        %v2668 = vunpack.c.l.b16 %v2533
        %v2669 = vunpack.c.l.b16 %v2534
        %v2670 = vunpack.c.l.b16 %v2535
        %v2671 = vunpack.c.l.b16 %v2536
        %v2672 = vunpack.c.l.b16 %v2537
        %v2673 = vunpack.c.l.b16 %v2538
        %v2674 = vunpack.c.l.b16 %v2539
        %v2675 = vunpack.c.l.b16 %v2540
        %v2676 = vunpack.c.l.b16 %v2541
        %v2677 = vunpack.c.l.b16 %v2542
        %v2678 = vunpack.c.l.b16 %v2543
        %v2679 = vunpack.c.l.b16 %v2544
        %v2680 = vunpack.c.l.b16 %v2545
        %v2681 = vunpack.c.l.b16 %v2546
        %v2682 = vunpack.c.l.b16 %v2547
        %v2683 = vunpack.c.l.b16 %v2548
        %v2684 = vunpack.c.l.b16 %v2549
        %v2685 = vunpack.c.l.b16 %v2550
        %v2686 = vunpack.c.l.b16 %v2551
        %v2687 = vunpack.c.l.b16 %v2552
        %v2688 = vunpack.c.l.b16 %v2553
        %v2689 = vunpack.c.l.b16 %v2554
        %v2690 = vunpack.c.l.b16 %v2555
        %v2691 = vunpack.c.l.b16 %v2556
        %v2692 = vunpack.c.l.b16 %v2557
        %v2693 = vunpack.c.l.b16 %v2558
        %v2694 = vunpack.c.l.b16 %v2559
        %v2695 = vunpack.c.l.b16 %v2560
        %v2696 = vunpack.c.l.b16 %v2561
        %v2697 = vunpack.c.l.b16 %v2562
        %v2698 = vunpack.c.l.b16 %v2563
        %v2699 = vunpack.c.l.b16 %v2564
        %v2700 = vunpack.c.l.b16 %v2565
        %v2701 = vunpack.c.l.b16 %v2566
        %v2702 = vunpack.c.l.b16 %v2567
        %v2703 = vunpack.c.l.b16 %v2568
        %v2704 = vunpack.c.l.b16 %v2569
        %v2705 = vunpack.c.l.b16 %v2570
        %v2706 = vunpack.c.l.b16 %v2571
        %v2707 = vunpack.c.l.b16 %v2572
        %v2708 = vunpack.c.l.b16 %v2573
        %v2709 = vunpack.c.l.b16 %v2574
        %v2710 = vunpack.c.l.b16 %v2575
        %v2711 = vunpack.c.l.b16 %v2576
        %v2712 = vunpack.c.l.b16 %v2577
        %v2713 = vunpack.c.l.b16 %v2578
        %v2714 = vunpack.c.l.b16 %v2579
        %v2715 = vunpack.c.l.b16 %v2580
        %v2716 = vunpack.c.l.b16 %v2581
        %v2717 = vunpack.c.l.b16 %v2582
        %v2718 = vunpack.c.l.b16 %v2583
        %v2719 = vpack.c.b16 %v2656, %v2655
        %v2720 = vpack.c.b16 %v2658, %v2657
        %v2721 = vpack.c.b16 %v2660, %v2659
        %v2722 = vpack.c.b16 %v2662, %v2661
        %v2723 = vpack.c.b16 %v2664, %v2663
        %v2724 = vpack.c.b16 %v2666, %v2665
        %v2725 = vpack.c.b16 %v2668, %v2667
        %v2726 = vpack.c.b16 %v2670, %v2669
        %v2727 = vpack.c.b16 %v2672, %v2671
        %v2728 = vpack.c.b16 %v2674, %v2673
        %v2729 = vpack.c.b16 %v2676, %v2675
        %v2730 = vpack.c.b16 %v2678, %v2677
        %v2731 = vpack.c.b16 %v2680, %v2679
        %v2732 = vpack.c.b16 %v2682, %v2681
        %v2733 = vpack.c.b16 %v2684, %v2683
        %v2734 = vpack.c.b16 %v2686, %v2685
        %v2735 = vpack.c.b16 %v2688, %v2687
        %v2736 = vpack.c.b16 %v2690, %v2689
        %v2737 = vpack.c.b16 %v2692, %v2691
        %v2738 = vpack.c.b16 %v2694, %v2693
        %v2739 = vpack.c.b16 %v2696, %v2695
        %v2740 = vpack.c.b16 %v2698, %v2697
        %v2741 = vpack.c.b16 %v2700, %v2699
        %v2742 = vpack.c.b16 %v2702, %v2701
        %v2743 = vpack.c.b16 %v2704, %v2703
        %v2744 = vpack.c.b16 %v2706, %v2705
        %v2745 = vpack.c.b16 %v2708, %v2707
        %v2746 = vpack.c.b16 %v2710, %v2709
        %v2747 = vpack.c.b16 %v2712, %v2711
        %v2748 = vpack.c.b16 %v2714, %v2713
        %v2749 = vpack.c.b16 %v2716, %v2715
        %v2750 = vpack.c.b16 %v2718, %v2717
        %2783 = vmatprep.subr.bf16.mxu0 0
        %2784 = vmatpush1.bf16.msra.mxu0 %v2719
        %2785 = vmatprep.subr.bf16.mxu0 0
        %2786 = vmatpush1.bf16.msra.mxu0 %v2720
        %2787 = vmatprep.subr.bf16.mxu0 0
        %2788 = vmatpush1.bf16.msra.mxu0 %v2721
        %2789 = vmatprep.subr.bf16.mxu0 0
        %2790 = vmatpush1.bf16.msra.mxu0 %v2722
        %2791 = vmatprep.subr.bf16.mxu0 0
        %2792 = vmatpush1.bf16.msra.mxu0 %v2723
        %2793 = vmatprep.subr.bf16.mxu0 0
        %2794 = vmatpush1.bf16.msra.mxu0 %v2724
        %2795 = vmatprep.subr.bf16.mxu0 0
        %2796 = vmatpush1.bf16.msra.mxu0 %v2725
        %2797 = vmatprep.subr.bf16.mxu0 0
        %2798 = vmatpush1.bf16.msra.mxu0 %v2726
        %2799 = vmatprep.subr.bf16.mxu0 0
        %2800 = vmatpush1.bf16.msra.mxu0 %v2727
        %2801 = vmatprep.subr.bf16.mxu0 0
        %2802 = vmatpush1.bf16.msra.mxu0 %v2728
        %2803 = vmatprep.subr.bf16.mxu0 0
        %2804 = vmatpush1.bf16.msra.mxu0 %v2729
        %2805 = vmatprep.subr.bf16.mxu0 0
        %2806 = vmatpush1.bf16.msra.mxu0 %v2730
        %2807 = vmatprep.subr.bf16.mxu0 0
        %2808 = vmatpush1.bf16.msra.mxu0 %v2731
        %2809 = vmatprep.subr.bf16.mxu0 0
        %2810 = vmatpush1.bf16.msra.mxu0 %v2732
        %2811 = vmatprep.subr.bf16.mxu0 0
        %2812 = vmatpush1.bf16.msra.mxu0 %v2733
        %2813 = vmatprep.subr.bf16.mxu0 0
        %2814 = vmatpush1.bf16.msra.mxu0 %v2734
        %2815 = vmatprep.mubr.bf16.mxu0 %v2517
        %2816 = vmatmul.mubr.bf16.gmra.mrb[0].mxu0 %v2516
        %v2817 = vpop.f32.mrb[0].mxu0
        %v2818 = vadd.f32 %v2589, %v2817
        %v2819 = vpop.f32.mrb[0].mxu0
        %v2820 = vpop.f32.mrb[0].mxu0
        %v2821 = vadd.f32 %v2589, %v2820
        %v2822 = vpop.f32.mrb[0].mxu0
        %2823 = vdwg.mxu0
        %2824 = vmatprep.subr.bf16.mxu0 0
        %2825 = vmatpush1.bf16.msra.mxu0 %v2735
        %2826 = vmatprep.subr.bf16.mxu0 0
        %2827 = vmatpush1.bf16.msra.mxu0 %v2736
        %2828 = vmatprep.subr.bf16.mxu0 0
        %2829 = vmatpush1.bf16.msra.mxu0 %v2737
        %2830 = vmatprep.subr.bf16.mxu0 0
        %2831 = vmatpush1.bf16.msra.mxu0 %v2738
        %2832 = vmatprep.subr.bf16.mxu0 0
        %2833 = vmatpush1.bf16.msra.mxu0 %v2739
        %2834 = vmatprep.subr.bf16.mxu0 0
        %2835 = vmatpush1.bf16.msra.mxu0 %v2740
        %2836 = vmatprep.subr.bf16.mxu0 0
        %2837 = vmatpush1.bf16.msra.mxu0 %v2741
        %2838 = vmatprep.subr.bf16.mxu0 0
        %2839 = vmatpush1.bf16.msra.mxu0 %v2742
        %2840 = vmatprep.subr.bf16.mxu0 0
        %2841 = vmatpush1.bf16.msra.mxu0 %v2743
        %2842 = vmatprep.subr.bf16.mxu0 0
        %2843 = vmatpush1.bf16.msra.mxu0 %v2744
        %2844 = vmatprep.subr.bf16.mxu0 0
        %2845 = vmatpush1.bf16.msra.mxu0 %v2745
        %2846 = vmatprep.subr.bf16.mxu0 0
        %2847 = vmatpush1.bf16.msra.mxu0 %v2746
        %2848 = vmatprep.subr.bf16.mxu0 0
        %2849 = vmatpush1.bf16.msra.mxu0 %v2747
        %2850 = vmatprep.subr.bf16.mxu0 0
        %2851 = vmatpush1.bf16.msra.mxu0 %v2748
        %2852 = vmatprep.subr.bf16.mxu0 0
        %2853 = vmatpush1.bf16.msra.mxu0 %v2749
        %2854 = vmatprep.subr.bf16.mxu0 0
        %2855 = vmatpush1.bf16.msra.mxu0 %v2750
        %2856 = vmatprep.mubr.bf16.mxu0 %v2519
        %2857 = vmatmul.mubr.bf16.gmra.mrb[0].mxu0 %v2518
        %v2858 = vpop.f32.mrb[0].mxu0
        %v2859 = vadd.f32 %v2818, %v2858
        %v2860 = vpop.f32.mrb[0].mxu0
        %v2861 = vpop.f32.mrb[0].mxu0
        %v2862 = vadd.f32 %v2821, %v2861
        %v2863 = vpop.f32.mrb[0].mxu0
        %2864 = vdwg.mxu0
        %v2865 = vadd.f32 %v2087, %v2859
        %v2866 = vadd.f32 %v2088, %v2862
        %2867 = vst [vmem:[#allocation2] sm:$0xff] %v2865
        %2868 = vst [vmem:[#allocation2 + $0x8] sm:$0xff] %v2866
        %p2869 = scmp.eq.s32.totalorder %s38, 1
        // Predicated region
        $region101: #{tpu_custom_call.1} parent=75 // pred_check
          %p2870 = pneg %p2869
        $region102: #{tpu_custom_call.1} parent=75 // pred_check_branch
          %2872 = sbr.rel (%p2870) target = $region104
        $region103: #{tpu_custom_call.1} parent=75 // pred_region
          %v2873 = vld [vmem:[%s12] sm:$0x1]
          %v2874 = vld [vmem:[%s13] sm:$0x1]
          %2875 = vadd.xlane.f32.xlu0 %v2865
          %v2876 = vpop.xlane.xlu0 %2875
          %2877 = vadd.xlane.f32.xlu0 %v2866
          %v2878 = vpop.xlane.xlu0 %2877
          %v2879 = vmul.f32 %v2876, %v748
          %v2880 = vmul.f32 %v2878, %v748
          %v2881 = vsub.f32 %v2865, %v2879
          %v2882 = vsub.f32 %v2866, %v2880
          %v2883 = vmul.f32 %v2881, %v2881
          %v2884 = vmul.f32 %v2882, %v2882
          %2885 = vadd.xlane.f32.xlu0 %v2883
          %v2886 = vpop.xlane.xlu0 %2885
          %2887 = vadd.xlane.f32.xlu0 %v2884
          %v2888 = vpop.xlane.xlu0 %2887
          %v2889 = vmul.f32 %v2886, %v748
          %v2890 = vmul.f32 %v2888, %v748
          %v2891 = vadd.f32 %v2889, 1e-05
          %v2892 = vadd.f32 %v2890, 1e-05
          %v2893 = vrsqrt.pop %v2891
          %v2894 = vmul.f32 %v2891, %v2893
          %vm2895 = vcmp.eq.f32.partialorder %v2891, inf
          %v2896 = vsel %vm2895, %v2891, %v2894
          %vm2897 = vcmp.eq.f32.partialorder %v2891, 0.0
          %v2898 = vand.u32 %v2891, 2147483648
          %v2899 = vsel %vm2897, %v2898, %v2896
          %v2900 = vrsqrt.pop %v2892
          %v2901 = vmul.f32 %v2892, %v2900
          %vm2902 = vcmp.eq.f32.partialorder %v2892, inf
          %v2903 = vsel %vm2902, %v2892, %v2901
          %vm2904 = vcmp.eq.f32.partialorder %v2892, 0.0
          %v2905 = vand.u32 %v2892, 2147483648
          %v2906 = vsel %vm2904, %v2905, %v2903
          %v2907 = vrcp.pop %v2899
          %v2908 = vmul.f32 %v2881, %v2907
          %v2909 = vrcp.pop %v2906
          %v2910 = vmul.f32 %v2882, %v2909
          %v2912 = vlaneseq
          %v2913 = vshrl.u32 %v2912, 7
          %v2914 = vsub.s32 0, %v2913
          %v2915 = vrot.slane %v2873, %v2914
          %v2917 = vmul.f32 %v2908, %v2915
          %v2918 = vmul.f32 %v2910, %v2915
          %v2920 = vlaneseq
          %v2921 = vshrl.u32 %v2920, 7
          %v2922 = vsub.s32 0, %v2921
          %v2923 = vrot.slane %v2874, %v2922
          %v2925 = vadd.f32 %v2917, %v2923
          %v2926 = vadd.f32 %v2918, %v2923
          %v2927 = vpack.c.bf16 %v2926, %v2925
          %v2929 = vunpack.c.l.b16 %v2927
          %v2930 = vunpack.c.h.b16 %v2927
          %v2931 = vpack.c.b16 %v2929, %v2929
          %v2932 = vpack.c.b16 %v2930, %v2930
          %2935 = vst [vmem:[#allocation12] sm:$0xf] %v2931
          %2936 = vst [vmem:[#allocation12 + $0x4] sm:$0xf] %v2932
        $region104: #{tpu_custom_call.1} parent=75 // pred_fallthru
          _
        // Predicated region
        $region105: #{tpu_custom_call.1} parent=75 // pred_check
          %p2937 = pneg %p417
        $region106: #{tpu_custom_call.1} parent=75 // pred_check_branch
          %2939 = sbr.rel (%p2937) target = $region108
        $region107: #{tpu_custom_call.1} parent=75 // pred_region
          %s2940 = smul.u32 2, %s37
          %s2942 = ssub.s32 128, 128
          %2943 = vsyncadd [#allocation5], %s2942
          %s2944 = smul.addr %s2940, 64
          %s2945 = scalar_lea.hbm %s14, %s2944
          %s2946 = sshll.u32 [#allocation12], 4
          %s2947 = int_to_ptr.vmem [resolvable:$true] %s2946
          %2952 = dma.vmem_to_hbm [thread:$0]  %s2947, 128, %s2945, [#allocation5], 64, 64, 4
        $region108: #{tpu_custom_call.1} parent=75 // pred_fallthru
          _
        // Predicated region
        $region109: #{tpu_custom_call.1} parent=75 // pred_check
          %p2953 = pneg %p417
        $region110: #{tpu_custom_call.1} parent=75 // pred_check_branch
          %2955 = sbr.rel (%p2953) target = $region112
        $region111: #{tpu_custom_call.1} parent=75 // pred_region
          %2956 = dma.done [#allocation5], 128
        $region112: #{tpu_custom_call.1} parent=75 // pred_fallthru
          _
      $region76: #{tpu_custom_call.1} parent=5 // pred_fallthru
        _
      %p2957 = scmp.le.s32.totalorder 2, %s28
      // Predicated region
      $region113: #{tpu_custom_call.1} parent=5 // pred_check
        %p2958 = pneg %p2957
      $region114: #{tpu_custom_call.1} parent=5 // pred_check_branch
        %2960 = sbr.rel (%p2958) target = $region116
      $region115: #{tpu_custom_call.1} parent=5 // pred_region
        %s2961 = ssub.s32 %s28, 2
      $region116: #{tpu_custom_call.1} parent=5 // pred_fallthru
        _
    $region6: #{tpu_custom_call.1} parent=1 // loop_footer
      %s32 = sadd.s32 1, %s28
    $region7: #{tpu_custom_call.1} parent=1 // loop_footer_branch
      %27 = sbr.rel target = $region3
    $region8: #{tpu_custom_call.1} parent=1 // loop_exit
      _
    %2962 = vsyncpa [#allocation4], 1
    %s2963 = scalar_lea.sflag [#allocation4], 1
    %2964 = vsyncpa %s2963, 1
    %2965 = vsyncpa [#allocation7], 1
    %s2966 = scalar_lea.sflag [#allocation7], 1
    %2967 = vsyncpa %s2966, 1
    %2968 = vsyncpa [#allocation10], 1
    %s2969 = scalar_lea.sflag [#allocation10], 1
    %2970 = vsyncpa %s2969, 1
    %2971 = vsyncpa [#allocation5], 1
    %s2972 = scalar_lea.sflag [#allocation5], 1
    %2973 = vsyncpa %s2972, 1

</llo_original>
